<compile_context>
chip_gen: v7x
topology: tpu7x:2x2x1
jax: 0.10.0
libtpu: 0.0.40
codegen_flags: <defaults>
</compile_context>

<pallas_src>
import jax
import jax.numpy as jnp
import numpy as np
from jax import lax
from jax.experimental import pallas as pl
from jax.experimental.pallas import tpu as pltpu


# ----------------------------------------------------------------------------
# Fused kernel
# ----------------------------------------------------------------------------

def bottleneck_fused_kernel(x_ref, w1_ref, b1_ref, w2_ref, b2_ref, w3_ref, b3_ref,
                            o_ref, h1_ref, patch_ref):
    """Whole Bottleneck block for one image (grid iterates over batch).

    x_ref : (1, H, W, Cp)    f32  input, channels zero-padded to Cp (lane-dense)
    w1_ref: (Cp, Pp)         bf16 conv1 weight with BN1 scale folded in
    b1_ref: (1, Pp)          f32  BN1 bias
    w2_ref: (9*Pp, Pp)       bf16 conv2 weight, im2col tap-major, BN2 scale folded
    b2_ref: (1, Pp)          f32  BN2 bias
    w3_ref: (Pp, Cop)        bf16 conv3 weight with BN3 scale folded in
    b3_ref: (1, Cop)         f32  BN3 bias
    o_ref : (1, H, W, Cop)   f32  output (padded channels are exactly zero)
    h1_ref   : VMEM (H+2, W+2, Pp) f32   zero-halo'd conv1 activation
    patch_ref: VMEM (H*W, 9*Pp)    bf16  im2col patch matrix
    """
    _, H, W, Cp = x_ref.shape
    Pp = w1_ref.shape[1]
    Cop = w3_ref.shape[1]
    HW = H * W

    # Input tile, reused both as conv1 input (bf16 cast for MXU) and residual (f32).
    x2d = x_ref[...].reshape(HW, Cp)

    # --- conv1 (1x1) + bn1 (scale folded into w1) + relu ---------------------
    acc1 = jnp.dot(x2d.astype(jnp.bfloat16), w1_ref[...],
                   preferred_element_type=jnp.float32)
    y1 = jnp.maximum(acc1 + b1_ref[...], 0.0)                    # (HW, Pp) f32

    # --- place y1 into the zero-halo'd scratch (spatial pad=1 done in VMEM) --
    h1_ref[...] = jnp.zeros_like(h1_ref)
    h1_ref[1:H + 1, 1:W + 1, :] = y1.reshape(H, W, Pp)

    # --- im2col: patch column block t = kh*3 + kw holds shifted tap (kh, kw) -
    for kh in range(3):
        for kw in range(3):
            t = kh * 3 + kw
            tap = h1_ref[kh:kh + H, kw:kw + W, :].reshape(HW, Pp)
            patch_ref[:, t * Pp:(t + 1) * Pp] = tap.astype(jnp.bfloat16)

    # --- conv2 (3x3, stride 1, pad 1) as ONE K = 9*Pp matmul + bn2 + relu ----
    acc2 = jnp.dot(patch_ref[...], w2_ref[...],
                   preferred_element_type=jnp.float32)
    y2 = jnp.maximum(acc2 + b2_ref[...], 0.0)                    # (HW, Pp) f32

    # --- conv3 (1x1) + bn3 + residual add + relu ------------------------------
    acc3 = jnp.dot(y2.astype(jnp.bfloat16), w3_ref[...],
                   preferred_element_type=jnp.float32)
    out = jnp.maximum(acc3 + b3_ref[...] + x2d, 0.0)             # (HW, Cop) f32
    o_ref[...] = out.reshape(1, H, W, Cop)


# ----------------------------------------------------------------------------
# Wrapper
# ----------------------------------------------------------------------------

_LANES = 128


def _round_up(x, m):
    return (x + m - 1) // m * m


def _fold_bn(gamma, beta, mean, var, eps=1e-5):
    scale = gamma / jnp.sqrt(var + eps)
    bias = beta - mean * scale
    return scale.astype(jnp.float32), bias.astype(jnp.float32)


def bottleneck_forward(x_nchw, params):
    """Pallas implementation of Bottleneck.forward (stride=1, downsample=None)."""
    w1 = params["conv1_w"]          # (planes, inplanes, 1, 1)  torch OIHW
    w2 = params["conv2_w"]          # (planes, planes, 3, 3)
    w3 = params["conv3_w"]          # (planes*4, planes, 1, 1)
    planes, inplanes = int(w1.shape[0]), int(w1.shape[1])
    out_ch = int(w3.shape[0])
    assert out_ch == 4 * planes
    assert inplanes == out_ch, "identity residual requires inplanes == planes*4"
    # TODO(synk): stride != 1 and the external downsample (conv+BN shortcut) are
    #             not implemented; the reference forward uses stride=1, downsample=None.

    N, Cin, H, W = x_nchw.shape
    assert Cin == inplanes

    Cp = _round_up(inplanes, _LANES)     # padded input / residual channels
    Pp = _round_up(planes, _LANES)       # padded bottleneck channels
    Cop = _round_up(out_ch, _LANES)      # padded output channels
    assert Cp == Cop

    # ---- fold BN scale into the weights, zero-pad to lane-dense widths ------
    s1, b1 = _fold_bn(*params["bn1"])
    s2, b2 = _fold_bn(*params["bn2"])
    s3, b3 = _fold_bn(*params["bn3"])

    w1_mat = jnp.transpose(w1[:, :, 0, 0], (1, 0)) * s1[None, :]          # (Ci, Co)
    w1_p = jnp.zeros((Cp, Pp), jnp.float32).at[:inplanes, :planes].set(w1_mat)
    b1_p = jnp.zeros((1, Pp), jnp.float32).at[0, :planes].set(b1)

    w2_hwio = jnp.transpose(w2, (2, 3, 1, 0)) * s2[None, None, None, :]   # (3,3,Ci,Co)
    w2_p = (jnp.zeros((3, 3, Pp, Pp), jnp.float32)
            .at[:, :, :planes, :planes].set(w2_hwio)
            .reshape(9 * Pp, Pp))                                          # tap-major K
    b2_p = jnp.zeros((1, Pp), jnp.float32).at[0, :planes].set(b2)

    w3_mat = jnp.transpose(w3[:, :, 0, 0], (1, 0)) * s3[None, :]          # (Ci, Co)
    w3_p = jnp.zeros((Pp, Cop), jnp.float32).at[:planes, :out_ch].set(w3_mat)
    b3_p = jnp.zeros((1, Cop), jnp.float32).at[0, :out_ch].set(b3)

    # bf16 MXU inputs; accumulation and BN/ReLU epilogue remain f32 in-kernel.
    w1_p = w1_p.astype(jnp.bfloat16)
    w2_p = w2_p.astype(jnp.bfloat16)
    w3_p = w3_p.astype(jnp.bfloat16)

    # ---- NCHW -> NHWC, zero-pad input channels to the padded lane width -----
    # TODO(synk): if the surrounding network is NHWC (and channels already a
    #             multiple of 128, as in real ResNet stages), both the channel
    #             pad and the transposes below disappear.
    x = jnp.transpose(x_nchw, (0, 2, 3, 1)).astype(jnp.float32)
    if Cin < Cp:
        x = jnp.pad(x, ((0, 0), (0, 0), (0, 0), (0, Cp - Cin)))

    out = pl.pallas_call(
        bottleneck_fused_kernel,
        out_shape=jax.ShapeDtypeStruct((N, H, W, Cop), jnp.float32),
        grid=(N,),
        in_specs=[
            pl.BlockSpec((1, H, W, Cp), lambda n: (n, 0, 0, 0)),
            pl.BlockSpec((Cp, Pp), lambda n: (0, 0)),
            pl.BlockSpec((1, Pp), lambda n: (0, 0)),
            pl.BlockSpec((9 * Pp, Pp), lambda n: (0, 0)),
            pl.BlockSpec((1, Pp), lambda n: (0, 0)),
            pl.BlockSpec((Pp, Cop), lambda n: (0, 0)),
            pl.BlockSpec((1, Cop), lambda n: (0, 0)),
        ],
        out_specs=pl.BlockSpec((1, H, W, Cop), lambda n: (n, 0, 0, 0)),
        scratch_shapes=[
            pltpu.VMEM((H + 2, W + 2, Pp), jnp.float32),    # zero-halo'd conv1 output
            pltpu.VMEM((H * W, 9 * Pp), jnp.bfloat16),      # im2col patch matrix
        ],
        compiler_params=pltpu.CompilerParams(
            dimension_semantics=("parallel",),
            vmem_limit_bytes=32 * 1024 * 1024,  # footprint ~2 MiB; safe on v5e/v6e/v7x
        ),
    )(x, w1_p, b1_p, w2_p, b2_p, w3_p, b3_p)

    # Drop the channel padding (padded lanes are exactly zero), NHWC -> NCHW.
    return jnp.transpose(out[..., :out_ch], (0, 3, 1, 2))


# ----------------------------------------------------------------------------
# Pure-JAX reference (verification only)
# ----------------------------------------------------------------------------

def _bn_ref(x_nchw, gamma, beta, mean, var, eps=1e-5):
    g = gamma[None, :, None, None]
    b = beta[None, :, None, None]
    m = mean[None, :, None, None]
    v = var[None, :, None, None]
    return (x_nchw - m) / jnp.sqrt(v + eps) * g + b


def bottleneck_ref(x, params):
    dn = ("NCHW", "OIHW", "NCHW")
    out = lax.conv_general_dilated(x, params["conv1_w"], (1, 1), "VALID",
                                   dimension_numbers=dn)
    out = jnp.maximum(_bn_ref(out, *params["bn1"]), 0.0)
    out = lax.conv_general_dilated(out, params["conv2_w"], (1, 1), ((1, 1), (1, 1)),
                                   dimension_numbers=dn)
    out = jnp.maximum(_bn_ref(out, *params["bn2"]), 0.0)
    out = lax.conv_general_dilated(out, params["conv3_w"], (1, 1), "VALID",
                                   dimension_numbers=dn)
    out = _bn_ref(out, *params["bn3"])
    out = out + x
    return jnp.maximum(out, 0.0)


# ----------------------------------------------------------------------------
# Main
# ----------------------------------------------------------------------------

if __name__ == "__main__":
    inplanes, planes = 16, 4          # expansion=4 -> planes*4 == inplanes
    N, H, W = 2, 16, 16

    key = jax.random.PRNGKey(0)
    ks = jax.random.split(key, 16)

    def bn_params(k, c):
        k1, k2, k3, k4 = jax.random.split(k, 4)
        gamma = 1.0 + 0.1 * jax.random.normal(k1, (c,), jnp.float32)
        beta = 0.1 * jax.random.normal(k2, (c,), jnp.float32)
        mean = 0.1 * jax.random.normal(k3, (c,), jnp.float32)
        var = 1.0 + 0.1 * jnp.abs(jax.random.normal(k4, (c,), jnp.float32))
        return (gamma, beta, mean, var)

    params = {
        "conv1_w": 0.2 * jax.random.normal(ks[0], (planes, inplanes, 1, 1), jnp.float32),
        "bn1": bn_params(ks[1], planes),
        "conv2_w": 0.2 * jax.random.normal(ks[2], (planes, planes, 3, 3), jnp.float32),
        "bn2": bn_params(ks[3], planes),
        "conv3_w": 0.2 * jax.random.normal(ks[4], (planes * 4, planes, 1, 1), jnp.float32),
        "bn3": bn_params(ks[5], planes * 4),
    }

    x = jax.random.normal(ks[6], (N, inplanes, H, W), jnp.float32)

    out = jax.block_until_ready(bottleneck_forward(x, params))
    ref = jax.block_until_ready(bottleneck_ref(x, params))

    assert out.shape == ref.shape == (N, inplanes, H, W)
    # bf16 MXU inputs (f32 accumulate / epilogue) -> slightly looser tolerance.
    np.testing.assert_allclose(np.asarray(out), np.asarray(ref), rtol=2e-2, atol=2e-2)

    print("KERNEL_OK")
</pallas_src>

<mosaic_0001>
module attributes {stable_mosaic.version = 11 : i64} {
  func.func @bottleneck_fused_kernel(%arg0: i32, %arg1: memref<1x16x16x128xf32, #tpu.memory_space<vmem>>, %arg2: memref<128x128xbf16, #tpu.memory_space<vmem>>, %arg3: memref<1x128xf32, #tpu.memory_space<vmem>>, %arg4: memref<1152x128xbf16, #tpu.memory_space<vmem>>, %arg5: memref<1x128xf32, #tpu.memory_space<vmem>>, %arg6: memref<128x128xbf16, #tpu.memory_space<vmem>>, %arg7: memref<1x128xf32, #tpu.memory_space<vmem>>, %arg8: memref<1x16x16x128xf32, #tpu.memory_space<vmem>>, %arg9: memref<18x18x128xf32, #tpu.memory_space<vmem>>, %arg10: memref<256x1152xbf16, #tpu.memory_space<vmem>>) attributes {dimension_semantics = [#tpu.dimension_semantics<parallel>], iteration_bounds = array<i64: 2>, scalar_prefetch = 0 : i64, scratch_operands = 2 : i64, tpu.core_type = #tpu.core_type<tc>, window_params = [{transform_indices = @transform_0, window_bounds = array<i64: 1, 16, 16, 128>}, {pipeline_mode = #tpu.pipeline_mode<synchronous>, transform_indices = @transform_1, window_bounds = array<i64: 128, 128>}, {pipeline_mode = #tpu.pipeline_mode<synchronous>, transform_indices = @transform_2, window_bounds = array<i64: 1, 128>}, {pipeline_mode = #tpu.pipeline_mode<synchronous>, transform_indices = @transform_3, window_bounds = array<i64: 1152, 128>}, {pipeline_mode = #tpu.pipeline_mode<synchronous>, transform_indices = @transform_4, window_bounds = array<i64: 1, 128>}, {pipeline_mode = #tpu.pipeline_mode<synchronous>, transform_indices = @transform_5, window_bounds = array<i64: 128, 128>}, {pipeline_mode = #tpu.pipeline_mode<synchronous>, transform_indices = @transform_6, window_bounds = array<i64: 1, 128>}, {transform_indices = @transform_7, window_bounds = array<i64: 1, 16, 16, 128>}]} {
    %c0 = arith.constant 0 : index
    %c0_0 = arith.constant 0 : index
    %c0_1 = arith.constant 0 : index
    %c0_2 = arith.constant 0 : index
    %0 = vector.load %arg1[%c0, %c0_0, %c0_1, %c0_2] : memref<1x16x16x128xf32, #tpu.memory_space<vmem>>, vector<1x16x16x128xf32>
    %1 = vector.shape_cast %0 : vector<1x16x16x128xf32> to vector<256x128xf32>
    %2 = arith.truncf %1 : vector<256x128xf32> to vector<256x128xbf16>
    %c0_3 = arith.constant 0 : index
    %c0_4 = arith.constant 0 : index
    %3 = vector.load %arg2[%c0_3, %c0_4] : memref<128x128xbf16, #tpu.memory_space<vmem>>, vector<128x128xbf16>
    %cst = arith.constant dense<0.000000e+00> : vector<256x128xf32>
    %4 = tpu.matmul %2, %3, %cst {dimension_numbers = #tpu.dot_dimension_numbers<[1], [0], [0], [1], [0, 0, 1, 1], [], []>} : vector<256x128xbf16>, vector<128x128xbf16>, vector<256x128xf32> -> vector<256x128xf32>
    %c0_5 = arith.constant 0 : index
    %c0_6 = arith.constant 0 : index
    %5 = vector.load %arg3[%c0_5, %c0_6] : memref<1x128xf32, #tpu.memory_space<vmem>>, vector<1x128xf32>
    %6 = vector.broadcast %5 : vector<1x128xf32> to vector<256x128xf32>
    %7 = arith.addf %4, %6 : vector<256x128xf32>
    %cst_7 = arith.constant 0.000000e+00 : f32
    %8 = vector.broadcast %cst_7 : f32 to vector<256x128xf32>
    %9 = arith.maximumf %7, %8 : vector<256x128xf32>
    %cst_8 = arith.constant 0.000000e+00 : f32
    %10 = vector.broadcast %cst_8 : f32 to vector<18x18x128xf32>
    %c0_9 = arith.constant 0 : index
    %c0_10 = arith.constant 0 : index
    %c0_11 = arith.constant 0 : index
    %11 = vector.load %arg9[%c0_9, %c0_10, %c0_11] : memref<18x18x128xf32, #tpu.memory_space<vmem>>, vector<18x18x128xf32>
    tpu.vector_store %arg9[%c0_9, %c0_10, %c0_11], %10 {strides = array<i32>} : memref<18x18x128xf32, #tpu.memory_space<vmem>>, vector<18x18x128xf32>,
    %12 = vector.shape_cast %9 : vector<256x128xf32> to vector<16x16x128xf32>
    %c1 = arith.constant 1 : index
    %c1_12 = arith.constant 1 : index
    %c0_13 = arith.constant 0 : index
    %13 = vector.load %arg9[%c1, %c1_12, %c0_13] : memref<18x18x128xf32, #tpu.memory_space<vmem>>, vector<16x16x128xf32>
    tpu.vector_store %arg9[%c1, %c1_12, %c0_13], %12 {strides = array<i32>} : memref<18x18x128xf32, #tpu.memory_space<vmem>>, vector<16x16x128xf32>,
    %c0_14 = arith.constant 0 : index
    %c0_15 = arith.constant 0 : index
    %c0_16 = arith.constant 0 : index
    %14 = vector.load %arg9[%c0_14, %c0_15, %c0_16] : memref<18x18x128xf32, #tpu.memory_space<vmem>>, vector<16x16x128xf32>
    %15 = vector.shape_cast %14 : vector<16x16x128xf32> to vector<256x128xf32>
    %16 = arith.truncf %15 : vector<256x128xf32> to vector<256x128xbf16>
    %c0_17 = arith.constant 0 : index
    %c0_18 = arith.constant 0 : index
    %17 = vector.load %arg10[%c0_17, %c0_18] : memref<256x1152xbf16, #tpu.memory_space<vmem>>, vector<256x128xbf16>
    tpu.vector_store %arg10[%c0_17, %c0_18], %16 {strides = array<i32>} : memref<256x1152xbf16, #tpu.memory_space<vmem>>, vector<256x128xbf16>,
    %c0_19 = arith.constant 0 : index
    %c1_20 = arith.constant 1 : index
    %c0_21 = arith.constant 0 : index
    %18 = vector.load %arg9[%c0_19, %c1_20, %c0_21] : memref<18x18x128xf32, #tpu.memory_space<vmem>>, vector<16x16x128xf32>
    %19 = vector.shape_cast %18 : vector<16x16x128xf32> to vector<256x128xf32>
    %20 = arith.truncf %19 : vector<256x128xf32> to vector<256x128xbf16>
    %c0_22 = arith.constant 0 : index
    %c128 = arith.constant 128 : index
    %21 = vector.load %arg10[%c0_22, %c128] : memref<256x1152xbf16, #tpu.memory_space<vmem>>, vector<256x128xbf16>
    tpu.vector_store %arg10[%c0_22, %c128], %20 {strides = array<i32>} : memref<256x1152xbf16, #tpu.memory_space<vmem>>, vector<256x128xbf16>,
    %c0_23 = arith.constant 0 : index
    %c2 = arith.constant 2 : index
    %c0_24 = arith.constant 0 : index
    %22 = vector.load %arg9[%c0_23, %c2, %c0_24] : memref<18x18x128xf32, #tpu.memory_space<vmem>>, vector<16x16x128xf32>
    %23 = vector.shape_cast %22 : vector<16x16x128xf32> to vector<256x128xf32>
    %24 = arith.truncf %23 : vector<256x128xf32> to vector<256x128xbf16>
    %c0_25 = arith.constant 0 : index
    %c256 = arith.constant 256 : index
    %25 = vector.load %arg10[%c0_25, %c256] : memref<256x1152xbf16, #tpu.memory_space<vmem>>, vector<256x128xbf16>
    tpu.vector_store %arg10[%c0_25, %c256], %24 {strides = array<i32>} : memref<256x1152xbf16, #tpu.memory_space<vmem>>, vector<256x128xbf16>,
    %c1_26 = arith.constant 1 : index
    %c0_27 = arith.constant 0 : index
    %c0_28 = arith.constant 0 : index
    %26 = vector.load %arg9[%c1_26, %c0_27, %c0_28] : memref<18x18x128xf32, #tpu.memory_space<vmem>>, vector<16x16x128xf32>
    %27 = vector.shape_cast %26 : vector<16x16x128xf32> to vector<256x128xf32>
    %28 = arith.truncf %27 : vector<256x128xf32> to vector<256x128xbf16>
    %c0_29 = arith.constant 0 : index
    %c384 = arith.constant 384 : index
    %29 = vector.load %arg10[%c0_29, %c384] : memref<256x1152xbf16, #tpu.memory_space<vmem>>, vector<256x128xbf16>
    tpu.vector_store %arg10[%c0_29, %c384], %28 {strides = array<i32>} : memref<256x1152xbf16, #tpu.memory_space<vmem>>, vector<256x128xbf16>,
    %c1_30 = arith.constant 1 : index
    %c1_31 = arith.constant 1 : index
    %c0_32 = arith.constant 0 : index
    %30 = vector.load %arg9[%c1_30, %c1_31, %c0_32] : memref<18x18x128xf32, #tpu.memory_space<vmem>>, vector<16x16x128xf32>
    %31 = vector.shape_cast %30 : vector<16x16x128xf32> to vector<256x128xf32>
    %32 = arith.truncf %31 : vector<256x128xf32> to vector<256x128xbf16>
    %c0_33 = arith.constant 0 : index
    %c512 = arith.constant 512 : index
    %33 = vector.load %arg10[%c0_33, %c512] : memref<256x1152xbf16, #tpu.memory_space<vmem>>, vector<256x128xbf16>
    tpu.vector_store %arg10[%c0_33, %c512], %32 {strides = array<i32>} : memref<256x1152xbf16, #tpu.memory_space<vmem>>, vector<256x128xbf16>,
    %c1_34 = arith.constant 1 : index
    %c2_35 = arith.constant 2 : index
    %c0_36 = arith.constant 0 : index
    %34 = vector.load %arg9[%c1_34, %c2_35, %c0_36] : memref<18x18x128xf32, #tpu.memory_space<vmem>>, vector<16x16x128xf32>
    %35 = vector.shape_cast %34 : vector<16x16x128xf32> to vector<256x128xf32>
    %36 = arith.truncf %35 : vector<256x128xf32> to vector<256x128xbf16>
    %c0_37 = arith.constant 0 : index
    %c640 = arith.constant 640 : index
    %37 = vector.load %arg10[%c0_37, %c640] : memref<256x1152xbf16, #tpu.memory_space<vmem>>, vector<256x128xbf16>
    tpu.vector_store %arg10[%c0_37, %c640], %36 {strides = array<i32>} : memref<256x1152xbf16, #tpu.memory_space<vmem>>, vector<256x128xbf16>,
    %c2_38 = arith.constant 2 : index
    %c0_39 = arith.constant 0 : index
    %c0_40 = arith.constant 0 : index
    %38 = vector.load %arg9[%c2_38, %c0_39, %c0_40] : memref<18x18x128xf32, #tpu.memory_space<vmem>>, vector<16x16x128xf32>
    %39 = vector.shape_cast %38 : vector<16x16x128xf32> to vector<256x128xf32>
    %40 = arith.truncf %39 : vector<256x128xf32> to vector<256x128xbf16>
    %c0_41 = arith.constant 0 : index
    %c768 = arith.constant 768 : index
    %41 = vector.load %arg10[%c0_41, %c768] : memref<256x1152xbf16, #tpu.memory_space<vmem>>, vector<256x128xbf16>
    tpu.vector_store %arg10[%c0_41, %c768], %40 {strides = array<i32>} : memref<256x1152xbf16, #tpu.memory_space<vmem>>, vector<256x128xbf16>,
    %c2_42 = arith.constant 2 : index
    %c1_43 = arith.constant 1 : index
    %c0_44 = arith.constant 0 : index
    %42 = vector.load %arg9[%c2_42, %c1_43, %c0_44] : memref<18x18x128xf32, #tpu.memory_space<vmem>>, vector<16x16x128xf32>
    %43 = vector.shape_cast %42 : vector<16x16x128xf32> to vector<256x128xf32>
    %44 = arith.truncf %43 : vector<256x128xf32> to vector<256x128xbf16>
    %c0_45 = arith.constant 0 : index
    %c896 = arith.constant 896 : index
    %45 = vector.load %arg10[%c0_45, %c896] : memref<256x1152xbf16, #tpu.memory_space<vmem>>, vector<256x128xbf16>
    tpu.vector_store %arg10[%c0_45, %c896], %44 {strides = array<i32>} : memref<256x1152xbf16, #tpu.memory_space<vmem>>, vector<256x128xbf16>,
    %c2_46 = arith.constant 2 : index
    %c2_47 = arith.constant 2 : index
    %c0_48 = arith.constant 0 : index
    %46 = vector.load %arg9[%c2_46, %c2_47, %c0_48] : memref<18x18x128xf32, #tpu.memory_space<vmem>>, vector<16x16x128xf32>
    %47 = vector.shape_cast %46 : vector<16x16x128xf32> to vector<256x128xf32>
    %48 = arith.truncf %47 : vector<256x128xf32> to vector<256x128xbf16>
    %c0_49 = arith.constant 0 : index
    %c1024 = arith.constant 1024 : index
    %49 = vector.load %arg10[%c0_49, %c1024] : memref<256x1152xbf16, #tpu.memory_space<vmem>>, vector<256x128xbf16>
    tpu.vector_store %arg10[%c0_49, %c1024], %48 {strides = array<i32>} : memref<256x1152xbf16, #tpu.memory_space<vmem>>, vector<256x128xbf16>,
    %c0_50 = arith.constant 0 : index
    %c0_51 = arith.constant 0 : index
    %50 = vector.load %arg10[%c0_50, %c0_51] : memref<256x1152xbf16, #tpu.memory_space<vmem>>, vector<256x1152xbf16>
    %c0_52 = arith.constant 0 : index
    %c0_53 = arith.constant 0 : index
    %51 = vector.load %arg4[%c0_52, %c0_53] : memref<1152x128xbf16, #tpu.memory_space<vmem>>, vector<1152x128xbf16>
    %cst_54 = arith.constant dense<0.000000e+00> : vector<256x128xf32>
    %52 = tpu.matmul %50, %51, %cst_54 {dimension_numbers = #tpu.dot_dimension_numbers<[1], [0], [0], [1], [0, 0, 1, 1], [], []>} : vector<256x1152xbf16>, vector<1152x128xbf16>, vector<256x128xf32> -> vector<256x128xf32>
    %c0_55 = arith.constant 0 : index
    %c0_56 = arith.constant 0 : index
    %53 = vector.load %arg5[%c0_55, %c0_56] : memref<1x128xf32, #tpu.memory_space<vmem>>, vector<1x128xf32>
    %54 = vector.broadcast %53 : vector<1x128xf32> to vector<256x128xf32>
    %55 = arith.addf %52, %54 : vector<256x128xf32>
    %cst_57 = arith.constant 0.000000e+00 : f32
    %56 = vector.broadcast %cst_57 : f32 to vector<256x128xf32>
    %57 = arith.maximumf %55, %56 : vector<256x128xf32>
    %58 = arith.truncf %57 : vector<256x128xf32> to vector<256x128xbf16>
    %c0_58 = arith.constant 0 : index
    %c0_59 = arith.constant 0 : index
    %59 = vector.load %arg6[%c0_58, %c0_59] : memref<128x128xbf16, #tpu.memory_space<vmem>>, vector<128x128xbf16>
    %cst_60 = arith.constant dense<0.000000e+00> : vector<256x128xf32>
    %60 = tpu.matmul %58, %59, %cst_60 {dimension_numbers = #tpu.dot_dimension_numbers<[1], [0], [0], [1], [0, 0, 1, 1], [], []>} : vector<256x128xbf16>, vector<128x128xbf16>, vector<256x128xf32> -> vector<256x128xf32>
    %c0_61 = arith.constant 0 : index
    %c0_62 = arith.constant 0 : index
    %61 = vector.load %arg7[%c0_61, %c0_62] : memref<1x128xf32, #tpu.memory_space<vmem>>, vector<1x128xf32>
    %62 = vector.broadcast %61 : vector<1x128xf32> to vector<256x128xf32>
    %63 = arith.addf %60, %62 : vector<256x128xf32>
    %64 = arith.addf %63, %1 : vector<256x128xf32>
    %cst_63 = arith.constant 0.000000e+00 : f32
    %65 = vector.broadcast %cst_63 : f32 to vector<256x128xf32>
    %66 = arith.maximumf %64, %65 : vector<256x128xf32>
    %67 = vector.shape_cast %66 : vector<256x128xf32> to vector<1x16x16x128xf32>
    %c0_64 = arith.constant 0 : index
    %c0_65 = arith.constant 0 : index
    %c0_66 = arith.constant 0 : index
    %c0_67 = arith.constant 0 : index
    %68 = vector.load %arg8[%c0_64, %c0_65, %c0_66, %c0_67] : memref<1x16x16x128xf32, #tpu.memory_space<vmem>>, vector<1x16x16x128xf32>
    tpu.vector_store %arg8[%c0_64, %c0_65, %c0_66, %c0_67], %67 {strides = array<i32>} : memref<1x16x16x128xf32, #tpu.memory_space<vmem>>, vector<1x16x16x128xf32>,
    return
  }
  func.func @transform_0(%arg0: i32) -> (i32, i32, i32, i32) {
    %c0_i32 = arith.constant 0 : i32
    %c0_i32_0 = arith.constant 0 : i32
    %c0_i32_1 = arith.constant 0 : i32
    %c0_i32_2 = arith.constant 0 : i32
    return %arg0, %c0_i32, %c0_i32_0, %c0_i32_1 : i32, i32, i32, i32
  }
  func.func @transform_1(%arg0: i32) -> (i32, i32) {
    %c0_i32 = arith.constant 0 : i32
    %c0_i32_0 = arith.constant 0 : i32
    %c0_i32_1 = arith.constant 0 : i32
    return %c0_i32, %c0_i32_0 : i32, i32
  }
  func.func @transform_2(%arg0: i32) -> (i32, i32) {
    %c0_i32 = arith.constant 0 : i32
    %c0_i32_0 = arith.constant 0 : i32
    %c0_i32_1 = arith.constant 0 : i32
    return %c0_i32, %c0_i32_0 : i32, i32
  }
  func.func @transform_3(%arg0: i32) -> (i32, i32) {
    %c0_i32 = arith.constant 0 : i32
    %c0_i32_0 = arith.constant 0 : i32
    %c0_i32_1 = arith.constant 0 : i32
    return %c0_i32, %c0_i32_0 : i32, i32
  }
  func.func @transform_4(%arg0: i32) -> (i32, i32) {
    %c0_i32 = arith.constant 0 : i32
    %c0_i32_0 = arith.constant 0 : i32
    %c0_i32_1 = arith.constant 0 : i32
    return %c0_i32, %c0_i32_0 : i32, i32
  }
  func.func @transform_5(%arg0: i32) -> (i32, i32) {
    %c0_i32 = arith.constant 0 : i32
    %c0_i32_0 = arith.constant 0 : i32
    %c0_i32_1 = arith.constant 0 : i32
    return %c0_i32, %c0_i32_0 : i32, i32
  }
  func.func @transform_6(%arg0: i32) -> (i32, i32) {
    %c0_i32 = arith.constant 0 : i32
    %c0_i32_0 = arith.constant 0 : i32
    %c0_i32_1 = arith.constant 0 : i32
    return %c0_i32, %c0_i32_0 : i32, i32
  }
  func.func @transform_7(%arg0: i32) -> (i32, i32, i32, i32) {
    %c0_i32 = arith.constant 0 : i32
    %c0_i32_0 = arith.constant 0 : i32
    %c0_i32_1 = arith.constant 0 : i32
    %c0_i32_2 = arith.constant 0 : i32
    return %arg0, %c0_i32, %c0_i32_0, %c0_i32_1 : i32, i32, i32, i32
  }
}

</mosaic_0001>

<llo_original>
// kernel: tpu_custom_call.1
$region0: #{tpu_custom_call.1}
  #allocation0 [shape = 'u32[]', space=smem, size = 0x4, offset = 0x4, fixed_abs, tag = 'smem constant byte address 0x4 - core index']
  #allocation1 [shape = 'u32[144,128]{1,0:T(1,128)}', space=vmem, size = 0x12000, scoped, tag = 'internal scratch']
  #allocation2 [shape = 'f32[18,18,128]{2,1,0:T(8,128)}', space=vmem, size = 0x36000, scoped, tag = 'scratch operand']
  #allocation3 [shape = 'bf16[256,1152]{1,0:T(16,128)(2,1)}', space=vmem, size = 0x90000, scoped, tag = 'scratch operand']
  %s0 = inlined_call_operand.hbm [shape: f32[2,16,16,128], index: 0, kind: input, shape index: {}]
  %s1 = inlined_call_operand.hbm [shape: bf16[128,128], index: 1, kind: input, shape index: {}]
  %s2 = inlined_call_operand.vmem [shape: f32[1,128], index: 2, kind: input, shape index: {}]
  %s3 = inlined_call_operand.hbm [shape: bf16[1152,128], index: 3, kind: input, shape index: {}]
  %s4 = inlined_call_operand.vmem [shape: f32[1,128], index: 4, kind: input, shape index: {}]
  %s5 = inlined_call_operand.hbm [shape: bf16[128,128], index: 5, kind: input, shape index: {}]
  %s6 = inlined_call_operand.vmem [shape: f32[1,128], index: 6, kind: input, shape index: {}]
  %s7 = inlined_call_operand.hbm [shape: f32[2,16,16,128], index: 7, kind: output, shape index: {}]
  %s8 = sld [smem:[#allocation0]]
  $region77: #{tpu_custom_call.1} parent=0
    _
  %s10 = ssub.s32 1, %s8
  %s11 = scalar_select 0, %s10, %s8
  $region1: #{tpu_custom_call.1} parent=0
    #allocation4 [shape = 'u8[262144]{0}', space=vmem, size = 0x40000, scoped, tag = 'input window, operand 0']
    #allocation5 [shape = 's32[2]{0}', space=sflag, size = 0x8, scoped, tag = 'scoped memory for tpu_custom_call.1']
    #allocation6 [shape = 's32[2]{0}', space=sflag, size = 0x8, scoped, tag = 'scoped memory for tpu_custom_call.1']
    #allocation7 [shape = 'u8[32768]{0}', space=vmem, size = 0x8000, scoped, tag = 'input window, operand 1, single buffered']
    #allocation8 [shape = 's32[1]{0}', space=sflag, size = 0x4, scoped, tag = 'scoped memory for tpu_custom_call.1']
    #allocation9 [shape = 'u8[294912]{0}', space=vmem, size = 0x48000, scoped, tag = 'input window, operand 3, single buffered']
    #allocation10 [shape = 'u8[32768]{0}', space=vmem, size = 0x8000, scoped, tag = 'input window, operand 5, single buffered']
    #allocation11 [shape = 's32[1]{0}', space=sflag, size = 0x4, scoped, tag = 'scoped memory for tpu_custom_call.1']
    #allocation12 [shape = 'u8[262144]{0}', space=vmem, size = 0x40000, scoped, tag = 'output window, operand 0']
    %12 = vsyncpa [#allocation5], 0
    %s13 = scalar_lea.sflag [#allocation5], 1
    %14 = vsyncpa %s13, 0
    %15 = vsyncpa [#allocation8], 0
    %16 = vsyncpa [#allocation11], 0
    %17 = vsyncpa [#allocation6], 0
    %s18 = scalar_lea.sflag [#allocation6], 1
    %19 = vsyncpa %s18, 0
    loop: start=0, step=1, limit=4
    $region2: #{tpu_custom_call.1} parent=1 // loop_pre_header
      _
    $region3: #{tpu_custom_call.1} parent=1 // loop_header
      %s21 = sphi 0, %s25
      %p22 = scmp.ge.s32.totalorder %s21, 4
      %s31 = sphi 0, %s33
      %s34 = sphi 0, %s31
      %s35 = sphi 0, %s34
      %s51 = sphi 0, %s35
      %s55 = sphi 0, %s55
      %s57 = sphi 0, %s55
      %s58 = sphi 0, %s57
      %s72 = sphi 0, %s58
      %s76 = sphi 0, %s76
      %s78 = sphi 0, %s76
      %s79 = sphi 0, %s78
      %s93 = sphi 0, %s79
      %s97 = sphi 0, %s97
      %s99 = sphi 0, %s97
      %s100 = sphi 0, %s99
      %s114 = sphi 0, %s100
      %s118 = sphi 0, %s118
      %s120 = sphi 0, %s118
      %s121 = sphi 0, %s120
      %s135 = sphi 0, %s121
      %s139 = sphi 0, %s139
      %s141 = sphi 0, %s139
      %s142 = sphi 0, %s141
      %s156 = sphi 0, %s142
      %s160 = sphi 0, %s160
      %s162 = sphi 0, %s160
      %s163 = sphi 0, %s162
      %s177 = sphi 0, %s163
      %s183 = sphi 0, %s185
      %s186 = sphi 0, %s183
      %s187 = sphi 0, %s186
      %s203 = sphi 0, %s187
    $region4: #{tpu_custom_call.1} parent=1 // loop_header_branch
      %24 = sbr.rel (%p22) target = $region8
    $region5: #{tpu_custom_call.1} parent=1 // loop_body
      %s26 = ssub.s32 %s21, 1
      %s27 = ssub.s32 %s21, 2
      %s28 = sadd.s32 %s21, 1
      %s29 = ssub.s32 %s21, %s28
      %p30 = scmp.eq.s32.totalorder %s29, 0
      %s32 = sadd.s32 %s31, 1
      %s33 = scalar_select %p30, %s31, %s32
      %p36 = pneg %p30
      %p37 = scmp.eq.s32.totalorder %s21, 1
      %p38 = por %p36, %p37
      %p39 = scmp.ne.s32.totalorder %s31, %s34
      %p40 = scmp.eq.s32.totalorder %s21, 0
      %p41 = por %p39, %p40
      %p42 = scmp.ne.s32.totalorder %s31, %s34
      %p43 = scmp.eq.s32.totalorder %s26, 1
      %p44 = por %p42, %p43
      %p45 = scmp.ne.s32.totalorder %s34, %s35
      %p46 = scmp.eq.s32.totalorder %s26, 0
      %p47 = por %p45, %p46
      %p48 = scmp.ne.s32.totalorder %s34, %s35
      %p49 = scmp.eq.s32.totalorder %s27, 1
      %p50 = por %p48, %p49
      %p52 = scmp.ne.s32.totalorder %s35, %s51
      %p53 = scmp.eq.s32.totalorder %s27, 0
      %p54 = por %p52, %p53
      %s56 = sadd.s32 %s55, 1
      %p59 = scmp.eq.s32.totalorder %s21, 1
      %p60 = scmp.ne.s32.totalorder %s55, %s57
      %p61 = scmp.eq.s32.totalorder %s21, 0
      %p62 = por %p60, %p61
      %p63 = scmp.ne.s32.totalorder %s55, %s57
      %p64 = scmp.eq.s32.totalorder %s26, 1
      %p65 = por %p63, %p64
      %p66 = scmp.ne.s32.totalorder %s57, %s58
      %p67 = scmp.eq.s32.totalorder %s26, 0
      %p68 = por %p66, %p67
      %p69 = scmp.ne.s32.totalorder %s57, %s58
      %p70 = scmp.eq.s32.totalorder %s27, 1
      %p71 = por %p69, %p70
      %p73 = scmp.ne.s32.totalorder %s58, %s72
      %p74 = scmp.eq.s32.totalorder %s27, 0
      %p75 = por %p73, %p74
      %s77 = sadd.s32 %s76, 1
      %p80 = scmp.eq.s32.totalorder %s21, 1
      %p81 = scmp.ne.s32.totalorder %s76, %s78
      %p82 = scmp.eq.s32.totalorder %s21, 0
      %p83 = por %p81, %p82
      %p84 = scmp.ne.s32.totalorder %s76, %s78
      %p85 = scmp.eq.s32.totalorder %s26, 1
      %p86 = por %p84, %p85
      %p87 = scmp.ne.s32.totalorder %s78, %s79
      %p88 = scmp.eq.s32.totalorder %s26, 0
      %p89 = por %p87, %p88
      %p90 = scmp.ne.s32.totalorder %s78, %s79
      %p91 = scmp.eq.s32.totalorder %s27, 1
      %p92 = por %p90, %p91
      %p94 = scmp.ne.s32.totalorder %s79, %s93
      %p95 = scmp.eq.s32.totalorder %s27, 0
      %p96 = por %p94, %p95
      %s98 = sadd.s32 %s97, 1
      %p101 = scmp.eq.s32.totalorder %s21, 1
      %p102 = scmp.ne.s32.totalorder %s97, %s99
      %p103 = scmp.eq.s32.totalorder %s21, 0
      %p104 = por %p102, %p103
      %p105 = scmp.ne.s32.totalorder %s97, %s99
      %p106 = scmp.eq.s32.totalorder %s26, 1
      %p107 = por %p105, %p106
      %p108 = scmp.ne.s32.totalorder %s99, %s100
      %p109 = scmp.eq.s32.totalorder %s26, 0
      %p110 = por %p108, %p109
      %p111 = scmp.ne.s32.totalorder %s99, %s100
      %p112 = scmp.eq.s32.totalorder %s27, 1
      %p113 = por %p111, %p112
      %p115 = scmp.ne.s32.totalorder %s100, %s114
      %p116 = scmp.eq.s32.totalorder %s27, 0
      %p117 = por %p115, %p116
      %s119 = sadd.s32 %s118, 1
      %p122 = scmp.eq.s32.totalorder %s21, 1
      %p123 = scmp.ne.s32.totalorder %s118, %s120
      %p124 = scmp.eq.s32.totalorder %s21, 0
      %p125 = por %p123, %p124
      %p126 = scmp.ne.s32.totalorder %s118, %s120
      %p127 = scmp.eq.s32.totalorder %s26, 1
      %p128 = por %p126, %p127
      %p129 = scmp.ne.s32.totalorder %s120, %s121
      %p130 = scmp.eq.s32.totalorder %s26, 0
      %p131 = por %p129, %p130
      %p132 = scmp.ne.s32.totalorder %s120, %s121
      %p133 = scmp.eq.s32.totalorder %s27, 1
      %p134 = por %p132, %p133
      %p136 = scmp.ne.s32.totalorder %s121, %s135
      %p137 = scmp.eq.s32.totalorder %s27, 0
      %p138 = por %p136, %p137
      %s140 = sadd.s32 %s139, 1
      %p143 = scmp.eq.s32.totalorder %s21, 1
      %p144 = scmp.ne.s32.totalorder %s139, %s141
      %p145 = scmp.eq.s32.totalorder %s21, 0
      %p146 = por %p144, %p145
      %p147 = scmp.ne.s32.totalorder %s139, %s141
      %p148 = scmp.eq.s32.totalorder %s26, 1
      %p149 = por %p147, %p148
      %p150 = scmp.ne.s32.totalorder %s141, %s142
      %p151 = scmp.eq.s32.totalorder %s26, 0
      %p152 = por %p150, %p151
      %p153 = scmp.ne.s32.totalorder %s141, %s142
      %p154 = scmp.eq.s32.totalorder %s27, 1
      %p155 = por %p153, %p154
      %p157 = scmp.ne.s32.totalorder %s142, %s156
      %p158 = scmp.eq.s32.totalorder %s27, 0
      %p159 = por %p157, %p158
      %s161 = sadd.s32 %s160, 1
      %p164 = scmp.eq.s32.totalorder %s21, 1
      %p165 = scmp.ne.s32.totalorder %s160, %s162
      %p166 = scmp.eq.s32.totalorder %s21, 0
      %p167 = por %p165, %p166
      %p168 = scmp.ne.s32.totalorder %s160, %s162
      %p169 = scmp.eq.s32.totalorder %s26, 1
      %p170 = por %p168, %p169
      %p171 = scmp.ne.s32.totalorder %s162, %s163
      %p172 = scmp.eq.s32.totalorder %s26, 0
      %p173 = por %p171, %p172
      %p174 = scmp.ne.s32.totalorder %s162, %s163
      %p175 = scmp.eq.s32.totalorder %s27, 1
      %p176 = por %p174, %p175
      %p178 = scmp.ne.s32.totalorder %s163, %s177
      %p179 = scmp.eq.s32.totalorder %s27, 0
      %p180 = por %p178, %p179
      %s181 = ssub.s32 %s21, %s28
      %p182 = scmp.eq.s32.totalorder %s181, 0
      %s184 = sadd.s32 %s183, 1
      %s185 = scalar_select %p182, %s183, %s184
      %p188 = pneg %p182
      %p189 = scmp.eq.s32.totalorder %s21, 1
      %p190 = por %p188, %p189
      %p191 = scmp.ne.s32.totalorder %s183, %s186
      %p192 = scmp.eq.s32.totalorder %s21, 0
      %p193 = por %p191, %p192
      %p194 = scmp.ne.s32.totalorder %s183, %s186
      %p195 = scmp.eq.s32.totalorder %s26, 1
      %p196 = por %p194, %p195
      %p197 = scmp.ne.s32.totalorder %s186, %s187
      %p198 = scmp.eq.s32.totalorder %s26, 0
      %p199 = por %p197, %p198
      %p200 = scmp.ne.s32.totalorder %s186, %s187
      %p201 = scmp.eq.s32.totalorder %s27, 1
      %p202 = por %p200, %p201
      %p204 = scmp.ne.s32.totalorder %s187, %s203
      %p205 = scmp.eq.s32.totalorder %s27, 0
      %p206 = por %p204, %p205
      %p207 = scmp.le.s32.totalorder 1, %s21
      %p208 = scmp.lt.s32.totalorder %s21, 3
      %p209 = pnand %p207, %p208
      %p210 = pneg %p209
      // Predicated region
      $region9: #{tpu_custom_call.1} parent=5 // pred_check
        _
      $region10: #{tpu_custom_call.1} parent=5 // pred_check_branch
        %212 = sbr.rel (%p209) target = $region12
      $region11: #{tpu_custom_call.1} parent=5 // pred_region
        %s213 = ssub.s32 %s21, 1
        // Predicated region
        $region13: #{tpu_custom_call.1} parent=11 // pred_check
          %p214 = pneg %p68
        $region14: #{tpu_custom_call.1} parent=11 // pred_check_branch
          %216 = sbr.rel (%p214) target = $region16
        $region15: #{tpu_custom_call.1} parent=11 // pred_region
          %s218 = ssub.s32 1024, 1024
          %219 = vsyncadd [#allocation8], %s218
          %s220 = sshll.u32 [#allocation7], 4
          %s221 = int_to_ptr.vmem [resolvable:$true] %s220
          %226 = dma.hbm_to_vmem [thread:$0]  %s1, 1024, %s221, [#allocation8], 64, 64, 4
        $region16: #{tpu_custom_call.1} parent=11 // pred_fallthru
          _
        // Predicated region
        $region17: #{tpu_custom_call.1} parent=11 // pred_check
          %p227 = pneg %p89
        $region18: #{tpu_custom_call.1} parent=11 // pred_check_branch
          %229 = sbr.rel (%p227) target = $region20
        $region19: #{tpu_custom_call.1} parent=11 // pred_region
          _
        $region20: #{tpu_custom_call.1} parent=11 // pred_fallthru
          _
        // Predicated region
        $region21: #{tpu_custom_call.1} parent=11 // pred_check
          %p230 = pneg %p110
        $region22: #{tpu_custom_call.1} parent=11 // pred_check_branch
          %232 = sbr.rel (%p230) target = $region24
        $region23: #{tpu_custom_call.1} parent=11 // pred_region
          %s234 = ssub.s32 9216, 9216
          %235 = vsyncadd [#allocation8], %s234
          %s236 = sshll.u32 [#allocation9], 4
          %s237 = int_to_ptr.vmem [resolvable:$true] %s236
          %242 = dma.hbm_to_vmem [thread:$0]  %s3, 9216, %s237, [#allocation8], 64, 64, 4
        $region24: #{tpu_custom_call.1} parent=11 // pred_fallthru
          _
        // Predicated region
        $region25: #{tpu_custom_call.1} parent=11 // pred_check
          %p243 = pneg %p131
        $region26: #{tpu_custom_call.1} parent=11 // pred_check_branch
          %245 = sbr.rel (%p243) target = $region28
        $region27: #{tpu_custom_call.1} parent=11 // pred_region
          _
        $region28: #{tpu_custom_call.1} parent=11 // pred_fallthru
          _
        // Predicated region
        $region29: #{tpu_custom_call.1} parent=11 // pred_check
          %p246 = pneg %p152
        $region30: #{tpu_custom_call.1} parent=11 // pred_check_branch
          %248 = sbr.rel (%p246) target = $region32
        $region31: #{tpu_custom_call.1} parent=11 // pred_region
          %s250 = ssub.s32 1024, 1024
          %251 = vsyncadd [#allocation11], %s250
          %s252 = sshll.u32 [#allocation10], 4
          %s253 = int_to_ptr.vmem [resolvable:$true] %s252
          %258 = dma.hbm_to_vmem [thread:$0]  %s5, 1024, %s253, [#allocation11], 64, 64, 4
        $region32: #{tpu_custom_call.1} parent=11 // pred_fallthru
          _
        // Predicated region
        $region33: #{tpu_custom_call.1} parent=11 // pred_check
          %p259 = pneg %p173
        $region34: #{tpu_custom_call.1} parent=11 // pred_check_branch
          %261 = sbr.rel (%p259) target = $region36
        $region35: #{tpu_custom_call.1} parent=11 // pred_region
          _
        $region36: #{tpu_custom_call.1} parent=11 // pred_fallthru
          _
      $region12: #{tpu_custom_call.1} parent=5 // pred_fallthru
        _
      %p262 = scmp.lt.s32.totalorder %s21, 2
      // Predicated region
      $region37: #{tpu_custom_call.1} parent=5 // pred_check
        %p263 = pneg %p262
      $region38: #{tpu_custom_call.1} parent=5 // pred_check_branch
        %265 = sbr.rel (%p263) target = $region40
      $region39: #{tpu_custom_call.1} parent=5 // pred_region
        // Predicated region
        $region41: #{tpu_custom_call.1} parent=39 // pred_check
          %p266 = pneg %p41
        $region42: #{tpu_custom_call.1} parent=39 // pred_check_branch
          %268 = sbr.rel (%p266) target = $region44
        $region43: #{tpu_custom_call.1} parent=39 // pred_region
          %s269 = sand.u32 %s31, 1
          %s270 = scalar_lea.sflag [#allocation5], %s269
          %s271 = sand.u32 %s31, 1
          %s272 = smul.addr %s271, 256
          %s273 = scalar_lea.vmem [#allocation4], %s272
          %s275 = ssub.s32 4096, 4096
          %276 = vsyncadd %s270, %s275
          %s277 = smul.addr %s21, 32
          %s278 = smul.addr %s277, 128
          %s279 = scalar_lea.hbm %s0, %s278
          %s280 = sshll.u32 %s273, 4
          %s281 = int_to_ptr.vmem [resolvable:$true] %s280
          %286 = dma.hbm_to_vmem [thread:$0]  %s279, 4096, %s281, %s270, 128, 128, 8
        $region44: #{tpu_custom_call.1} parent=39 // pred_fallthru
          _
      $region40: #{tpu_custom_call.1} parent=5 // pred_fallthru
        _
      %p287 = scmp.le.s32.totalorder 1, %s21
      %p288 = scmp.lt.s32.totalorder %s21, 3
      %p289 = pnand %p287, %p288
      %p290 = pneg %p289
      // Predicated region
      $region45: #{tpu_custom_call.1} parent=5 // pred_check
        _
      $region46: #{tpu_custom_call.1} parent=5 // pred_check_branch
        %292 = sbr.rel (%p289) target = $region48
      $region47: #{tpu_custom_call.1} parent=5 // pred_region
        %s293 = ssub.s32 %s21, 1
        %s294 = sand.u32 %s34, 1
        %s295 = scalar_lea.sflag [#allocation5], %s294
        %s296 = sand.u32 %s34, 1
        %s297 = smul.addr %s296, 256
        %s298 = scalar_lea.vmem [#allocation4], %s297
        // Predicated region
        $region49: #{tpu_custom_call.1} parent=47 // pred_check
          %p299 = pneg %p47
        $region50: #{tpu_custom_call.1} parent=47 // pred_check_branch
          %301 = sbr.rel (%p299) target = $region52
        $region51: #{tpu_custom_call.1} parent=47 // pred_region
          %302 = dma.done %s295, 4096
        $region52: #{tpu_custom_call.1} parent=47 // pred_fallthru
          _
        // Predicated region
        $region53: #{tpu_custom_call.1} parent=47 // pred_check
          %p303 = pneg %p68
        $region54: #{tpu_custom_call.1} parent=47 // pred_check_branch
          %305 = sbr.rel (%p303) target = $region56
        $region55: #{tpu_custom_call.1} parent=47 // pred_region
          %306 = dma.done [#allocation8], 1024
        $region56: #{tpu_custom_call.1} parent=47 // pred_fallthru
          _
        // Predicated region
        $region57: #{tpu_custom_call.1} parent=47 // pred_check
          %p307 = pneg %p110
        $region58: #{tpu_custom_call.1} parent=47 // pred_check_branch
          %309 = sbr.rel (%p307) target = $region60
        $region59: #{tpu_custom_call.1} parent=47 // pred_region
          %310 = dma.done [#allocation8], 9216
        $region60: #{tpu_custom_call.1} parent=47 // pred_fallthru
          _
        // Predicated region
        $region61: #{tpu_custom_call.1} parent=47 // pred_check
          %p311 = pneg %p152
        $region62: #{tpu_custom_call.1} parent=47 // pred_check_branch
          %313 = sbr.rel (%p311) target = $region64
        $region63: #{tpu_custom_call.1} parent=47 // pred_region
          %314 = dma.done [#allocation11], 1024
        $region64: #{tpu_custom_call.1} parent=47 // pred_fallthru
          _
        %s315 = sand.u32 %s34, 1
        %s316 = scalar_lea.sflag [#allocation5], %s315
        %s317 = sand.u32 %s34, 1
        %s318 = smul.addr %s317, 256
        %s319 = scalar_lea.vmem [#allocation4], %s318
        %p320 = pneg %p47
        %p321 = pneg %p44
        %p322 = pneg %p68
        %p323 = pneg %p65
        %p324 = pneg %p89
        %p325 = pneg %p86
        %p326 = pneg %p110
        %p327 = pneg %p107
        %p328 = pneg %p131
        %p329 = pneg %p128
        %p330 = pneg %p152
        %p331 = pneg %p149
        %p332 = pneg %p173
        %p333 = pneg %p170
        %p334 = pneg %p199
        %p335 = pneg %p196
        %s336 = sand.u32 %s186, 1
        %s337 = scalar_lea.sflag [#allocation6], %s336
        %s338 = sand.u32 %s186, 1
        %s339 = smul.addr %s338, 256
        %s340 = scalar_lea.vmem [#allocation12], %s339
        %v342 = vld [vmem:[%s298] sm:$0xff]
        %v343 = vld [vmem:[%s298 + $0x8] sm:$0xff]
        %v344 = vld [vmem:[%s298 + $0x10] sm:$0xff]
        %v345 = vld [vmem:[%s298 + $0x18] sm:$0xff]
        %v346 = vld [vmem:[%s298 + $0x20] sm:$0xff]
        %v347 = vld [vmem:[%s298 + $0x28] sm:$0xff]
        %v348 = vld [vmem:[%s298 + $0x30] sm:$0xff]
        %v349 = vld [vmem:[%s298 + $0x38] sm:$0xff]
        %v350 = vld [vmem:[%s298 + $0x40] sm:$0xff]
        %v351 = vld [vmem:[%s298 + $0x48] sm:$0xff]
        %v352 = vld [vmem:[%s298 + $0x50] sm:$0xff]
        %v353 = vld [vmem:[%s298 + $0x58] sm:$0xff]
        %v354 = vld [vmem:[%s298 + $0x60] sm:$0xff]
        %v355 = vld [vmem:[%s298 + $0x68] sm:$0xff]
        %v356 = vld [vmem:[%s298 + $0x70] sm:$0xff]
        %v357 = vld [vmem:[%s298 + $0x78] sm:$0xff]
        %v358 = vld [vmem:[%s298 + $0x80] sm:$0xff]
        %v359 = vld [vmem:[%s298 + $0x88] sm:$0xff]
        %v360 = vld [vmem:[%s298 + $0x90] sm:$0xff]
        %v361 = vld [vmem:[%s298 + $0x98] sm:$0xff]
        %v362 = vld [vmem:[%s298 + $0xa0] sm:$0xff]
        %v363 = vld [vmem:[%s298 + $0xa8] sm:$0xff]
        %v364 = vld [vmem:[%s298 + $0xb0] sm:$0xff]
        %v365 = vld [vmem:[%s298 + $0xb8] sm:$0xff]
        %v366 = vld [vmem:[%s298 + $0xc0] sm:$0xff]
        %v367 = vld [vmem:[%s298 + $0xc8] sm:$0xff]
        %v368 = vld [vmem:[%s298 + $0xd0] sm:$0xff]
        %v369 = vld [vmem:[%s298 + $0xd8] sm:$0xff]
        %v370 = vld [vmem:[%s298 + $0xe0] sm:$0xff]
        %v371 = vld [vmem:[%s298 + $0xe8] sm:$0xff]
        %v372 = vld [vmem:[%s298 + $0xf0] sm:$0xff]
        %v373 = vld [vmem:[%s298 + $0xf8] sm:$0xff]
        %v374 = vpack.c.bf16 %v343, %v342
        %v375 = vpack.c.bf16 %v345, %v344
        %v376 = vpack.c.bf16 %v347, %v346
        %v377 = vpack.c.bf16 %v349, %v348
        %v378 = vpack.c.bf16 %v351, %v350
        %v379 = vpack.c.bf16 %v353, %v352
        %v380 = vpack.c.bf16 %v355, %v354
        %v381 = vpack.c.bf16 %v357, %v356
        %v382 = vpack.c.bf16 %v359, %v358
        %v383 = vpack.c.bf16 %v361, %v360
        %v384 = vpack.c.bf16 %v363, %v362
        %v385 = vpack.c.bf16 %v365, %v364
        %v386 = vpack.c.bf16 %v367, %v366
        %v387 = vpack.c.bf16 %v369, %v368
        %v388 = vpack.c.bf16 %v371, %v370
        %v389 = vpack.c.bf16 %v373, %v372
        %v390 = vld [vmem:[#allocation7] sm:$0xf]
        %v391 = vld [vmem:[#allocation7 + $0x4] sm:$0xf]
        %v392 = vld [vmem:[#allocation7 + $0x8] sm:$0xf]
        %v393 = vld [vmem:[#allocation7 + $0xc] sm:$0xf]
        %v394 = vld [vmem:[#allocation7 + $0x10] sm:$0xf]
        %v395 = vld [vmem:[#allocation7 + $0x14] sm:$0xf]
        %v396 = vld [vmem:[#allocation7 + $0x18] sm:$0xf]
        %v397 = vld [vmem:[#allocation7 + $0x1c] sm:$0xf]
        %v398 = vld [vmem:[#allocation7 + $0x20] sm:$0xf]
        %v399 = vld [vmem:[#allocation7 + $0x24] sm:$0xf]
        %v400 = vld [vmem:[#allocation7 + $0x28] sm:$0xf]
        %v401 = vld [vmem:[#allocation7 + $0x2c] sm:$0xf]
        %v402 = vld [vmem:[#allocation7 + $0x30] sm:$0xf]
        %v403 = vld [vmem:[#allocation7 + $0x34] sm:$0xf]
        %v404 = vld [vmem:[#allocation7 + $0x38] sm:$0xf]
        %v405 = vld [vmem:[#allocation7 + $0x3c] sm:$0xf]
        %v406 = vld [vmem:[%s2] sm:$0x1]
        %v408 = vlaneseq
        %v409 = vshrl.u32 %v408, 7
        %v410 = vsub.s32 0, %v409
        %v411 = vrot.slane %v406, %v410
        %v429 = vunpack.c.l.b16 %v390
        %v430 = vunpack.c.l.b16 %v391
        %v431 = vunpack.c.l.b16 %v392
        %v432 = vunpack.c.l.b16 %v393
        %v433 = vunpack.c.l.b16 %v394
        %v434 = vunpack.c.l.b16 %v395
        %v435 = vunpack.c.l.b16 %v396
        %v436 = vunpack.c.l.b16 %v397
        %v437 = vunpack.c.l.b16 %v398
        %v438 = vunpack.c.l.b16 %v399
        %v439 = vunpack.c.l.b16 %v400
        %v440 = vunpack.c.l.b16 %v401
        %v441 = vunpack.c.l.b16 %v402
        %v442 = vunpack.c.l.b16 %v403
        %v443 = vunpack.c.l.b16 %v404
        %v444 = vunpack.c.l.b16 %v405
        %v445 = vpack.c.b16 %v430, %v429
        %v446 = vpack.c.b16 %v432, %v431
        %v447 = vpack.c.b16 %v434, %v433
        %v448 = vpack.c.b16 %v436, %v435
        %v449 = vpack.c.b16 %v438, %v437
        %v450 = vpack.c.b16 %v440, %v439
        %v451 = vpack.c.b16 %v442, %v441
        %v452 = vpack.c.b16 %v444, %v443
        %461 = vmatprep.subr.bf16.mxu0 0
        %462 = vmatpush1.bf16.msra.mxu0 %v445
        %463 = vmatprep.subr.bf16.mxu0 0
        %464 = vmatpush1.bf16.msra.mxu0 %v446
        %465 = vmatprep.subr.bf16.mxu0 0
        %466 = vmatpush1.bf16.msra.mxu0 %v447
        %467 = vmatprep.subr.bf16.mxu0 0
        %468 = vmatpush1.bf16.msra.mxu0 %v448
        %469 = vmatprep.subr.bf16.mxu0 0
        %470 = vmatpush1.bf16.msra.mxu0 %v449
        %471 = vmatprep.subr.bf16.mxu0 0
        %472 = vmatpush1.bf16.msra.mxu0 %v450
        %473 = vmatprep.subr.bf16.mxu0 0
        %474 = vmatpush1.bf16.msra.mxu0 %v451
        %475 = vmatprep.subr.bf16.mxu0 0
        %476 = vmatpush1.bf16.msra.mxu0 %v452
        %477 = vmatprep.subr.bf16.mxu0 0
        %478 = vmatpush1.bf16.msra.mxu0 0
        %479 = vmatprep.subr.bf16.mxu0 0
        %480 = vmatpush1.bf16.msra.mxu0 0
        %481 = vmatprep.subr.bf16.mxu0 0
        %482 = vmatpush1.bf16.msra.mxu0 0
        %483 = vmatprep.subr.bf16.mxu0 0
        %484 = vmatpush1.bf16.msra.mxu0 0
        %485 = vmatprep.subr.bf16.mxu0 0
        %486 = vmatpush1.bf16.msra.mxu0 0
        %487 = vmatprep.subr.bf16.mxu0 0
        %488 = vmatpush1.bf16.msra.mxu0 0
        %489 = vmatprep.subr.bf16.mxu0 0
        %490 = vmatpush1.bf16.msra.mxu0 0
        %491 = vmatprep.subr.bf16.mxu0 0
        %492 = vmatpush1.bf16.msra.mxu0 0
        %493 = vmatprep.mubr.bf16.mxu0 0
        %494 = vmatmul.mubr.bf16.gmra.mrb[0].mxu0 %v374
        %v495 = vpop.f32.mrb[0].mxu0
        %v496 = vadd.f32 %v411, %v495
        %v497 = vpop.f32.mrb[0].mxu0
        %v498 = vpop.f32.mrb[0].mxu0
        %v499 = vadd.f32 %v411, %v498
        %v500 = vpop.f32.mrb[0].mxu0
        %501 = vmatprep.mubr.bf16.mxu0 0
        %502 = vmatmul.mubr.bf16.gmra.mrb[0].mxu0 %v375
        %v503 = vpop.f32.mrb[0].mxu0
        %v504 = vadd.f32 %v411, %v503
        %v505 = vpop.f32.mrb[0].mxu0
        %v506 = vpop.f32.mrb[0].mxu0
        %v507 = vadd.f32 %v411, %v506
        %v508 = vpop.f32.mrb[0].mxu0
        %509 = vmatprep.mubr.bf16.mxu0 0
        %510 = vmatmul.mubr.bf16.gmra.mrb[0].mxu0 %v376
        %v511 = vpop.f32.mrb[0].mxu0
        %v512 = vadd.f32 %v411, %v511
        %v513 = vpop.f32.mrb[0].mxu0
        %v514 = vpop.f32.mrb[0].mxu0
        %v515 = vadd.f32 %v411, %v514
        %v516 = vpop.f32.mrb[0].mxu0
        %517 = vmatprep.mubr.bf16.mxu0 0
        %518 = vmatmul.mubr.bf16.gmra.mrb[0].mxu0 %v377
        %v519 = vpop.f32.mrb[0].mxu0
        %v520 = vadd.f32 %v411, %v519
        %v521 = vpop.f32.mrb[0].mxu0
        %v522 = vpop.f32.mrb[0].mxu0
        %v523 = vadd.f32 %v411, %v522
        %v524 = vpop.f32.mrb[0].mxu0
        %525 = vmatprep.mubr.bf16.mxu0 0
        %526 = vmatmul.mubr.bf16.gmra.mrb[0].mxu0 %v378
        %v527 = vpop.f32.mrb[0].mxu0
        %v528 = vadd.f32 %v411, %v527
        %v529 = vpop.f32.mrb[0].mxu0
        %v530 = vpop.f32.mrb[0].mxu0
        %v531 = vadd.f32 %v411, %v530
        %v532 = vpop.f32.mrb[0].mxu0
        %533 = vmatprep.mubr.bf16.mxu0 0
        %534 = vmatmul.mubr.bf16.gmra.mrb[0].mxu0 %v379
        %v535 = vpop.f32.mrb[0].mxu0
        %v536 = vadd.f32 %v411, %v535
        %v537 = vpop.f32.mrb[0].mxu0
        %v538 = vpop.f32.mrb[0].mxu0
        %v539 = vadd.f32 %v411, %v538
        %v540 = vpop.f32.mrb[0].mxu0
        %541 = vmatprep.mubr.bf16.mxu0 0
        %542 = vmatmul.mubr.bf16.gmra.mrb[0].mxu0 %v380
        %v543 = vpop.f32.mrb[0].mxu0
        %v544 = vadd.f32 %v411, %v543
        %v545 = vpop.f32.mrb[0].mxu0
        %v546 = vpop.f32.mrb[0].mxu0
        %v547 = vadd.f32 %v411, %v546
        %v548 = vpop.f32.mrb[0].mxu0
        %549 = vmatprep.mubr.bf16.mxu0 0
        %550 = vmatmul.mubr.bf16.gmra.mrb[0].mxu0 %v381
        %v551 = vpop.f32.mrb[0].mxu0
        %v552 = vadd.f32 %v411, %v551
        %v553 = vpop.f32.mrb[0].mxu0
        %v554 = vpop.f32.mrb[0].mxu0
        %v555 = vadd.f32 %v411, %v554
        %v556 = vpop.f32.mrb[0].mxu0
        %557 = vmatprep.mubr.bf16.mxu0 0
        %558 = vmatmul.mubr.bf16.gmra.mrb[0].mxu0 %v382
        %v559 = vpop.f32.mrb[0].mxu0
        %v560 = vadd.f32 %v411, %v559
        %v561 = vpop.f32.mrb[0].mxu0
        %v562 = vpop.f32.mrb[0].mxu0
        %v563 = vadd.f32 %v411, %v562
        %v564 = vpop.f32.mrb[0].mxu0
        %565 = vmatprep.mubr.bf16.mxu0 0
        %566 = vmatmul.mubr.bf16.gmra.mrb[0].mxu0 %v383
        %v567 = vpop.f32.mrb[0].mxu0
        %v568 = vadd.f32 %v411, %v567
        %v569 = vpop.f32.mrb[0].mxu0
        %v570 = vpop.f32.mrb[0].mxu0
        %v571 = vadd.f32 %v411, %v570
        %v572 = vpop.f32.mrb[0].mxu0
        %573 = vmatprep.mubr.bf16.mxu0 0
        %574 = vmatmul.mubr.bf16.gmra.mrb[0].mxu0 %v384
        %v575 = vpop.f32.mrb[0].mxu0
        %v576 = vadd.f32 %v411, %v575
        %v577 = vpop.f32.mrb[0].mxu0
        %v578 = vpop.f32.mrb[0].mxu0
        %v579 = vadd.f32 %v411, %v578
        %v580 = vpop.f32.mrb[0].mxu0
        %581 = vmatprep.mubr.bf16.mxu0 0
        %582 = vmatmul.mubr.bf16.gmra.mrb[0].mxu0 %v385
        %v583 = vpop.f32.mrb[0].mxu0
        %v584 = vadd.f32 %v411, %v583
        %v585 = vpop.f32.mrb[0].mxu0
        %v586 = vpop.f32.mrb[0].mxu0
        %v587 = vadd.f32 %v411, %v586
        %v588 = vpop.f32.mrb[0].mxu0
        %589 = vmatprep.mubr.bf16.mxu0 0
        %590 = vmatmul.mubr.bf16.gmra.mrb[0].mxu0 %v386
        %v591 = vpop.f32.mrb[0].mxu0
        %v592 = vadd.f32 %v411, %v591
        %v593 = vpop.f32.mrb[0].mxu0
        %v594 = vpop.f32.mrb[0].mxu0
        %v595 = vadd.f32 %v411, %v594
        %v596 = vpop.f32.mrb[0].mxu0
        %597 = vmatprep.mubr.bf16.mxu0 0
        %598 = vmatmul.mubr.bf16.gmra.mrb[0].mxu0 %v387
        %v599 = vpop.f32.mrb[0].mxu0
        %v600 = vadd.f32 %v411, %v599
        %v601 = vpop.f32.mrb[0].mxu0
        %v602 = vpop.f32.mrb[0].mxu0
        %v603 = vadd.f32 %v411, %v602
        %v604 = vpop.f32.mrb[0].mxu0
        %605 = vmatprep.mubr.bf16.mxu0 0
        %606 = vmatmul.mubr.bf16.gmra.mrb[0].mxu0 %v388
        %v607 = vpop.f32.mrb[0].mxu0
        %v608 = vadd.f32 %v411, %v607
        %v609 = vpop.f32.mrb[0].mxu0
        %v610 = vpop.f32.mrb[0].mxu0
        %v611 = vadd.f32 %v411, %v610
        %v612 = vpop.f32.mrb[0].mxu0
        %613 = vmatprep.mubr.bf16.mxu0 0
        %614 = vmatmul.mubr.bf16.gmra.mrb[0].mxu0 %v389
        %v615 = vpop.f32.mrb[0].mxu0
        %v616 = vadd.f32 %v411, %v615
        %v617 = vpop.f32.mrb[0].mxu0
        %v618 = vpop.f32.mrb[0].mxu0
        %v619 = vadd.f32 %v411, %v618
        %v620 = vpop.f32.mrb[0].mxu0
        %621 = vdwg.mxu0
        %v622 = vmax.f32 %v496, 0.0
        %v623 = vmax.f32 %v499, 0.0
        %v624 = vmax.f32 %v504, 0.0
        %v625 = vmax.f32 %v507, 0.0
        %v626 = vmax.f32 %v512, 0.0
        %v627 = vmax.f32 %v515, 0.0
        %v628 = vmax.f32 %v520, 0.0
        %v629 = vmax.f32 %v523, 0.0
        %v630 = vmax.f32 %v528, 0.0
        %v631 = vmax.f32 %v531, 0.0
        %v632 = vmax.f32 %v536, 0.0
        %v633 = vmax.f32 %v539, 0.0
        %v634 = vmax.f32 %v544, 0.0
        %v635 = vmax.f32 %v547, 0.0
        %v636 = vmax.f32 %v552, 0.0
        %v637 = vmax.f32 %v555, 0.0
        %v638 = vmax.f32 %v560, 0.0
        %v639 = vmax.f32 %v563, 0.0
        %v640 = vmax.f32 %v568, 0.0
        %v641 = vmax.f32 %v571, 0.0
        %v642 = vmax.f32 %v576, 0.0
        %v643 = vmax.f32 %v579, 0.0
        %v644 = vmax.f32 %v584, 0.0
        %v645 = vmax.f32 %v587, 0.0
        %v646 = vmax.f32 %v592, 0.0
        %v647 = vmax.f32 %v595, 0.0
        %v648 = vmax.f32 %v600, 0.0
        %v649 = vmax.f32 %v603, 0.0
        %v650 = vmax.f32 %v608, 0.0
        %v651 = vmax.f32 %v611, 0.0
        %v652 = vmax.f32 %v616, 0.0
        %v653 = vmax.f32 %v619, 0.0
        %654 = vst [vmem:[#allocation2] sm:$0xff] 0.0
        %655 = vst [vmem:[#allocation2 + $0x8] sm:$0xff] 0.0
        %656 = vst [vmem:[#allocation2 + $0x10] sm:$0x3] 0.0
        %657 = vst [vmem:[#allocation2 + $0x18] sm:$0xff] 0.0
        %658 = vst [vmem:[#allocation2 + $0x20] sm:$0xff] 0.0
        %659 = vst [vmem:[#allocation2 + $0x28] sm:$0x3] 0.0
        %660 = vst [vmem:[#allocation2 + $0x30] sm:$0xff] 0.0
        %661 = vst [vmem:[#allocation2 + $0x38] sm:$0xff] 0.0
        %662 = vst [vmem:[#allocation2 + $0x40] sm:$0x3] 0.0
        %663 = vst [vmem:[#allocation2 + $0x48] sm:$0xff] 0.0
        %664 = vst [vmem:[#allocation2 + $0x50] sm:$0xff] 0.0
        %665 = vst [vmem:[#allocation2 + $0x58] sm:$0x3] 0.0
        %666 = vst [vmem:[#allocation2 + $0x60] sm:$0xff] 0.0
        %667 = vst [vmem:[#allocation2 + $0x68] sm:$0xff] 0.0
        %668 = vst [vmem:[#allocation2 + $0x70] sm:$0x3] 0.0
        %669 = vst [vmem:[#allocation2 + $0x78] sm:$0xff] 0.0
        %670 = vst [vmem:[#allocation2 + $0x80] sm:$0xff] 0.0
        %671 = vst [vmem:[#allocation2 + $0x88] sm:$0x3] 0.0
        %672 = vst [vmem:[#allocation2 + $0x90] sm:$0xff] 0.0
        %673 = vst [vmem:[#allocation2 + $0x98] sm:$0xff] 0.0
        %674 = vst [vmem:[#allocation2 + $0xa0] sm:$0x3] 0.0
        %675 = vst [vmem:[#allocation2 + $0xa8] sm:$0xff] 0.0
        %676 = vst [vmem:[#allocation2 + $0xb0] sm:$0xff] 0.0
        %677 = vst [vmem:[#allocation2 + $0xb8] sm:$0x3] 0.0
        %678 = vst [vmem:[#allocation2 + $0xc0] sm:$0xff] 0.0
        %679 = vst [vmem:[#allocation2 + $0xc8] sm:$0xff] 0.0
        %680 = vst [vmem:[#allocation2 + $0xd0] sm:$0x3] 0.0
        %681 = vst [vmem:[#allocation2 + $0xd8] sm:$0xff] 0.0
        %682 = vst [vmem:[#allocation2 + $0xe0] sm:$0xff] 0.0
        %683 = vst [vmem:[#allocation2 + $0xe8] sm:$0x3] 0.0
        %684 = vst [vmem:[#allocation2 + $0xf0] sm:$0xff] 0.0
        %685 = vst [vmem:[#allocation2 + $0xf8] sm:$0xff] 0.0
        %686 = vst [vmem:[#allocation2 + $0x100] sm:$0x3] 0.0
        %687 = vst [vmem:[#allocation2 + $0x108] sm:$0xff] 0.0
        %688 = vst [vmem:[#allocation2 + $0x110] sm:$0xff] 0.0
        %689 = vst [vmem:[#allocation2 + $0x118] sm:$0x3] 0.0
        %690 = vst [vmem:[#allocation2 + $0x120] sm:$0xff] 0.0
        %691 = vst [vmem:[#allocation2 + $0x128] sm:$0xff] 0.0
        %692 = vst [vmem:[#allocation2 + $0x130] sm:$0x3] 0.0
        %693 = vst [vmem:[#allocation2 + $0x138] sm:$0xff] 0.0
        %694 = vst [vmem:[#allocation2 + $0x140] sm:$0xff] 0.0
        %695 = vst [vmem:[#allocation2 + $0x148] sm:$0x3] 0.0
        %696 = vst [vmem:[#allocation2 + $0x150] sm:$0xff] 0.0
        %697 = vst [vmem:[#allocation2 + $0x158] sm:$0xff] 0.0
        %698 = vst [vmem:[#allocation2 + $0x160] sm:$0x3] 0.0
        %699 = vst [vmem:[#allocation2 + $0x168] sm:$0xff] 0.0
        %700 = vst [vmem:[#allocation2 + $0x170] sm:$0xff] 0.0
        %701 = vst [vmem:[#allocation2 + $0x178] sm:$0x3] 0.0
        %702 = vst [vmem:[#allocation2 + $0x180] sm:$0xff] 0.0
        %703 = vst [vmem:[#allocation2 + $0x188] sm:$0xff] 0.0
        %704 = vst [vmem:[#allocation2 + $0x190] sm:$0x3] 0.0
        %705 = vst [vmem:[#allocation2 + $0x198] sm:$0xff] 0.0
        %706 = vst [vmem:[#allocation2 + $0x1a0] sm:$0xff] 0.0
        %707 = vst [vmem:[#allocation2 + $0x1a8] sm:$0x3] 0.0
        %s708 = scalar_lea.vmem [#allocation2], 24
        %709 = vst [vmem:[%s708 + $0x1] sm:$0xff] %v622
        %710 = vst [vmem:[%s708 + $0x9] sm:$0xff] %v623
        %711 = vst [vmem:[%s708 + $0x19] sm:$0xff] %v624
        %712 = vst [vmem:[%s708 + $0x21] sm:$0xff] %v625
        %713 = vst [vmem:[%s708 + $0x31] sm:$0xff] %v626
        %714 = vst [vmem:[%s708 + $0x39] sm:$0xff] %v627
        %715 = vst [vmem:[%s708 + $0x49] sm:$0xff] %v628
        %716 = vst [vmem:[%s708 + $0x51] sm:$0xff] %v629
        %717 = vst [vmem:[%s708 + $0x61] sm:$0xff] %v630
        %718 = vst [vmem:[%s708 + $0x69] sm:$0xff] %v631
        %719 = vst [vmem:[%s708 + $0x79] sm:$0xff] %v632
        %720 = vst [vmem:[%s708 + $0x81] sm:$0xff] %v633
        %721 = vst [vmem:[%s708 + $0x91] sm:$0xff] %v634
        %722 = vst [vmem:[%s708 + $0x99] sm:$0xff] %v635
        %723 = vst [vmem:[%s708 + $0xa9] sm:$0xff] %v636
        %724 = vst [vmem:[%s708 + $0xb1] sm:$0xff] %v637
        %725 = vst [vmem:[%s708 + $0xc1] sm:$0xff] %v638
        %726 = vst [vmem:[%s708 + $0xc9] sm:$0xff] %v639
        %727 = vst [vmem:[%s708 + $0xd9] sm:$0xff] %v640
        %728 = vst [vmem:[%s708 + $0xe1] sm:$0xff] %v641
        %729 = vst [vmem:[%s708 + $0xf1] sm:$0xff] %v642
        %730 = vst [vmem:[%s708 + $0xf9] sm:$0xff] %v643
        %731 = vst [vmem:[%s708 + $0x109] sm:$0xff] %v644
        %732 = vst [vmem:[%s708 + $0x111] sm:$0xff] %v645
        %733 = vst [vmem:[%s708 + $0x121] sm:$0xff] %v646
        %734 = vst [vmem:[%s708 + $0x129] sm:$0xff] %v647
        %735 = vst [vmem:[%s708 + $0x139] sm:$0xff] %v648
        %736 = vst [vmem:[%s708 + $0x141] sm:$0xff] %v649
        %737 = vst [vmem:[%s708 + $0x151] sm:$0xff] %v650
        %738 = vst [vmem:[%s708 + $0x159] sm:$0xff] %v651
        %739 = vst [vmem:[%s708 + $0x169] sm:$0xff] %v652
        %740 = vst [vmem:[%s708 + $0x171] sm:$0xff] %v653
        %v741 = vld [vmem:[#allocation2] sm:$0xff]
        %v742 = vld [vmem:[#allocation2 + $0x8] sm:$0xff]
        %v743 = vld [vmem:[#allocation2 + $0x18] sm:$0xff]
        %v744 = vld [vmem:[#allocation2 + $0x20] sm:$0xff]
        %v745 = vld [vmem:[#allocation2 + $0x30] sm:$0xff]
        %v746 = vld [vmem:[#allocation2 + $0x38] sm:$0xff]
        %v747 = vld [vmem:[#allocation2 + $0x48] sm:$0xff]
        %v748 = vld [vmem:[#allocation2 + $0x50] sm:$0xff]
        %v749 = vld [vmem:[#allocation2 + $0x60] sm:$0xff]
        %v750 = vld [vmem:[#allocation2 + $0x68] sm:$0xff]
        %v751 = vld [vmem:[#allocation2 + $0x78] sm:$0xff]
        %v752 = vld [vmem:[#allocation2 + $0x80] sm:$0xff]
        %v753 = vld [vmem:[#allocation2 + $0x90] sm:$0xff]
        %v754 = vld [vmem:[#allocation2 + $0x98] sm:$0xff]
        %v755 = vld [vmem:[#allocation2 + $0xa8] sm:$0xff]
        %v756 = vld [vmem:[#allocation2 + $0xb0] sm:$0xff]
        %v757 = vld [vmem:[#allocation2 + $0xc0] sm:$0xff]
        %v758 = vld [vmem:[#allocation2 + $0xc8] sm:$0xff]
        %v759 = vld [vmem:[#allocation2 + $0xd8] sm:$0xff]
        %v760 = vld [vmem:[#allocation2 + $0xe0] sm:$0xff]
        %v761 = vld [vmem:[#allocation2 + $0xf0] sm:$0xff]
        %v762 = vld [vmem:[#allocation2 + $0xf8] sm:$0xff]
        %v763 = vld [vmem:[#allocation2 + $0x108] sm:$0xff]
        %v764 = vld [vmem:[#allocation2 + $0x110] sm:$0xff]
        %v765 = vld [vmem:[#allocation2 + $0x120] sm:$0xff]
        %v766 = vld [vmem:[#allocation2 + $0x128] sm:$0xff]
        %v767 = vld [vmem:[#allocation2 + $0x138] sm:$0xff]
        %v768 = vld [vmem:[#allocation2 + $0x140] sm:$0xff]
        %v769 = vld [vmem:[#allocation2 + $0x150] sm:$0xff]
        %v770 = vld [vmem:[#allocation2 + $0x158] sm:$0xff]
        %v771 = vld [vmem:[#allocation2 + $0x168] sm:$0xff]
        %v772 = vld [vmem:[#allocation2 + $0x170] sm:$0xff]
        %v773 = vpack.c.bf16 %v742, %v741
        %v774 = vpack.c.bf16 %v744, %v743
        %v775 = vpack.c.bf16 %v746, %v745
        %v776 = vpack.c.bf16 %v748, %v747
        %v777 = vpack.c.bf16 %v750, %v749
        %v778 = vpack.c.bf16 %v752, %v751
        %v779 = vpack.c.bf16 %v754, %v753
        %v780 = vpack.c.bf16 %v756, %v755
        %v781 = vpack.c.bf16 %v758, %v757
        %v782 = vpack.c.bf16 %v760, %v759
        %v783 = vpack.c.bf16 %v762, %v761
        %v784 = vpack.c.bf16 %v764, %v763
        %v785 = vpack.c.bf16 %v766, %v765
        %v786 = vpack.c.bf16 %v768, %v767
        %v787 = vpack.c.bf16 %v770, %v769
        %v788 = vpack.c.bf16 %v772, %v771
        %789 = vst [vmem:[#allocation3] sm:$0xff] %v773
        %790 = vst [vmem:[#allocation3 + $0x48] sm:$0xff] %v774
        %791 = vst [vmem:[#allocation3 + $0x90] sm:$0xff] %v775
        %792 = vst [vmem:[#allocation3 + $0xd8] sm:$0xff] %v776
        %793 = vst [vmem:[#allocation3 + $0x120] sm:$0xff] %v777
        %794 = vst [vmem:[#allocation3 + $0x168] sm:$0xff] %v778
        %795 = vst [vmem:[#allocation3 + $0x1b0] sm:$0xff] %v779
        %796 = vst [vmem:[#allocation3 + $0x1f8] sm:$0xff] %v780
        %797 = vst [vmem:[#allocation3 + $0x240] sm:$0xff] %v781
        %798 = vst [vmem:[#allocation3 + $0x288] sm:$0xff] %v782
        %799 = vst [vmem:[#allocation3 + $0x2d0] sm:$0xff] %v783
        %800 = vst [vmem:[#allocation3 + $0x318] sm:$0xff] %v784
        %801 = vst [vmem:[#allocation3 + $0x360] sm:$0xff] %v785
        %802 = vst [vmem:[#allocation3 + $0x3a8] sm:$0xff] %v786
        %803 = vst [vmem:[#allocation3 + $0x3f0] sm:$0xff] %v787
        %804 = vst [vmem:[#allocation3 + $0x438] sm:$0xff] %v788
        %v805 = vld [vmem:[#allocation2 + $0x1] sm:$0xff]
        %v806 = vld [vmem:[#allocation2 + $0x9] sm:$0xff]
        %v807 = vld [vmem:[#allocation2 + $0x19] sm:$0xff]
        %v808 = vld [vmem:[#allocation2 + $0x21] sm:$0xff]
        %v809 = vld [vmem:[#allocation2 + $0x31] sm:$0xff]
        %v810 = vld [vmem:[#allocation2 + $0x39] sm:$0xff]
        %v811 = vld [vmem:[#allocation2 + $0x49] sm:$0xff]
        %v812 = vld [vmem:[#allocation2 + $0x51] sm:$0xff]
        %v813 = vld [vmem:[#allocation2 + $0x61] sm:$0xff]
        %v814 = vld [vmem:[#allocation2 + $0x69] sm:$0xff]
        %v815 = vld [vmem:[#allocation2 + $0x79] sm:$0xff]
        %v816 = vld [vmem:[#allocation2 + $0x81] sm:$0xff]
        %v817 = vld [vmem:[#allocation2 + $0x91] sm:$0xff]
        %v818 = vld [vmem:[#allocation2 + $0x99] sm:$0xff]
        %v819 = vld [vmem:[#allocation2 + $0xa9] sm:$0xff]
        %v820 = vld [vmem:[#allocation2 + $0xb1] sm:$0xff]
        %v821 = vld [vmem:[#allocation2 + $0xc1] sm:$0xff]
        %v822 = vld [vmem:[#allocation2 + $0xc9] sm:$0xff]
        %v823 = vld [vmem:[#allocation2 + $0xd9] sm:$0xff]
        %v824 = vld [vmem:[#allocation2 + $0xe1] sm:$0xff]
        %v825 = vld [vmem:[#allocation2 + $0xf1] sm:$0xff]
        %v826 = vld [vmem:[#allocation2 + $0xf9] sm:$0xff]
        %v827 = vld [vmem:[#allocation2 + $0x109] sm:$0xff]
        %v828 = vld [vmem:[#allocation2 + $0x111] sm:$0xff]
        %v829 = vld [vmem:[#allocation2 + $0x121] sm:$0xff]
        %v830 = vld [vmem:[#allocation2 + $0x129] sm:$0xff]
        %v831 = vld [vmem:[#allocation2 + $0x139] sm:$0xff]
        %v832 = vld [vmem:[#allocation2 + $0x141] sm:$0xff]
        %v833 = vld [vmem:[#allocation2 + $0x151] sm:$0xff]
        %v834 = vld [vmem:[#allocation2 + $0x159] sm:$0xff]
        %v835 = vld [vmem:[#allocation2 + $0x169] sm:$0xff]
        %v836 = vld [vmem:[#allocation2 + $0x171] sm:$0xff]
        %v837 = vpack.c.bf16 %v806, %v805
        %v838 = vpack.c.bf16 %v808, %v807
        %v839 = vpack.c.bf16 %v810, %v809
        %v840 = vpack.c.bf16 %v812, %v811
        %v841 = vpack.c.bf16 %v814, %v813
        %v842 = vpack.c.bf16 %v816, %v815
        %v843 = vpack.c.bf16 %v818, %v817
        %v844 = vpack.c.bf16 %v820, %v819
        %v845 = vpack.c.bf16 %v822, %v821
        %v846 = vpack.c.bf16 %v824, %v823
        %v847 = vpack.c.bf16 %v826, %v825
        %v848 = vpack.c.bf16 %v828, %v827
        %v849 = vpack.c.bf16 %v830, %v829
        %v850 = vpack.c.bf16 %v832, %v831
        %v851 = vpack.c.bf16 %v834, %v833
        %v852 = vpack.c.bf16 %v836, %v835
        %853 = vst [vmem:[#allocation3 + $0x8] sm:$0xff] %v837
        %854 = vst [vmem:[#allocation3 + $0x50] sm:$0xff] %v838
        %855 = vst [vmem:[#allocation3 + $0x98] sm:$0xff] %v839
        %856 = vst [vmem:[#allocation3 + $0xe0] sm:$0xff] %v840
        %857 = vst [vmem:[#allocation3 + $0x128] sm:$0xff] %v841
        %858 = vst [vmem:[#allocation3 + $0x170] sm:$0xff] %v842
        %859 = vst [vmem:[#allocation3 + $0x1b8] sm:$0xff] %v843
        %860 = vst [vmem:[#allocation3 + $0x200] sm:$0xff] %v844
        %861 = vst [vmem:[#allocation3 + $0x248] sm:$0xff] %v845
        %862 = vst [vmem:[#allocation3 + $0x290] sm:$0xff] %v846
        %863 = vst [vmem:[#allocation3 + $0x2d8] sm:$0xff] %v847
        %864 = vst [vmem:[#allocation3 + $0x320] sm:$0xff] %v848
        %865 = vst [vmem:[#allocation3 + $0x368] sm:$0xff] %v849
        %866 = vst [vmem:[#allocation3 + $0x3b0] sm:$0xff] %v850
        %867 = vst [vmem:[#allocation3 + $0x3f8] sm:$0xff] %v851
        %868 = vst [vmem:[#allocation3 + $0x440] sm:$0xff] %v852
        %v869 = vld [vmem:[#allocation2 + $0x2] sm:$0xff]
        %v870 = vld [vmem:[#allocation2 + $0xa] sm:$0xff]
        %v871 = vld [vmem:[#allocation2 + $0x1a] sm:$0xff]
        %v872 = vld [vmem:[#allocation2 + $0x22] sm:$0xff]
        %v873 = vld [vmem:[#allocation2 + $0x32] sm:$0xff]
        %v874 = vld [vmem:[#allocation2 + $0x3a] sm:$0xff]
        %v875 = vld [vmem:[#allocation2 + $0x4a] sm:$0xff]
        %v876 = vld [vmem:[#allocation2 + $0x52] sm:$0xff]
        %v877 = vld [vmem:[#allocation2 + $0x62] sm:$0xff]
        %v878 = vld [vmem:[#allocation2 + $0x6a] sm:$0xff]
        %v879 = vld [vmem:[#allocation2 + $0x7a] sm:$0xff]
        %v880 = vld [vmem:[#allocation2 + $0x82] sm:$0xff]
        %v881 = vld [vmem:[#allocation2 + $0x92] sm:$0xff]
        %v882 = vld [vmem:[#allocation2 + $0x9a] sm:$0xff]
        %v883 = vld [vmem:[#allocation2 + $0xaa] sm:$0xff]
        %v884 = vld [vmem:[#allocation2 + $0xb2] sm:$0xff]
        %v885 = vld [vmem:[#allocation2 + $0xc2] sm:$0xff]
        %v886 = vld [vmem:[#allocation2 + $0xca] sm:$0xff]
        %v887 = vld [vmem:[#allocation2 + $0xda] sm:$0xff]
        %v888 = vld [vmem:[#allocation2 + $0xe2] sm:$0xff]
        %v889 = vld [vmem:[#allocation2 + $0xf2] sm:$0xff]
        %v890 = vld [vmem:[#allocation2 + $0xfa] sm:$0xff]
        %v891 = vld [vmem:[#allocation2 + $0x10a] sm:$0xff]
        %v892 = vld [vmem:[#allocation2 + $0x112] sm:$0xff]
        %v893 = vld [vmem:[#allocation2 + $0x122] sm:$0xff]
        %v894 = vld [vmem:[#allocation2 + $0x12a] sm:$0xff]
        %v895 = vld [vmem:[#allocation2 + $0x13a] sm:$0xff]
        %v896 = vld [vmem:[#allocation2 + $0x142] sm:$0xff]
        %v897 = vld [vmem:[#allocation2 + $0x152] sm:$0xff]
        %v898 = vld [vmem:[#allocation2 + $0x15a] sm:$0xff]
        %v899 = vld [vmem:[#allocation2 + $0x16a] sm:$0xff]
        %v900 = vld [vmem:[#allocation2 + $0x172] sm:$0xff]
        %v901 = vpack.c.bf16 %v870, %v869
        %v902 = vpack.c.bf16 %v872, %v871
        %v903 = vpack.c.bf16 %v874, %v873
        %v904 = vpack.c.bf16 %v876, %v875
        %v905 = vpack.c.bf16 %v878, %v877
        %v906 = vpack.c.bf16 %v880, %v879
        %v907 = vpack.c.bf16 %v882, %v881
        %v908 = vpack.c.bf16 %v884, %v883
        %v909 = vpack.c.bf16 %v886, %v885
        %v910 = vpack.c.bf16 %v888, %v887
        %v911 = vpack.c.bf16 %v890, %v889
        %v912 = vpack.c.bf16 %v892, %v891
        %v913 = vpack.c.bf16 %v894, %v893
        %v914 = vpack.c.bf16 %v896, %v895
        %v915 = vpack.c.bf16 %v898, %v897
        %v916 = vpack.c.bf16 %v900, %v899
        %917 = vst [vmem:[#allocation3 + $0x10] sm:$0xff] %v901
        %918 = vst [vmem:[#allocation3 + $0x58] sm:$0xff] %v902
        %919 = vst [vmem:[#allocation3 + $0xa0] sm:$0xff] %v903
        %920 = vst [vmem:[#allocation3 + $0xe8] sm:$0xff] %v904
        %921 = vst [vmem:[#allocation3 + $0x130] sm:$0xff] %v905
        %922 = vst [vmem:[#allocation3 + $0x178] sm:$0xff] %v906
        %923 = vst [vmem:[#allocation3 + $0x1c0] sm:$0xff] %v907
        %924 = vst [vmem:[#allocation3 + $0x208] sm:$0xff] %v908
        %925 = vst [vmem:[#allocation3 + $0x250] sm:$0xff] %v909
        %926 = vst [vmem:[#allocation3 + $0x298] sm:$0xff] %v910
        %927 = vst [vmem:[#allocation3 + $0x2e0] sm:$0xff] %v911
        %928 = vst [vmem:[#allocation3 + $0x328] sm:$0xff] %v912
        %929 = vst [vmem:[#allocation3 + $0x370] sm:$0xff] %v913
        %930 = vst [vmem:[#allocation3 + $0x3b8] sm:$0xff] %v914
        %931 = vst [vmem:[#allocation3 + $0x400] sm:$0xff] %v915
        %932 = vst [vmem:[#allocation3 + $0x448] sm:$0xff] %v916
        %v933 = vld [vmem:[%s708] sm:$0xff]
        %v934 = vld [vmem:[%s708 + $0x8] sm:$0xff]
        %v935 = vld [vmem:[%s708 + $0x18] sm:$0xff]
        %v936 = vld [vmem:[%s708 + $0x20] sm:$0xff]
        %v937 = vld [vmem:[%s708 + $0x30] sm:$0xff]
        %v938 = vld [vmem:[%s708 + $0x38] sm:$0xff]
        %v939 = vld [vmem:[%s708 + $0x48] sm:$0xff]
        %v940 = vld [vmem:[%s708 + $0x50] sm:$0xff]
        %v941 = vld [vmem:[%s708 + $0x60] sm:$0xff]
        %v942 = vld [vmem:[%s708 + $0x68] sm:$0xff]
        %v943 = vld [vmem:[%s708 + $0x78] sm:$0xff]
        %v944 = vld [vmem:[%s708 + $0x80] sm:$0xff]
        %v945 = vld [vmem:[%s708 + $0x90] sm:$0xff]
        %v946 = vld [vmem:[%s708 + $0x98] sm:$0xff]
        %v947 = vld [vmem:[%s708 + $0xa8] sm:$0xff]
        %v948 = vld [vmem:[%s708 + $0xb0] sm:$0xff]
        %v949 = vld [vmem:[%s708 + $0xc0] sm:$0xff]
        %v950 = vld [vmem:[%s708 + $0xc8] sm:$0xff]
        %v951 = vld [vmem:[%s708 + $0xd8] sm:$0xff]
        %v952 = vld [vmem:[%s708 + $0xe0] sm:$0xff]
        %v953 = vld [vmem:[%s708 + $0xf0] sm:$0xff]
        %v954 = vld [vmem:[%s708 + $0xf8] sm:$0xff]
        %v955 = vld [vmem:[%s708 + $0x108] sm:$0xff]
        %v956 = vld [vmem:[%s708 + $0x110] sm:$0xff]
        %v957 = vld [vmem:[%s708 + $0x120] sm:$0xff]
        %v958 = vld [vmem:[%s708 + $0x128] sm:$0xff]
        %v959 = vld [vmem:[%s708 + $0x138] sm:$0xff]
        %v960 = vld [vmem:[%s708 + $0x140] sm:$0xff]
        %v961 = vld [vmem:[%s708 + $0x150] sm:$0xff]
        %v962 = vld [vmem:[%s708 + $0x158] sm:$0xff]
        %v963 = vld [vmem:[%s708 + $0x168] sm:$0xff]
        %v964 = vld [vmem:[%s708 + $0x170] sm:$0xff]
        %v965 = vpack.c.bf16 %v934, %v933
        %v966 = vpack.c.bf16 %v936, %v935
        %v967 = vpack.c.bf16 %v938, %v937
        %v968 = vpack.c.bf16 %v940, %v939
        %v969 = vpack.c.bf16 %v942, %v941
        %v970 = vpack.c.bf16 %v944, %v943
        %v971 = vpack.c.bf16 %v946, %v945
        %v972 = vpack.c.bf16 %v948, %v947
        %v973 = vpack.c.bf16 %v950, %v949
        %v974 = vpack.c.bf16 %v952, %v951
        %v975 = vpack.c.bf16 %v954, %v953
        %v976 = vpack.c.bf16 %v956, %v955
        %v977 = vpack.c.bf16 %v958, %v957
        %v978 = vpack.c.bf16 %v960, %v959
        %v979 = vpack.c.bf16 %v962, %v961
        %v980 = vpack.c.bf16 %v964, %v963
        %981 = vst [vmem:[#allocation3 + $0x18] sm:$0xff] %v965
        %982 = vst [vmem:[#allocation3 + $0x60] sm:$0xff] %v966
        %983 = vst [vmem:[#allocation3 + $0xa8] sm:$0xff] %v967
        %984 = vst [vmem:[#allocation3 + $0xf0] sm:$0xff] %v968
        %985 = vst [vmem:[#allocation3 + $0x138] sm:$0xff] %v969
        %986 = vst [vmem:[#allocation3 + $0x180] sm:$0xff] %v970
        %987 = vst [vmem:[#allocation3 + $0x1c8] sm:$0xff] %v971
        %988 = vst [vmem:[#allocation3 + $0x210] sm:$0xff] %v972
        %989 = vst [vmem:[#allocation3 + $0x258] sm:$0xff] %v973
        %990 = vst [vmem:[#allocation3 + $0x2a0] sm:$0xff] %v974
        %991 = vst [vmem:[#allocation3 + $0x2e8] sm:$0xff] %v975
        %992 = vst [vmem:[#allocation3 + $0x330] sm:$0xff] %v976
        %993 = vst [vmem:[#allocation3 + $0x378] sm:$0xff] %v977
        %994 = vst [vmem:[#allocation3 + $0x3c0] sm:$0xff] %v978
        %995 = vst [vmem:[#allocation3 + $0x408] sm:$0xff] %v979
        %996 = vst [vmem:[#allocation3 + $0x450] sm:$0xff] %v980
        %v997 = vld [vmem:[%s708 + $0x1] sm:$0xff]
        %v998 = vld [vmem:[%s708 + $0x9] sm:$0xff]
        %v999 = vld [vmem:[%s708 + $0x19] sm:$0xff]
        %v1000 = vld [vmem:[%s708 + $0x21] sm:$0xff]
        %v1001 = vld [vmem:[%s708 + $0x31] sm:$0xff]
        %v1002 = vld [vmem:[%s708 + $0x39] sm:$0xff]
        %v1003 = vld [vmem:[%s708 + $0x49] sm:$0xff]
        %v1004 = vld [vmem:[%s708 + $0x51] sm:$0xff]
        %v1005 = vld [vmem:[%s708 + $0x61] sm:$0xff]
        %v1006 = vld [vmem:[%s708 + $0x69] sm:$0xff]
        %v1007 = vld [vmem:[%s708 + $0x79] sm:$0xff]
        %v1008 = vld [vmem:[%s708 + $0x81] sm:$0xff]
        %v1009 = vld [vmem:[%s708 + $0x91] sm:$0xff]
        %v1010 = vld [vmem:[%s708 + $0x99] sm:$0xff]
        %v1011 = vld [vmem:[%s708 + $0xa9] sm:$0xff]
        %v1012 = vld [vmem:[%s708 + $0xb1] sm:$0xff]
        %v1013 = vld [vmem:[%s708 + $0xc1] sm:$0xff]
        %v1014 = vld [vmem:[%s708 + $0xc9] sm:$0xff]
        %v1015 = vld [vmem:[%s708 + $0xd9] sm:$0xff]
        %v1016 = vld [vmem:[%s708 + $0xe1] sm:$0xff]
        %v1017 = vld [vmem:[%s708 + $0xf1] sm:$0xff]
        %v1018 = vld [vmem:[%s708 + $0xf9] sm:$0xff]
        %v1019 = vld [vmem:[%s708 + $0x109] sm:$0xff]
        %v1020 = vld [vmem:[%s708 + $0x111] sm:$0xff]
        %v1021 = vld [vmem:[%s708 + $0x121] sm:$0xff]
        %v1022 = vld [vmem:[%s708 + $0x129] sm:$0xff]
        %v1023 = vld [vmem:[%s708 + $0x139] sm:$0xff]
        %v1024 = vld [vmem:[%s708 + $0x141] sm:$0xff]
        %v1025 = vld [vmem:[%s708 + $0x151] sm:$0xff]
        %v1026 = vld [vmem:[%s708 + $0x159] sm:$0xff]
        %v1027 = vld [vmem:[%s708 + $0x169] sm:$0xff]
        %v1028 = vld [vmem:[%s708 + $0x171] sm:$0xff]
        %v1029 = vpack.c.bf16 %v998, %v997
        %v1030 = vpack.c.bf16 %v1000, %v999
        %v1031 = vpack.c.bf16 %v1002, %v1001
        %v1032 = vpack.c.bf16 %v1004, %v1003
        %v1033 = vpack.c.bf16 %v1006, %v1005
        %v1034 = vpack.c.bf16 %v1008, %v1007
        %v1035 = vpack.c.bf16 %v1010, %v1009
        %v1036 = vpack.c.bf16 %v1012, %v1011
        %v1037 = vpack.c.bf16 %v1014, %v1013
        %v1038 = vpack.c.bf16 %v1016, %v1015
        %v1039 = vpack.c.bf16 %v1018, %v1017
        %v1040 = vpack.c.bf16 %v1020, %v1019
        %v1041 = vpack.c.bf16 %v1022, %v1021
        %v1042 = vpack.c.bf16 %v1024, %v1023
        %v1043 = vpack.c.bf16 %v1026, %v1025
        %v1044 = vpack.c.bf16 %v1028, %v1027
        %1045 = vst [vmem:[#allocation3 + $0x20] sm:$0xff] %v1029
        %1046 = vst [vmem:[#allocation3 + $0x68] sm:$0xff] %v1030
        %1047 = vst [vmem:[#allocation3 + $0xb0] sm:$0xff] %v1031
        %1048 = vst [vmem:[#allocation3 + $0xf8] sm:$0xff] %v1032
        %1049 = vst [vmem:[#allocation3 + $0x140] sm:$0xff] %v1033
        %1050 = vst [vmem:[#allocation3 + $0x188] sm:$0xff] %v1034
        %1051 = vst [vmem:[#allocation3 + $0x1d0] sm:$0xff] %v1035
        %1052 = vst [vmem:[#allocation3 + $0x218] sm:$0xff] %v1036
        %1053 = vst [vmem:[#allocation3 + $0x260] sm:$0xff] %v1037
        %1054 = vst [vmem:[#allocation3 + $0x2a8] sm:$0xff] %v1038
        %1055 = vst [vmem:[#allocation3 + $0x2f0] sm:$0xff] %v1039
        %1056 = vst [vmem:[#allocation3 + $0x338] sm:$0xff] %v1040
        %1057 = vst [vmem:[#allocation3 + $0x380] sm:$0xff] %v1041
        %1058 = vst [vmem:[#allocation3 + $0x3c8] sm:$0xff] %v1042
        %1059 = vst [vmem:[#allocation3 + $0x410] sm:$0xff] %v1043
        %1060 = vst [vmem:[#allocation3 + $0x458] sm:$0xff] %v1044
        %v1061 = vld [vmem:[%s708 + $0x2] sm:$0xff]
        %v1062 = vld [vmem:[%s708 + $0xa] sm:$0xff]
        %v1063 = vld [vmem:[%s708 + $0x1a] sm:$0xff]
        %v1064 = vld [vmem:[%s708 + $0x22] sm:$0xff]
        %v1065 = vld [vmem:[%s708 + $0x32] sm:$0xff]
        %v1066 = vld [vmem:[%s708 + $0x3a] sm:$0xff]
        %v1067 = vld [vmem:[%s708 + $0x4a] sm:$0xff]
        %v1068 = vld [vmem:[%s708 + $0x52] sm:$0xff]
        %v1069 = vld [vmem:[%s708 + $0x62] sm:$0xff]
        %v1070 = vld [vmem:[%s708 + $0x6a] sm:$0xff]
        %v1071 = vld [vmem:[%s708 + $0x7a] sm:$0xff]
        %v1072 = vld [vmem:[%s708 + $0x82] sm:$0xff]
        %v1073 = vld [vmem:[%s708 + $0x92] sm:$0xff]
        %v1074 = vld [vmem:[%s708 + $0x9a] sm:$0xff]
        %v1075 = vld [vmem:[%s708 + $0xaa] sm:$0xff]
        %v1076 = vld [vmem:[%s708 + $0xb2] sm:$0xff]
        %v1077 = vld [vmem:[%s708 + $0xc2] sm:$0xff]
        %v1078 = vld [vmem:[%s708 + $0xca] sm:$0xff]
        %v1079 = vld [vmem:[%s708 + $0xda] sm:$0xff]
        %v1080 = vld [vmem:[%s708 + $0xe2] sm:$0xff]
        %v1081 = vld [vmem:[%s708 + $0xf2] sm:$0xff]
        %v1082 = vld [vmem:[%s708 + $0xfa] sm:$0xff]
        %v1083 = vld [vmem:[%s708 + $0x10a] sm:$0xff]
        %v1084 = vld [vmem:[%s708 + $0x112] sm:$0xff]
        %v1085 = vld [vmem:[%s708 + $0x122] sm:$0xff]
        %v1086 = vld [vmem:[%s708 + $0x12a] sm:$0xff]
        %v1087 = vld [vmem:[%s708 + $0x13a] sm:$0xff]
        %v1088 = vld [vmem:[%s708 + $0x142] sm:$0xff]
        %v1089 = vld [vmem:[%s708 + $0x152] sm:$0xff]
        %v1090 = vld [vmem:[%s708 + $0x15a] sm:$0xff]
        %v1091 = vld [vmem:[%s708 + $0x16a] sm:$0xff]
        %v1092 = vld [vmem:[%s708 + $0x172] sm:$0xff]
        %v1093 = vpack.c.bf16 %v1062, %v1061
        %v1094 = vpack.c.bf16 %v1064, %v1063
        %v1095 = vpack.c.bf16 %v1066, %v1065
        %v1096 = vpack.c.bf16 %v1068, %v1067
        %v1097 = vpack.c.bf16 %v1070, %v1069
        %v1098 = vpack.c.bf16 %v1072, %v1071
        %v1099 = vpack.c.bf16 %v1074, %v1073
        %v1100 = vpack.c.bf16 %v1076, %v1075
        %v1101 = vpack.c.bf16 %v1078, %v1077
        %v1102 = vpack.c.bf16 %v1080, %v1079
        %v1103 = vpack.c.bf16 %v1082, %v1081
        %v1104 = vpack.c.bf16 %v1084, %v1083
        %v1105 = vpack.c.bf16 %v1086, %v1085
        %v1106 = vpack.c.bf16 %v1088, %v1087
        %v1107 = vpack.c.bf16 %v1090, %v1089
        %v1108 = vpack.c.bf16 %v1092, %v1091
        %1109 = vst [vmem:[#allocation3 + $0x28] sm:$0xff] %v1093
        %1110 = vst [vmem:[#allocation3 + $0x70] sm:$0xff] %v1094
        %1111 = vst [vmem:[#allocation3 + $0xb8] sm:$0xff] %v1095
        %1112 = vst [vmem:[#allocation3 + $0x100] sm:$0xff] %v1096
        %1113 = vst [vmem:[#allocation3 + $0x148] sm:$0xff] %v1097
        %1114 = vst [vmem:[#allocation3 + $0x190] sm:$0xff] %v1098
        %1115 = vst [vmem:[#allocation3 + $0x1d8] sm:$0xff] %v1099
        %1116 = vst [vmem:[#allocation3 + $0x220] sm:$0xff] %v1100
        %1117 = vst [vmem:[#allocation3 + $0x268] sm:$0xff] %v1101
        %1118 = vst [vmem:[#allocation3 + $0x2b0] sm:$0xff] %v1102
        %1119 = vst [vmem:[#allocation3 + $0x2f8] sm:$0xff] %v1103
        %1120 = vst [vmem:[#allocation3 + $0x340] sm:$0xff] %v1104
        %1121 = vst [vmem:[#allocation3 + $0x388] sm:$0xff] %v1105
        %1122 = vst [vmem:[#allocation3 + $0x3d0] sm:$0xff] %v1106
        %1123 = vst [vmem:[#allocation3 + $0x418] sm:$0xff] %v1107
        %1124 = vst [vmem:[#allocation3 + $0x460] sm:$0xff] %v1108
        %s1125 = scalar_lea.vmem [#allocation2], 48
        %v1126 = vld [vmem:[%s1125] sm:$0xff]
        %v1127 = vld [vmem:[%s1125 + $0x8] sm:$0xff]
        %v1128 = vld [vmem:[%s1125 + $0x18] sm:$0xff]
        %v1129 = vld [vmem:[%s1125 + $0x20] sm:$0xff]
        %v1130 = vld [vmem:[%s1125 + $0x30] sm:$0xff]
        %v1131 = vld [vmem:[%s1125 + $0x38] sm:$0xff]
        %v1132 = vld [vmem:[%s1125 + $0x48] sm:$0xff]
        %v1133 = vld [vmem:[%s1125 + $0x50] sm:$0xff]
        %v1134 = vld [vmem:[%s1125 + $0x60] sm:$0xff]
        %v1135 = vld [vmem:[%s1125 + $0x68] sm:$0xff]
        %v1136 = vld [vmem:[%s1125 + $0x78] sm:$0xff]
        %v1137 = vld [vmem:[%s1125 + $0x80] sm:$0xff]
        %v1138 = vld [vmem:[%s1125 + $0x90] sm:$0xff]
        %v1139 = vld [vmem:[%s1125 + $0x98] sm:$0xff]
        %v1140 = vld [vmem:[%s1125 + $0xa8] sm:$0xff]
        %v1141 = vld [vmem:[%s1125 + $0xb0] sm:$0xff]
        %v1142 = vld [vmem:[%s1125 + $0xc0] sm:$0xff]
        %v1143 = vld [vmem:[%s1125 + $0xc8] sm:$0xff]
        %v1144 = vld [vmem:[%s1125 + $0xd8] sm:$0xff]
        %v1145 = vld [vmem:[%s1125 + $0xe0] sm:$0xff]
        %v1146 = vld [vmem:[%s1125 + $0xf0] sm:$0xff]
        %v1147 = vld [vmem:[%s1125 + $0xf8] sm:$0xff]
        %v1148 = vld [vmem:[%s1125 + $0x108] sm:$0xff]
        %v1149 = vld [vmem:[%s1125 + $0x110] sm:$0xff]
        %v1150 = vld [vmem:[%s1125 + $0x120] sm:$0xff]
        %v1151 = vld [vmem:[%s1125 + $0x128] sm:$0xff]
        %v1152 = vld [vmem:[%s1125 + $0x138] sm:$0xff]
        %v1153 = vld [vmem:[%s1125 + $0x140] sm:$0xff]
        %v1154 = vld [vmem:[%s1125 + $0x150] sm:$0xff]
        %v1155 = vld [vmem:[%s1125 + $0x158] sm:$0xff]
        %v1156 = vld [vmem:[%s1125 + $0x168] sm:$0xff]
        %v1157 = vld [vmem:[%s1125 + $0x170] sm:$0xff]
        %v1158 = vpack.c.bf16 %v1127, %v1126
        %v1159 = vpack.c.bf16 %v1129, %v1128
        %v1160 = vpack.c.bf16 %v1131, %v1130
        %v1161 = vpack.c.bf16 %v1133, %v1132
        %v1162 = vpack.c.bf16 %v1135, %v1134
        %v1163 = vpack.c.bf16 %v1137, %v1136
        %v1164 = vpack.c.bf16 %v1139, %v1138
        %v1165 = vpack.c.bf16 %v1141, %v1140
        %v1166 = vpack.c.bf16 %v1143, %v1142
        %v1167 = vpack.c.bf16 %v1145, %v1144
        %v1168 = vpack.c.bf16 %v1147, %v1146
        %v1169 = vpack.c.bf16 %v1149, %v1148
        %v1170 = vpack.c.bf16 %v1151, %v1150
        %v1171 = vpack.c.bf16 %v1153, %v1152
        %v1172 = vpack.c.bf16 %v1155, %v1154
        %v1173 = vpack.c.bf16 %v1157, %v1156
        %1174 = vst [vmem:[#allocation3 + $0x30] sm:$0xff] %v1158
        %1175 = vst [vmem:[#allocation3 + $0x78] sm:$0xff] %v1159
        %1176 = vst [vmem:[#allocation3 + $0xc0] sm:$0xff] %v1160
        %1177 = vst [vmem:[#allocation3 + $0x108] sm:$0xff] %v1161
        %1178 = vst [vmem:[#allocation3 + $0x150] sm:$0xff] %v1162
        %1179 = vst [vmem:[#allocation3 + $0x198] sm:$0xff] %v1163
        %1180 = vst [vmem:[#allocation3 + $0x1e0] sm:$0xff] %v1164
        %1181 = vst [vmem:[#allocation3 + $0x228] sm:$0xff] %v1165
        %1182 = vst [vmem:[#allocation3 + $0x270] sm:$0xff] %v1166
        %1183 = vst [vmem:[#allocation3 + $0x2b8] sm:$0xff] %v1167
        %1184 = vst [vmem:[#allocation3 + $0x300] sm:$0xff] %v1168
        %1185 = vst [vmem:[#allocation3 + $0x348] sm:$0xff] %v1169
        %1186 = vst [vmem:[#allocation3 + $0x390] sm:$0xff] %v1170
        %1187 = vst [vmem:[#allocation3 + $0x3d8] sm:$0xff] %v1171
        %1188 = vst [vmem:[#allocation3 + $0x420] sm:$0xff] %v1172
        %1189 = vst [vmem:[#allocation3 + $0x468] sm:$0xff] %v1173
        %v1190 = vld [vmem:[%s1125 + $0x1] sm:$0xff]
        %v1191 = vld [vmem:[%s1125 + $0x9] sm:$0xff]
        %v1192 = vld [vmem:[%s1125 + $0x19] sm:$0xff]
        %v1193 = vld [vmem:[%s1125 + $0x21] sm:$0xff]
        %v1194 = vld [vmem:[%s1125 + $0x31] sm:$0xff]
        %v1195 = vld [vmem:[%s1125 + $0x39] sm:$0xff]
        %v1196 = vld [vmem:[%s1125 + $0x49] sm:$0xff]
        %v1197 = vld [vmem:[%s1125 + $0x51] sm:$0xff]
        %v1198 = vld [vmem:[%s1125 + $0x61] sm:$0xff]
        %v1199 = vld [vmem:[%s1125 + $0x69] sm:$0xff]
        %v1200 = vld [vmem:[%s1125 + $0x79] sm:$0xff]
        %v1201 = vld [vmem:[%s1125 + $0x81] sm:$0xff]
        %v1202 = vld [vmem:[%s1125 + $0x91] sm:$0xff]
        %v1203 = vld [vmem:[%s1125 + $0x99] sm:$0xff]
        %v1204 = vld [vmem:[%s1125 + $0xa9] sm:$0xff]
        %v1205 = vld [vmem:[%s1125 + $0xb1] sm:$0xff]
        %v1206 = vld [vmem:[%s1125 + $0xc1] sm:$0xff]
        %v1207 = vld [vmem:[%s1125 + $0xc9] sm:$0xff]
        %v1208 = vld [vmem:[%s1125 + $0xd9] sm:$0xff]
        %v1209 = vld [vmem:[%s1125 + $0xe1] sm:$0xff]
        %v1210 = vld [vmem:[%s1125 + $0xf1] sm:$0xff]
        %v1211 = vld [vmem:[%s1125 + $0xf9] sm:$0xff]
        %v1212 = vld [vmem:[%s1125 + $0x109] sm:$0xff]
        %v1213 = vld [vmem:[%s1125 + $0x111] sm:$0xff]
        %v1214 = vld [vmem:[%s1125 + $0x121] sm:$0xff]
        %v1215 = vld [vmem:[%s1125 + $0x129] sm:$0xff]
        %v1216 = vld [vmem:[%s1125 + $0x139] sm:$0xff]
        %v1217 = vld [vmem:[%s1125 + $0x141] sm:$0xff]
        %v1218 = vld [vmem:[%s1125 + $0x151] sm:$0xff]
        %v1219 = vld [vmem:[%s1125 + $0x159] sm:$0xff]
        %v1220 = vld [vmem:[%s1125 + $0x169] sm:$0xff]
        %v1221 = vld [vmem:[%s1125 + $0x171] sm:$0xff]
        %v1222 = vpack.c.bf16 %v1191, %v1190
        %v1223 = vpack.c.bf16 %v1193, %v1192
        %v1224 = vpack.c.bf16 %v1195, %v1194
        %v1225 = vpack.c.bf16 %v1197, %v1196
        %v1226 = vpack.c.bf16 %v1199, %v1198
        %v1227 = vpack.c.bf16 %v1201, %v1200
        %v1228 = vpack.c.bf16 %v1203, %v1202
        %v1229 = vpack.c.bf16 %v1205, %v1204
        %v1230 = vpack.c.bf16 %v1207, %v1206
        %v1231 = vpack.c.bf16 %v1209, %v1208
        %v1232 = vpack.c.bf16 %v1211, %v1210
        %v1233 = vpack.c.bf16 %v1213, %v1212
        %v1234 = vpack.c.bf16 %v1215, %v1214
        %v1235 = vpack.c.bf16 %v1217, %v1216
        %v1236 = vpack.c.bf16 %v1219, %v1218
        %v1237 = vpack.c.bf16 %v1221, %v1220
        %1238 = vst [vmem:[#allocation3 + $0x38] sm:$0xff] %v1222
        %1239 = vst [vmem:[#allocation3 + $0x80] sm:$0xff] %v1223
        %1240 = vst [vmem:[#allocation3 + $0xc8] sm:$0xff] %v1224
        %1241 = vst [vmem:[#allocation3 + $0x110] sm:$0xff] %v1225
        %1242 = vst [vmem:[#allocation3 + $0x158] sm:$0xff] %v1226
        %1243 = vst [vmem:[#allocation3 + $0x1a0] sm:$0xff] %v1227
        %1244 = vst [vmem:[#allocation3 + $0x1e8] sm:$0xff] %v1228
        %1245 = vst [vmem:[#allocation3 + $0x230] sm:$0xff] %v1229
        %1246 = vst [vmem:[#allocation3 + $0x278] sm:$0xff] %v1230
        %1247 = vst [vmem:[#allocation3 + $0x2c0] sm:$0xff] %v1231
        %1248 = vst [vmem:[#allocation3 + $0x308] sm:$0xff] %v1232
        %1249 = vst [vmem:[#allocation3 + $0x350] sm:$0xff] %v1233
        %1250 = vst [vmem:[#allocation3 + $0x398] sm:$0xff] %v1234
        %1251 = vst [vmem:[#allocation3 + $0x3e0] sm:$0xff] %v1235
        %1252 = vst [vmem:[#allocation3 + $0x428] sm:$0xff] %v1236
        %1253 = vst [vmem:[#allocation3 + $0x470] sm:$0xff] %v1237
        %v1254 = vld [vmem:[%s1125 + $0x2] sm:$0xff]
        %v1255 = vld [vmem:[%s1125 + $0xa] sm:$0xff]
        %v1256 = vld [vmem:[%s1125 + $0x1a] sm:$0xff]
        %v1257 = vld [vmem:[%s1125 + $0x22] sm:$0xff]
        %v1258 = vld [vmem:[%s1125 + $0x32] sm:$0xff]
        %v1259 = vld [vmem:[%s1125 + $0x3a] sm:$0xff]
        %v1260 = vld [vmem:[%s1125 + $0x4a] sm:$0xff]
        %v1261 = vld [vmem:[%s1125 + $0x52] sm:$0xff]
        %v1262 = vld [vmem:[%s1125 + $0x62] sm:$0xff]
        %v1263 = vld [vmem:[%s1125 + $0x6a] sm:$0xff]
        %v1264 = vld [vmem:[%s1125 + $0x7a] sm:$0xff]
        %v1265 = vld [vmem:[%s1125 + $0x82] sm:$0xff]
        %v1266 = vld [vmem:[%s1125 + $0x92] sm:$0xff]
        %v1267 = vld [vmem:[%s1125 + $0x9a] sm:$0xff]
        %v1268 = vld [vmem:[%s1125 + $0xaa] sm:$0xff]
        %v1269 = vld [vmem:[%s1125 + $0xb2] sm:$0xff]
        %v1270 = vld [vmem:[%s1125 + $0xc2] sm:$0xff]
        %v1271 = vld [vmem:[%s1125 + $0xca] sm:$0xff]
        %v1272 = vld [vmem:[%s1125 + $0xda] sm:$0xff]
        %v1273 = vld [vmem:[%s1125 + $0xe2] sm:$0xff]
        %v1274 = vld [vmem:[%s1125 + $0xf2] sm:$0xff]
        %v1275 = vld [vmem:[%s1125 + $0xfa] sm:$0xff]
        %v1276 = vld [vmem:[%s1125 + $0x10a] sm:$0xff]
        %v1277 = vld [vmem:[%s1125 + $0x112] sm:$0xff]
        %v1278 = vld [vmem:[%s1125 + $0x122] sm:$0xff]
        %v1279 = vld [vmem:[%s1125 + $0x12a] sm:$0xff]
        %v1280 = vld [vmem:[%s1125 + $0x13a] sm:$0xff]
        %v1281 = vld [vmem:[%s1125 + $0x142] sm:$0xff]
        %v1282 = vld [vmem:[%s1125 + $0x152] sm:$0xff]
        %v1283 = vld [vmem:[%s1125 + $0x15a] sm:$0xff]
        %v1284 = vld [vmem:[%s1125 + $0x16a] sm:$0xff]
        %v1285 = vld [vmem:[%s1125 + $0x172] sm:$0xff]
        %v1286 = vpack.c.bf16 %v1255, %v1254
        %v1287 = vpack.c.bf16 %v1257, %v1256
        %v1288 = vpack.c.bf16 %v1259, %v1258
        %v1289 = vpack.c.bf16 %v1261, %v1260
        %v1290 = vpack.c.bf16 %v1263, %v1262
        %v1291 = vpack.c.bf16 %v1265, %v1264
        %v1292 = vpack.c.bf16 %v1267, %v1266
        %v1293 = vpack.c.bf16 %v1269, %v1268
        %v1294 = vpack.c.bf16 %v1271, %v1270
        %v1295 = vpack.c.bf16 %v1273, %v1272
        %v1296 = vpack.c.bf16 %v1275, %v1274
        %v1297 = vpack.c.bf16 %v1277, %v1276
        %v1298 = vpack.c.bf16 %v1279, %v1278
        %v1299 = vpack.c.bf16 %v1281, %v1280
        %v1300 = vpack.c.bf16 %v1283, %v1282
        %v1301 = vpack.c.bf16 %v1285, %v1284
        %1302 = vst [vmem:[#allocation3 + $0x40] sm:$0xff] %v1286
        %1303 = vst [vmem:[#allocation3 + $0x88] sm:$0xff] %v1287
        %1304 = vst [vmem:[#allocation3 + $0xd0] sm:$0xff] %v1288
        %1305 = vst [vmem:[#allocation3 + $0x118] sm:$0xff] %v1289
        %1306 = vst [vmem:[#allocation3 + $0x160] sm:$0xff] %v1290
        %1307 = vst [vmem:[#allocation3 + $0x1a8] sm:$0xff] %v1291
        %1308 = vst [vmem:[#allocation3 + $0x1f0] sm:$0xff] %v1292
        %1309 = vst [vmem:[#allocation3 + $0x238] sm:$0xff] %v1293
        %1310 = vst [vmem:[#allocation3 + $0x280] sm:$0xff] %v1294
        %1311 = vst [vmem:[#allocation3 + $0x2c8] sm:$0xff] %v1295
        %1312 = vst [vmem:[#allocation3 + $0x310] sm:$0xff] %v1296
        %1313 = vst [vmem:[#allocation3 + $0x358] sm:$0xff] %v1297
        %1314 = vst [vmem:[#allocation3 + $0x3a0] sm:$0xff] %v1298
        %1315 = vst [vmem:[#allocation3 + $0x3e8] sm:$0xff] %v1299
        %1316 = vst [vmem:[#allocation3 + $0x430] sm:$0xff] %v1300
        %1317 = vst [vmem:[#allocation3 + $0x478] sm:$0xff] %v1301
        %v1318 = vld [vmem:[#allocation3] sm:$0xff]
        %v1319 = vld [vmem:[#allocation3 + $0x8] sm:$0xff]
        %v1320 = vld [vmem:[#allocation3 + $0x10] sm:$0xff]
        %v1321 = vld [vmem:[#allocation3 + $0x18] sm:$0xff]
        %v1322 = vld [vmem:[#allocation3 + $0x20] sm:$0xff]
        %v1323 = vld [vmem:[#allocation3 + $0x28] sm:$0xff]
        %v1324 = vld [vmem:[#allocation3 + $0x30] sm:$0xff]
        %v1325 = vld [vmem:[#allocation3 + $0x38] sm:$0xff]
        %v1326 = vld [vmem:[#allocation3 + $0x40] sm:$0xff]
        %v1327 = vld [vmem:[#allocation3 + $0x48] sm:$0xff]
        %v1328 = vld [vmem:[#allocation3 + $0x50] sm:$0xff]
        %v1329 = vld [vmem:[#allocation3 + $0x58] sm:$0xff]
        %v1330 = vld [vmem:[#allocation3 + $0x60] sm:$0xff]
        %v1331 = vld [vmem:[#allocation3 + $0x68] sm:$0xff]
        %v1332 = vld [vmem:[#allocation3 + $0x70] sm:$0xff]
        %v1333 = vld [vmem:[#allocation3 + $0x78] sm:$0xff]
        %v1334 = vld [vmem:[#allocation3 + $0x80] sm:$0xff]
        %v1335 = vld [vmem:[#allocation3 + $0x88] sm:$0xff]
        %v1336 = vld [vmem:[#allocation3 + $0x90] sm:$0xff]
        %v1337 = vld [vmem:[#allocation3 + $0x98] sm:$0xff]
        %v1338 = vld [vmem:[#allocation3 + $0xa0] sm:$0xff]
        %v1339 = vld [vmem:[#allocation3 + $0xa8] sm:$0xff]
        %v1340 = vld [vmem:[#allocation3 + $0xb0] sm:$0xff]
        %v1341 = vld [vmem:[#allocation3 + $0xb8] sm:$0xff]
        %v1342 = vld [vmem:[#allocation3 + $0xc0] sm:$0xff]
        %v1343 = vld [vmem:[#allocation3 + $0xc8] sm:$0xff]
        %v1344 = vld [vmem:[#allocation3 + $0xd0] sm:$0xff]
        %v1345 = vld [vmem:[#allocation3 + $0xd8] sm:$0xff]
        %v1346 = vld [vmem:[#allocation3 + $0xe0] sm:$0xff]
        %v1347 = vld [vmem:[#allocation3 + $0xe8] sm:$0xff]
        %v1348 = vld [vmem:[#allocation3 + $0xf0] sm:$0xff]
        %v1349 = vld [vmem:[#allocation3 + $0xf8] sm:$0xff]
        %v1350 = vld [vmem:[#allocation3 + $0x100] sm:$0xff]
        %v1351 = vld [vmem:[#allocation3 + $0x108] sm:$0xff]
        %v1352 = vld [vmem:[#allocation3 + $0x110] sm:$0xff]
        %v1353 = vld [vmem:[#allocation3 + $0x118] sm:$0xff]
        %v1354 = vld [vmem:[#allocation3 + $0x120] sm:$0xff]
        %v1355 = vld [vmem:[#allocation3 + $0x128] sm:$0xff]
        %v1356 = vld [vmem:[#allocation3 + $0x130] sm:$0xff]
        %v1357 = vld [vmem:[#allocation3 + $0x138] sm:$0xff]
        %v1358 = vld [vmem:[#allocation3 + $0x140] sm:$0xff]
        %v1359 = vld [vmem:[#allocation3 + $0x148] sm:$0xff]
        %v1360 = vld [vmem:[#allocation3 + $0x150] sm:$0xff]
        %v1361 = vld [vmem:[#allocation3 + $0x158] sm:$0xff]
        %v1362 = vld [vmem:[#allocation3 + $0x160] sm:$0xff]
        %v1363 = vld [vmem:[#allocation3 + $0x168] sm:$0xff]
        %v1364 = vld [vmem:[#allocation3 + $0x170] sm:$0xff]
        %v1365 = vld [vmem:[#allocation3 + $0x178] sm:$0xff]
        %v1366 = vld [vmem:[#allocation3 + $0x180] sm:$0xff]
        %v1367 = vld [vmem:[#allocation3 + $0x188] sm:$0xff]
        %v1368 = vld [vmem:[#allocation3 + $0x190] sm:$0xff]
        %v1369 = vld [vmem:[#allocation3 + $0x198] sm:$0xff]
        %v1370 = vld [vmem:[#allocation3 + $0x1a0] sm:$0xff]
        %v1371 = vld [vmem:[#allocation3 + $0x1a8] sm:$0xff]
        %v1372 = vld [vmem:[#allocation3 + $0x1b0] sm:$0xff]
        %v1373 = vld [vmem:[#allocation3 + $0x1b8] sm:$0xff]
        %v1374 = vld [vmem:[#allocation3 + $0x1c0] sm:$0xff]
        %v1375 = vld [vmem:[#allocation3 + $0x1c8] sm:$0xff]
        %v1376 = vld [vmem:[#allocation3 + $0x1d0] sm:$0xff]
        %v1377 = vld [vmem:[#allocation3 + $0x1d8] sm:$0xff]
        %v1378 = vld [vmem:[#allocation3 + $0x1e0] sm:$0xff]
        %v1379 = vld [vmem:[#allocation3 + $0x1e8] sm:$0xff]
        %v1380 = vld [vmem:[#allocation3 + $0x1f0] sm:$0xff]
        %v1381 = vld [vmem:[#allocation3 + $0x1f8] sm:$0xff]
        %v1382 = vld [vmem:[#allocation3 + $0x200] sm:$0xff]
        %v1383 = vld [vmem:[#allocation3 + $0x208] sm:$0xff]
        %v1384 = vld [vmem:[#allocation3 + $0x210] sm:$0xff]
        %v1385 = vld [vmem:[#allocation3 + $0x218] sm:$0xff]
        %v1386 = vld [vmem:[#allocation3 + $0x220] sm:$0xff]
        %v1387 = vld [vmem:[#allocation3 + $0x228] sm:$0xff]
        %v1388 = vld [vmem:[#allocation3 + $0x230] sm:$0xff]
        %v1389 = vld [vmem:[#allocation3 + $0x238] sm:$0xff]
        %v1390 = vld [vmem:[#allocation3 + $0x240] sm:$0xff]
        %v1391 = vld [vmem:[#allocation3 + $0x248] sm:$0xff]
        %v1392 = vld [vmem:[#allocation3 + $0x250] sm:$0xff]
        %v1393 = vld [vmem:[#allocation3 + $0x258] sm:$0xff]
        %v1394 = vld [vmem:[#allocation3 + $0x260] sm:$0xff]
        %v1395 = vld [vmem:[#allocation3 + $0x268] sm:$0xff]
        %v1396 = vld [vmem:[#allocation3 + $0x270] sm:$0xff]
        %v1397 = vld [vmem:[#allocation3 + $0x278] sm:$0xff]
        %v1398 = vld [vmem:[#allocation3 + $0x280] sm:$0xff]
        %v1399 = vld [vmem:[#allocation3 + $0x288] sm:$0xff]
        %v1400 = vld [vmem:[#allocation3 + $0x290] sm:$0xff]
        %v1401 = vld [vmem:[#allocation3 + $0x298] sm:$0xff]
        %v1402 = vld [vmem:[#allocation3 + $0x2a0] sm:$0xff]
        %v1403 = vld [vmem:[#allocation3 + $0x2a8] sm:$0xff]
        %v1404 = vld [vmem:[#allocation3 + $0x2b0] sm:$0xff]
        %v1405 = vld [vmem:[#allocation3 + $0x2b8] sm:$0xff]
        %v1406 = vld [vmem:[#allocation3 + $0x2c0] sm:$0xff]
        %v1407 = vld [vmem:[#allocation3 + $0x2c8] sm:$0xff]
        %v1408 = vld [vmem:[#allocation3 + $0x2d0] sm:$0xff]
        %v1409 = vld [vmem:[#allocation3 + $0x2d8] sm:$0xff]
        %v1410 = vld [vmem:[#allocation3 + $0x2e0] sm:$0xff]
        %v1411 = vld [vmem:[#allocation3 + $0x2e8] sm:$0xff]
        %v1412 = vld [vmem:[#allocation3 + $0x2f0] sm:$0xff]
        %v1413 = vld [vmem:[#allocation3 + $0x2f8] sm:$0xff]
        %v1414 = vld [vmem:[#allocation3 + $0x300] sm:$0xff]
        %v1415 = vld [vmem:[#allocation3 + $0x308] sm:$0xff]
        %v1416 = vld [vmem:[#allocation3 + $0x310] sm:$0xff]
        %v1417 = vld [vmem:[#allocation3 + $0x318] sm:$0xff]
        %v1418 = vld [vmem:[#allocation3 + $0x320] sm:$0xff]
        %v1419 = vld [vmem:[#allocation3 + $0x328] sm:$0xff]
        %v1420 = vld [vmem:[#allocation3 + $0x330] sm:$0xff]
        %v1421 = vld [vmem:[#allocation3 + $0x338] sm:$0xff]
        %v1422 = vld [vmem:[#allocation3 + $0x340] sm:$0xff]
        %v1423 = vld [vmem:[#allocation3 + $0x348] sm:$0xff]
        %v1424 = vld [vmem:[#allocation3 + $0x350] sm:$0xff]
        %v1425 = vld [vmem:[#allocation3 + $0x358] sm:$0xff]
        %v1426 = vld [vmem:[#allocation3 + $0x360] sm:$0xff]
        %v1427 = vld [vmem:[#allocation3 + $0x368] sm:$0xff]
        %v1428 = vld [vmem:[#allocation3 + $0x370] sm:$0xff]
        %v1429 = vld [vmem:[#allocation3 + $0x378] sm:$0xff]
        %v1430 = vld [vmem:[#allocation3 + $0x380] sm:$0xff]
        %v1431 = vld [vmem:[#allocation3 + $0x388] sm:$0xff]
        %v1432 = vld [vmem:[#allocation3 + $0x390] sm:$0xff]
        %v1433 = vld [vmem:[#allocation3 + $0x398] sm:$0xff]
        %v1434 = vld [vmem:[#allocation3 + $0x3a0] sm:$0xff]
        %v1435 = vld [vmem:[#allocation3 + $0x3a8] sm:$0xff]
        %v1436 = vld [vmem:[#allocation3 + $0x3b0] sm:$0xff]
        %v1437 = vld [vmem:[#allocation3 + $0x3b8] sm:$0xff]
        %v1438 = vld [vmem:[#allocation3 + $0x3c0] sm:$0xff]
        %v1439 = vld [vmem:[#allocation3 + $0x3c8] sm:$0xff]
        %v1440 = vld [vmem:[#allocation3 + $0x3d0] sm:$0xff]
        %v1441 = vld [vmem:[#allocation3 + $0x3d8] sm:$0xff]
        %v1442 = vld [vmem:[#allocation3 + $0x3e0] sm:$0xff]
        %v1443 = vld [vmem:[#allocation3 + $0x3e8] sm:$0xff]
        %v1444 = vld [vmem:[#allocation3 + $0x3f0] sm:$0xff]
        %v1445 = vld [vmem:[#allocation3 + $0x3f8] sm:$0xff]
        %v1446 = vld [vmem:[#allocation3 + $0x400] sm:$0xff]
        %v1447 = vld [vmem:[#allocation3 + $0x408] sm:$0xff]
        %v1448 = vld [vmem:[#allocation3 + $0x410] sm:$0xff]
        %v1449 = vld [vmem:[#allocation3 + $0x418] sm:$0xff]
        %v1450 = vld [vmem:[#allocation3 + $0x420] sm:$0xff]
        %v1451 = vld [vmem:[#allocation3 + $0x428] sm:$0xff]
        %v1452 = vld [vmem:[#allocation3 + $0x430] sm:$0xff]
        %v1453 = vld [vmem:[#allocation3 + $0x438] sm:$0xff]
        %v1454 = vld [vmem:[#allocation3 + $0x440] sm:$0xff]
        %v1455 = vld [vmem:[#allocation3 + $0x448] sm:$0xff]
        %v1456 = vld [vmem:[#allocation3 + $0x450] sm:$0xff]
        %v1457 = vld [vmem:[#allocation3 + $0x458] sm:$0xff]
        %v1458 = vld [vmem:[#allocation3 + $0x460] sm:$0xff]
        %v1459 = vld [vmem:[#allocation3 + $0x468] sm:$0xff]
        %v1460 = vld [vmem:[#allocation3 + $0x470] sm:$0xff]
        %v1461 = vld [vmem:[#allocation3 + $0x478] sm:$0xff]
        %v1462 = vld [vmem:[#allocation9] sm:$0xf]
        %v1463 = vld [vmem:[#allocation9 + $0x4] sm:$0xf]
        %v1464 = vld [vmem:[#allocation9 + $0x8] sm:$0xf]
        %v1465 = vld [vmem:[#allocation9 + $0xc] sm:$0xf]
        %v1466 = vld [vmem:[#allocation9 + $0x10] sm:$0xf]
        %v1467 = vld [vmem:[#allocation9 + $0x14] sm:$0xf]
        %v1468 = vld [vmem:[#allocation9 + $0x18] sm:$0xf]
        %v1469 = vld [vmem:[#allocation9 + $0x1c] sm:$0xf]
        %v1470 = vld [vmem:[#allocation9 + $0x20] sm:$0xf]
        %v1471 = vld [vmem:[#allocation9 + $0x24] sm:$0xf]
        %v1472 = vld [vmem:[#allocation9 + $0x28] sm:$0xf]
        %v1473 = vld [vmem:[#allocation9 + $0x2c] sm:$0xf]
        %v1474 = vld [vmem:[#allocation9 + $0x30] sm:$0xf]
        %v1475 = vld [vmem:[#allocation9 + $0x34] sm:$0xf]
        %v1476 = vld [vmem:[#allocation9 + $0x38] sm:$0xf]
        %v1477 = vld [vmem:[#allocation9 + $0x3c] sm:$0xf]
        %v1478 = vld [vmem:[#allocation9 + $0x40] sm:$0xf]
        %v1479 = vld [vmem:[#allocation9 + $0x44] sm:$0xf]
        %v1480 = vld [vmem:[#allocation9 + $0x48] sm:$0xf]
        %v1481 = vld [vmem:[#allocation9 + $0x4c] sm:$0xf]
        %v1482 = vld [vmem:[#allocation9 + $0x50] sm:$0xf]
        %v1483 = vld [vmem:[#allocation9 + $0x54] sm:$0xf]
        %v1484 = vld [vmem:[#allocation9 + $0x58] sm:$0xf]
        %v1485 = vld [vmem:[#allocation9 + $0x5c] sm:$0xf]
        %v1486 = vld [vmem:[#allocation9 + $0x60] sm:$0xf]
        %v1487 = vld [vmem:[#allocation9 + $0x64] sm:$0xf]
        %v1488 = vld [vmem:[#allocation9 + $0x68] sm:$0xf]
        %v1489 = vld [vmem:[#allocation9 + $0x6c] sm:$0xf]
        %v1490 = vld [vmem:[#allocation9 + $0x70] sm:$0xf]
        %v1491 = vld [vmem:[#allocation9 + $0x74] sm:$0xf]
        %v1492 = vld [vmem:[#allocation9 + $0x78] sm:$0xf]
        %v1493 = vld [vmem:[#allocation9 + $0x7c] sm:$0xf]
        %v1494 = vld [vmem:[#allocation9 + $0x80] sm:$0xf]
        %v1495 = vld [vmem:[#allocation9 + $0x84] sm:$0xf]
        %v1496 = vld [vmem:[#allocation9 + $0x88] sm:$0xf]
        %v1497 = vld [vmem:[#allocation9 + $0x8c] sm:$0xf]
        %v1498 = vld [vmem:[#allocation9 + $0x90] sm:$0xf]
        %v1499 = vld [vmem:[#allocation9 + $0x94] sm:$0xf]
        %v1500 = vld [vmem:[#allocation9 + $0x98] sm:$0xf]
        %v1501 = vld [vmem:[#allocation9 + $0x9c] sm:$0xf]
        %v1502 = vld [vmem:[#allocation9 + $0xa0] sm:$0xf]
        %v1503 = vld [vmem:[#allocation9 + $0xa4] sm:$0xf]
        %v1504 = vld [vmem:[#allocation9 + $0xa8] sm:$0xf]
        %v1505 = vld [vmem:[#allocation9 + $0xac] sm:$0xf]
        %v1506 = vld [vmem:[#allocation9 + $0xb0] sm:$0xf]
        %v1507 = vld [vmem:[#allocation9 + $0xb4] sm:$0xf]
        %v1508 = vld [vmem:[#allocation9 + $0xb8] sm:$0xf]
        %v1509 = vld [vmem:[#allocation9 + $0xbc] sm:$0xf]
        %v1510 = vld [vmem:[#allocation9 + $0xc0] sm:$0xf]
        %v1511 = vld [vmem:[#allocation9 + $0xc4] sm:$0xf]
        %v1512 = vld [vmem:[#allocation9 + $0xc8] sm:$0xf]
        %v1513 = vld [vmem:[#allocation9 + $0xcc] sm:$0xf]
        %v1514 = vld [vmem:[#allocation9 + $0xd0] sm:$0xf]
        %v1515 = vld [vmem:[#allocation9 + $0xd4] sm:$0xf]
        %v1516 = vld [vmem:[#allocation9 + $0xd8] sm:$0xf]
        %v1517 = vld [vmem:[#allocation9 + $0xdc] sm:$0xf]
        %v1518 = vld [vmem:[#allocation9 + $0xe0] sm:$0xf]
        %v1519 = vld [vmem:[#allocation9 + $0xe4] sm:$0xf]
        %v1520 = vld [vmem:[#allocation9 + $0xe8] sm:$0xf]
        %v1521 = vld [vmem:[#allocation9 + $0xec] sm:$0xf]
        %v1522 = vld [vmem:[#allocation9 + $0xf0] sm:$0xf]
        %v1523 = vld [vmem:[#allocation9 + $0xf4] sm:$0xf]
        %v1524 = vld [vmem:[#allocation9 + $0xf8] sm:$0xf]
        %v1525 = vld [vmem:[#allocation9 + $0xfc] sm:$0xf]
        %v1526 = vld [vmem:[#allocation9 + $0x100] sm:$0xf]
        %v1527 = vld [vmem:[#allocation9 + $0x104] sm:$0xf]
        %v1528 = vld [vmem:[#allocation9 + $0x108] sm:$0xf]
        %v1529 = vld [vmem:[#allocation9 + $0x10c] sm:$0xf]
        %v1530 = vld [vmem:[#allocation9 + $0x110] sm:$0xf]
        %v1531 = vld [vmem:[#allocation9 + $0x114] sm:$0xf]
        %v1532 = vld [vmem:[#allocation9 + $0x118] sm:$0xf]
        %v1533 = vld [vmem:[#allocation9 + $0x11c] sm:$0xf]
        %v1534 = vld [vmem:[#allocation9 + $0x120] sm:$0xf]
        %v1535 = vld [vmem:[#allocation9 + $0x124] sm:$0xf]
        %v1536 = vld [vmem:[#allocation9 + $0x128] sm:$0xf]
        %v1537 = vld [vmem:[#allocation9 + $0x12c] sm:$0xf]
        %v1538 = vld [vmem:[#allocation9 + $0x130] sm:$0xf]
        %v1539 = vld [vmem:[#allocation9 + $0x134] sm:$0xf]
        %v1540 = vld [vmem:[#allocation9 + $0x138] sm:$0xf]
        %v1541 = vld [vmem:[#allocation9 + $0x13c] sm:$0xf]
        %v1542 = vld [vmem:[#allocation9 + $0x140] sm:$0xf]
        %v1543 = vld [vmem:[#allocation9 + $0x144] sm:$0xf]
        %v1544 = vld [vmem:[#allocation9 + $0x148] sm:$0xf]
        %v1545 = vld [vmem:[#allocation9 + $0x14c] sm:$0xf]
        %v1546 = vld [vmem:[#allocation9 + $0x150] sm:$0xf]
        %v1547 = vld [vmem:[#allocation9 + $0x154] sm:$0xf]
        %v1548 = vld [vmem:[#allocation9 + $0x158] sm:$0xf]
        %v1549 = vld [vmem:[#allocation9 + $0x15c] sm:$0xf]
        %v1550 = vld [vmem:[#allocation9 + $0x160] sm:$0xf]
        %v1551 = vld [vmem:[#allocation9 + $0x164] sm:$0xf]
        %v1552 = vld [vmem:[#allocation9 + $0x168] sm:$0xf]
        %v1553 = vld [vmem:[#allocation9 + $0x16c] sm:$0xf]
        %v1554 = vld [vmem:[#allocation9 + $0x170] sm:$0xf]
        %v1555 = vld [vmem:[#allocation9 + $0x174] sm:$0xf]
        %v1556 = vld [vmem:[#allocation9 + $0x178] sm:$0xf]
        %v1557 = vld [vmem:[#allocation9 + $0x17c] sm:$0xf]
        %v1558 = vld [vmem:[#allocation9 + $0x180] sm:$0xf]
        %v1559 = vld [vmem:[#allocation9 + $0x184] sm:$0xf]
        %v1560 = vld [vmem:[#allocation9 + $0x188] sm:$0xf]
        %v1561 = vld [vmem:[#allocation9 + $0x18c] sm:$0xf]
        %v1562 = vld [vmem:[#allocation9 + $0x190] sm:$0xf]
        %v1563 = vld [vmem:[#allocation9 + $0x194] sm:$0xf]
        %v1564 = vld [vmem:[#allocation9 + $0x198] sm:$0xf]
        %v1565 = vld [vmem:[#allocation9 + $0x19c] sm:$0xf]
        %v1566 = vld [vmem:[#allocation9 + $0x1a0] sm:$0xf]
        %v1567 = vld [vmem:[#allocation9 + $0x1a4] sm:$0xf]
        %v1568 = vld [vmem:[#allocation9 + $0x1a8] sm:$0xf]
        %v1569 = vld [vmem:[#allocation9 + $0x1ac] sm:$0xf]
        %v1570 = vld [vmem:[#allocation9 + $0x1b0] sm:$0xf]
        %v1571 = vld [vmem:[#allocation9 + $0x1b4] sm:$0xf]
        %v1572 = vld [vmem:[#allocation9 + $0x1b8] sm:$0xf]
        %v1573 = vld [vmem:[#allocation9 + $0x1bc] sm:$0xf]
        %v1574 = vld [vmem:[#allocation9 + $0x1c0] sm:$0xf]
        %v1575 = vld [vmem:[#allocation9 + $0x1c4] sm:$0xf]
        %v1576 = vld [vmem:[#allocation9 + $0x1c8] sm:$0xf]
        %v1577 = vld [vmem:[#allocation9 + $0x1cc] sm:$0xf]
        %v1578 = vld [vmem:[#allocation9 + $0x1d0] sm:$0xf]
        %v1579 = vld [vmem:[#allocation9 + $0x1d4] sm:$0xf]
        %v1580 = vld [vmem:[#allocation9 + $0x1d8] sm:$0xf]
        %v1581 = vld [vmem:[#allocation9 + $0x1dc] sm:$0xf]
        %v1582 = vld [vmem:[#allocation9 + $0x1e0] sm:$0xf]
        %v1583 = vld [vmem:[#allocation9 + $0x1e4] sm:$0xf]
        %v1584 = vld [vmem:[#allocation9 + $0x1e8] sm:$0xf]
        %v1585 = vld [vmem:[#allocation9 + $0x1ec] sm:$0xf]
        %v1586 = vld [vmem:[#allocation9 + $0x1f0] sm:$0xf]
        %v1587 = vld [vmem:[#allocation9 + $0x1f4] sm:$0xf]
        %v1588 = vld [vmem:[#allocation9 + $0x1f8] sm:$0xf]
        %v1589 = vld [vmem:[#allocation9 + $0x1fc] sm:$0xf]
        %v1590 = vld [vmem:[#allocation9 + $0x200] sm:$0xf]
        %v1591 = vld [vmem:[#allocation9 + $0x204] sm:$0xf]
        %v1592 = vld [vmem:[#allocation9 + $0x208] sm:$0xf]
        %v1593 = vld [vmem:[#allocation9 + $0x20c] sm:$0xf]
        %v1594 = vld [vmem:[#allocation9 + $0x210] sm:$0xf]
        %v1595 = vld [vmem:[#allocation9 + $0x214] sm:$0xf]
        %v1596 = vld [vmem:[#allocation9 + $0x218] sm:$0xf]
        %v1597 = vld [vmem:[#allocation9 + $0x21c] sm:$0xf]
        %v1598 = vld [vmem:[#allocation9 + $0x220] sm:$0xf]
        %v1599 = vld [vmem:[#allocation9 + $0x224] sm:$0xf]
        %v1600 = vld [vmem:[#allocation9 + $0x228] sm:$0xf]
        %v1601 = vld [vmem:[#allocation9 + $0x22c] sm:$0xf]
        %v1602 = vld [vmem:[#allocation9 + $0x230] sm:$0xf]
        %v1603 = vld [vmem:[#allocation9 + $0x234] sm:$0xf]
        %v1604 = vld [vmem:[#allocation9 + $0x238] sm:$0xf]
        %v1605 = vld [vmem:[#allocation9 + $0x23c] sm:$0xf]
        %v1606 = vld [vmem:[%s4] sm:$0x1]
        %v1608 = vlaneseq
        %v1609 = vshrl.u32 %v1608, 7
        %v1610 = vsub.s32 0, %v1609
        %v1611 = vrot.slane %v1606, %v1610
        %v1757 = vunpack.c.l.b16 %v1462
        %v1758 = vunpack.c.l.b16 %v1463
        %v1759 = vunpack.c.l.b16 %v1464
        %v1760 = vunpack.c.l.b16 %v1465
        %v1761 = vunpack.c.l.b16 %v1466
        %v1762 = vunpack.c.l.b16 %v1467
        %v1763 = vunpack.c.l.b16 %v1468
        %v1764 = vunpack.c.l.b16 %v1469
        %v1765 = vunpack.c.l.b16 %v1470
        %v1766 = vunpack.c.l.b16 %v1471
        %v1767 = vunpack.c.l.b16 %v1472
        %v1768 = vunpack.c.l.b16 %v1473
        %v1769 = vunpack.c.l.b16 %v1474
        %v1770 = vunpack.c.l.b16 %v1475
        %v1771 = vunpack.c.l.b16 %v1476
        %v1772 = vunpack.c.l.b16 %v1477
        %v1773 = vunpack.c.l.b16 %v1478
        %v1774 = vunpack.c.l.b16 %v1479
        %v1775 = vunpack.c.l.b16 %v1480
        %v1776 = vunpack.c.l.b16 %v1481
        %v1777 = vunpack.c.l.b16 %v1482
        %v1778 = vunpack.c.l.b16 %v1483
        %v1779 = vunpack.c.l.b16 %v1484
        %v1780 = vunpack.c.l.b16 %v1485
        %v1781 = vunpack.c.l.b16 %v1486
        %v1782 = vunpack.c.l.b16 %v1487
        %v1783 = vunpack.c.l.b16 %v1488
        %v1784 = vunpack.c.l.b16 %v1489
        %v1785 = vunpack.c.l.b16 %v1490
        %v1786 = vunpack.c.l.b16 %v1491
        %v1787 = vunpack.c.l.b16 %v1492
        %v1788 = vunpack.c.l.b16 %v1493
        %v1789 = vunpack.c.l.b16 %v1494
        %v1790 = vunpack.c.l.b16 %v1495
        %v1791 = vunpack.c.l.b16 %v1496
        %v1792 = vunpack.c.l.b16 %v1497
        %v1793 = vunpack.c.l.b16 %v1498
        %v1794 = vunpack.c.l.b16 %v1499
        %v1795 = vunpack.c.l.b16 %v1500
        %v1796 = vunpack.c.l.b16 %v1501
        %v1797 = vunpack.c.l.b16 %v1502
        %v1798 = vunpack.c.l.b16 %v1503
        %v1799 = vunpack.c.l.b16 %v1504
        %v1800 = vunpack.c.l.b16 %v1505
        %v1801 = vunpack.c.l.b16 %v1506
        %v1802 = vunpack.c.l.b16 %v1507
        %v1803 = vunpack.c.l.b16 %v1508
        %v1804 = vunpack.c.l.b16 %v1509
        %v1805 = vunpack.c.l.b16 %v1510
        %v1806 = vunpack.c.l.b16 %v1511
        %v1807 = vunpack.c.l.b16 %v1512
        %v1808 = vunpack.c.l.b16 %v1513
        %v1809 = vunpack.c.l.b16 %v1514
        %v1810 = vunpack.c.l.b16 %v1515
        %v1811 = vunpack.c.l.b16 %v1516
        %v1812 = vunpack.c.l.b16 %v1517
        %v1813 = vunpack.c.l.b16 %v1518
        %v1814 = vunpack.c.l.b16 %v1519
        %v1815 = vunpack.c.l.b16 %v1520
        %v1816 = vunpack.c.l.b16 %v1521
        %v1817 = vunpack.c.l.b16 %v1522
        %v1818 = vunpack.c.l.b16 %v1523
        %v1819 = vunpack.c.l.b16 %v1524
        %v1820 = vunpack.c.l.b16 %v1525
        %v1821 = vunpack.c.l.b16 %v1526
        %v1822 = vunpack.c.l.b16 %v1527
        %v1823 = vunpack.c.l.b16 %v1528
        %v1824 = vunpack.c.l.b16 %v1529
        %v1825 = vunpack.c.l.b16 %v1530
        %v1826 = vunpack.c.l.b16 %v1531
        %v1827 = vunpack.c.l.b16 %v1532
        %v1828 = vunpack.c.l.b16 %v1533
        %v1829 = vunpack.c.l.b16 %v1534
        %v1830 = vunpack.c.l.b16 %v1535
        %v1831 = vunpack.c.l.b16 %v1536
        %v1832 = vunpack.c.l.b16 %v1537
        %v1833 = vunpack.c.l.b16 %v1538
        %v1834 = vunpack.c.l.b16 %v1539
        %v1835 = vunpack.c.l.b16 %v1540
        %v1836 = vunpack.c.l.b16 %v1541
        %v1837 = vunpack.c.l.b16 %v1542
        %v1838 = vunpack.c.l.b16 %v1543
        %v1839 = vunpack.c.l.b16 %v1544
        %v1840 = vunpack.c.l.b16 %v1545
        %v1841 = vunpack.c.l.b16 %v1546
        %v1842 = vunpack.c.l.b16 %v1547
        %v1843 = vunpack.c.l.b16 %v1548
        %v1844 = vunpack.c.l.b16 %v1549
        %v1845 = vunpack.c.l.b16 %v1550
        %v1846 = vunpack.c.l.b16 %v1551
        %v1847 = vunpack.c.l.b16 %v1552
        %v1848 = vunpack.c.l.b16 %v1553
        %v1849 = vunpack.c.l.b16 %v1554
        %v1850 = vunpack.c.l.b16 %v1555
        %v1851 = vunpack.c.l.b16 %v1556
        %v1852 = vunpack.c.l.b16 %v1557
        %v1853 = vunpack.c.l.b16 %v1558
        %v1854 = vunpack.c.l.b16 %v1559
        %v1855 = vunpack.c.l.b16 %v1560
        %v1856 = vunpack.c.l.b16 %v1561
        %v1857 = vunpack.c.l.b16 %v1562
        %v1858 = vunpack.c.l.b16 %v1563
        %v1859 = vunpack.c.l.b16 %v1564
        %v1860 = vunpack.c.l.b16 %v1565
        %v1861 = vunpack.c.l.b16 %v1566
        %v1862 = vunpack.c.l.b16 %v1567
        %v1863 = vunpack.c.l.b16 %v1568
        %v1864 = vunpack.c.l.b16 %v1569
        %v1865 = vunpack.c.l.b16 %v1570
        %v1866 = vunpack.c.l.b16 %v1571
        %v1867 = vunpack.c.l.b16 %v1572
        %v1868 = vunpack.c.l.b16 %v1573
        %v1869 = vunpack.c.l.b16 %v1574
        %v1870 = vunpack.c.l.b16 %v1575
        %v1871 = vunpack.c.l.b16 %v1576
        %v1872 = vunpack.c.l.b16 %v1577
        %v1873 = vunpack.c.l.b16 %v1578
        %v1874 = vunpack.c.l.b16 %v1579
        %v1875 = vunpack.c.l.b16 %v1580
        %v1876 = vunpack.c.l.b16 %v1581
        %v1877 = vunpack.c.l.b16 %v1582
        %v1878 = vunpack.c.l.b16 %v1583
        %v1879 = vunpack.c.l.b16 %v1584
        %v1880 = vunpack.c.l.b16 %v1585
        %v1881 = vunpack.c.l.b16 %v1586
        %v1882 = vunpack.c.l.b16 %v1587
        %v1883 = vunpack.c.l.b16 %v1588
        %v1884 = vunpack.c.l.b16 %v1589
        %v1885 = vunpack.c.l.b16 %v1590
        %v1886 = vunpack.c.l.b16 %v1591
        %v1887 = vunpack.c.l.b16 %v1592
        %v1888 = vunpack.c.l.b16 %v1593
        %v1889 = vunpack.c.l.b16 %v1594
        %v1890 = vunpack.c.l.b16 %v1595
        %v1891 = vunpack.c.l.b16 %v1596
        %v1892 = vunpack.c.l.b16 %v1597
        %v1893 = vunpack.c.l.b16 %v1598
        %v1894 = vunpack.c.l.b16 %v1599
        %v1895 = vunpack.c.l.b16 %v1600
        %v1896 = vunpack.c.l.b16 %v1601
        %v1897 = vunpack.c.l.b16 %v1602
        %v1898 = vunpack.c.l.b16 %v1603
        %v1899 = vunpack.c.l.b16 %v1604
        %v1900 = vunpack.c.l.b16 %v1605
        %v1901 = vpack.c.b16 %v1758, %v1757
        %v1902 = vpack.c.b16 %v1760, %v1759
        %v1903 = vpack.c.b16 %v1762, %v1761
        %v1904 = vpack.c.b16 %v1764, %v1763
        %v1905 = vpack.c.b16 %v1766, %v1765
        %v1906 = vpack.c.b16 %v1768, %v1767
        %v1907 = vpack.c.b16 %v1770, %v1769
        %v1908 = vpack.c.b16 %v1772, %v1771
        %v1909 = vpack.c.b16 %v1774, %v1773
        %v1910 = vpack.c.b16 %v1776, %v1775
        %v1911 = vpack.c.b16 %v1778, %v1777
        %v1912 = vpack.c.b16 %v1780, %v1779
        %v1913 = vpack.c.b16 %v1782, %v1781
        %v1914 = vpack.c.b16 %v1784, %v1783
        %v1915 = vpack.c.b16 %v1786, %v1785
        %v1916 = vpack.c.b16 %v1788, %v1787
        %v1917 = vpack.c.b16 %v1790, %v1789
        %v1918 = vpack.c.b16 %v1792, %v1791
        %v1919 = vpack.c.b16 %v1794, %v1793
        %v1920 = vpack.c.b16 %v1796, %v1795
        %v1921 = vpack.c.b16 %v1798, %v1797
        %v1922 = vpack.c.b16 %v1800, %v1799
        %v1923 = vpack.c.b16 %v1802, %v1801
        %v1924 = vpack.c.b16 %v1804, %v1803
        %v1925 = vpack.c.b16 %v1806, %v1805
        %v1926 = vpack.c.b16 %v1808, %v1807
        %v1927 = vpack.c.b16 %v1810, %v1809
        %v1928 = vpack.c.b16 %v1812, %v1811
        %v1929 = vpack.c.b16 %v1814, %v1813
        %v1930 = vpack.c.b16 %v1816, %v1815
        %v1931 = vpack.c.b16 %v1818, %v1817
        %v1932 = vpack.c.b16 %v1820, %v1819
        %v1933 = vpack.c.b16 %v1822, %v1821
        %v1934 = vpack.c.b16 %v1824, %v1823
        %v1935 = vpack.c.b16 %v1826, %v1825
        %v1936 = vpack.c.b16 %v1828, %v1827
        %v1937 = vpack.c.b16 %v1830, %v1829
        %v1938 = vpack.c.b16 %v1832, %v1831
        %v1939 = vpack.c.b16 %v1834, %v1833
        %v1940 = vpack.c.b16 %v1836, %v1835
        %v1941 = vpack.c.b16 %v1838, %v1837
        %v1942 = vpack.c.b16 %v1840, %v1839
        %v1943 = vpack.c.b16 %v1842, %v1841
        %v1944 = vpack.c.b16 %v1844, %v1843
        %v1945 = vpack.c.b16 %v1846, %v1845
        %v1946 = vpack.c.b16 %v1848, %v1847
        %v1947 = vpack.c.b16 %v1850, %v1849
        %v1948 = vpack.c.b16 %v1852, %v1851
        %v1949 = vpack.c.b16 %v1854, %v1853
        %v1950 = vpack.c.b16 %v1856, %v1855
        %v1951 = vpack.c.b16 %v1858, %v1857
        %v1952 = vpack.c.b16 %v1860, %v1859
        %v1953 = vpack.c.b16 %v1862, %v1861
        %v1954 = vpack.c.b16 %v1864, %v1863
        %v1955 = vpack.c.b16 %v1866, %v1865
        %v1956 = vpack.c.b16 %v1868, %v1867
        %v1957 = vpack.c.b16 %v1870, %v1869
        %v1958 = vpack.c.b16 %v1872, %v1871
        %v1959 = vpack.c.b16 %v1874, %v1873
        %v1960 = vpack.c.b16 %v1876, %v1875
        %v1961 = vpack.c.b16 %v1878, %v1877
        %v1962 = vpack.c.b16 %v1880, %v1879
        %v1963 = vpack.c.b16 %v1882, %v1881
        %v1964 = vpack.c.b16 %v1884, %v1883
        %v1965 = vpack.c.b16 %v1886, %v1885
        %v1966 = vpack.c.b16 %v1888, %v1887
        %v1967 = vpack.c.b16 %v1890, %v1889
        %v1968 = vpack.c.b16 %v1892, %v1891
        %v1969 = vpack.c.b16 %v1894, %v1893
        %v1970 = vpack.c.b16 %v1896, %v1895
        %v1971 = vpack.c.b16 %v1898, %v1897
        %v1972 = vpack.c.b16 %v1900, %v1899
        %2045 = vmatprep.subr.bf16.mxu0 0
        %2046 = vmatpush1.bf16.msra.mxu0 %v1901
        %2047 = vmatprep.subr.bf16.mxu0 0
        %2048 = vmatpush1.bf16.msra.mxu0 %v1902
        %2049 = vmatprep.subr.bf16.mxu0 0
        %2050 = vmatpush1.bf16.msra.mxu0 %v1903
        %2051 = vmatprep.subr.bf16.mxu0 0
        %2052 = vmatpush1.bf16.msra.mxu0 %v1904
        %2053 = vmatprep.subr.bf16.mxu0 0
        %2054 = vmatpush1.bf16.msra.mxu0 %v1905
        %2055 = vmatprep.subr.bf16.mxu0 0
        %2056 = vmatpush1.bf16.msra.mxu0 %v1906
        %2057 = vmatprep.subr.bf16.mxu0 0
        %2058 = vmatpush1.bf16.msra.mxu0 %v1907
        %2059 = vmatprep.subr.bf16.mxu0 0
        %2060 = vmatpush1.bf16.msra.mxu0 %v1908
        %2061 = vmatprep.subr.bf16.mxu0 0
        %2062 = vmatpush1.bf16.msra.mxu0 %v1909
        %2063 = vmatprep.subr.bf16.mxu0 0
        %2064 = vmatpush1.bf16.msra.mxu0 %v1910
        %2065 = vmatprep.subr.bf16.mxu0 0
        %2066 = vmatpush1.bf16.msra.mxu0 %v1911
        %2067 = vmatprep.subr.bf16.mxu0 0
        %2068 = vmatpush1.bf16.msra.mxu0 %v1912
        %2069 = vmatprep.subr.bf16.mxu0 0
        %2070 = vmatpush1.bf16.msra.mxu0 %v1913
        %2071 = vmatprep.subr.bf16.mxu0 0
        %2072 = vmatpush1.bf16.msra.mxu0 %v1914
        %2073 = vmatprep.subr.bf16.mxu0 0
        %2074 = vmatpush1.bf16.msra.mxu0 %v1915
        %2075 = vmatprep.subr.bf16.mxu0 0
        %2076 = vmatpush1.bf16.msra.mxu0 %v1916
        %2077 = vmatprep.mubr.bf16.mxu0 %v1319
        %2078 = vmatmul.mubr.bf16.gmra.mrb[0].mxu0 %v1318
        %v2079 = vpop.f32.mrb[0].mxu0
        %v2080 = vadd.f32 %v1611, %v2079
        %v2081 = vpop.f32.mrb[0].mxu0
        %v2082 = vpop.f32.mrb[0].mxu0
        %v2083 = vadd.f32 %v1611, %v2082
        %v2084 = vpop.f32.mrb[0].mxu0
        %2085 = vmatprep.mubr.bf16.mxu0 %v1328
        %2086 = vmatmul.mubr.bf16.gmra.mrb[0].mxu0 %v1327
        %v2087 = vpop.f32.mrb[0].mxu0
        %v2088 = vadd.f32 %v1611, %v2087
        %v2089 = vpop.f32.mrb[0].mxu0
        %v2090 = vpop.f32.mrb[0].mxu0
        %v2091 = vadd.f32 %v1611, %v2090
        %v2092 = vpop.f32.mrb[0].mxu0
        %2093 = vmatprep.mubr.bf16.mxu0 %v1337
        %2094 = vmatmul.mubr.bf16.gmra.mrb[0].mxu0 %v1336
        %v2095 = vpop.f32.mrb[0].mxu0
        %v2096 = vadd.f32 %v1611, %v2095
        %v2097 = vpop.f32.mrb[0].mxu0
        %v2098 = vpop.f32.mrb[0].mxu0
        %v2099 = vadd.f32 %v1611, %v2098
        %v2100 = vpop.f32.mrb[0].mxu0
        %2101 = vmatprep.mubr.bf16.mxu0 %v1346
        %2102 = vmatmul.mubr.bf16.gmra.mrb[0].mxu0 %v1345
        %v2103 = vpop.f32.mrb[0].mxu0
        %v2104 = vadd.f32 %v1611, %v2103
        %v2105 = vpop.f32.mrb[0].mxu0
        %v2106 = vpop.f32.mrb[0].mxu0
        %v2107 = vadd.f32 %v1611, %v2106
        %v2108 = vpop.f32.mrb[0].mxu0
        %2109 = vmatprep.mubr.bf16.mxu0 %v1355
        %2110 = vmatmul.mubr.bf16.gmra.mrb[0].mxu0 %v1354
        %v2111 = vpop.f32.mrb[0].mxu0
        %v2112 = vadd.f32 %v1611, %v2111
        %v2113 = vpop.f32.mrb[0].mxu0
        %v2114 = vpop.f32.mrb[0].mxu0
        %v2115 = vadd.f32 %v1611, %v2114
        %v2116 = vpop.f32.mrb[0].mxu0
        %2117 = vmatprep.mubr.bf16.mxu0 %v1364
        %2118 = vmatmul.mubr.bf16.gmra.mrb[0].mxu0 %v1363
        %v2119 = vpop.f32.mrb[0].mxu0
        %v2120 = vadd.f32 %v1611, %v2119
        %v2121 = vpop.f32.mrb[0].mxu0
        %v2122 = vpop.f32.mrb[0].mxu0
        %v2123 = vadd.f32 %v1611, %v2122
        %v2124 = vpop.f32.mrb[0].mxu0
        %2125 = vmatprep.mubr.bf16.mxu0 %v1373
        %2126 = vmatmul.mubr.bf16.gmra.mrb[0].mxu0 %v1372
        %v2127 = vpop.f32.mrb[0].mxu0
        %v2128 = vadd.f32 %v1611, %v2127
        %v2129 = vpop.f32.mrb[0].mxu0
        %v2130 = vpop.f32.mrb[0].mxu0
        %v2131 = vadd.f32 %v1611, %v2130
        %v2132 = vpop.f32.mrb[0].mxu0
        %2133 = vmatprep.mubr.bf16.mxu0 %v1382
        %2134 = vmatmul.mubr.bf16.gmra.mrb[0].mxu0 %v1381
        %v2135 = vpop.f32.mrb[0].mxu0
        %v2136 = vadd.f32 %v1611, %v2135
        %v2137 = vpop.f32.mrb[0].mxu0
        %v2138 = vpop.f32.mrb[0].mxu0
        %v2139 = vadd.f32 %v1611, %v2138
        %v2140 = vpop.f32.mrb[0].mxu0
        %2141 = vmatprep.mubr.bf16.mxu0 %v1391
        %2142 = vmatmul.mubr.bf16.gmra.mrb[0].mxu0 %v1390
        %v2143 = vpop.f32.mrb[0].mxu0
        %v2144 = vadd.f32 %v1611, %v2143
        %v2145 = vpop.f32.mrb[0].mxu0
        %v2146 = vpop.f32.mrb[0].mxu0
        %v2147 = vadd.f32 %v1611, %v2146
        %v2148 = vpop.f32.mrb[0].mxu0
        %2149 = vmatprep.mubr.bf16.mxu0 %v1400
        %2150 = vmatmul.mubr.bf16.gmra.mrb[0].mxu0 %v1399
        %v2151 = vpop.f32.mrb[0].mxu0
        %v2152 = vadd.f32 %v1611, %v2151
        %v2153 = vpop.f32.mrb[0].mxu0
        %v2154 = vpop.f32.mrb[0].mxu0
        %v2155 = vadd.f32 %v1611, %v2154
        %v2156 = vpop.f32.mrb[0].mxu0
        %2157 = vmatprep.mubr.bf16.mxu0 %v1409
        %2158 = vmatmul.mubr.bf16.gmra.mrb[0].mxu0 %v1408
        %v2159 = vpop.f32.mrb[0].mxu0
        %v2160 = vadd.f32 %v1611, %v2159
        %v2161 = vpop.f32.mrb[0].mxu0
        %v2162 = vpop.f32.mrb[0].mxu0
        %v2163 = vadd.f32 %v1611, %v2162
        %v2164 = vpop.f32.mrb[0].mxu0
        %2165 = vmatprep.mubr.bf16.mxu0 %v1418
        %2166 = vmatmul.mubr.bf16.gmra.mrb[0].mxu0 %v1417
        %v2167 = vpop.f32.mrb[0].mxu0
        %v2168 = vadd.f32 %v1611, %v2167
        %v2169 = vpop.f32.mrb[0].mxu0
        %v2170 = vpop.f32.mrb[0].mxu0
        %v2171 = vadd.f32 %v1611, %v2170
        %v2172 = vpop.f32.mrb[0].mxu0
        %2173 = vmatprep.mubr.bf16.mxu0 %v1427
        %2174 = vmatmul.mubr.bf16.gmra.mrb[0].mxu0 %v1426
        %v2175 = vpop.f32.mrb[0].mxu0
        %v2176 = vadd.f32 %v1611, %v2175
        %v2177 = vpop.f32.mrb[0].mxu0
        %v2178 = vpop.f32.mrb[0].mxu0
        %v2179 = vadd.f32 %v1611, %v2178
        %v2180 = vpop.f32.mrb[0].mxu0
        %2181 = vmatprep.mubr.bf16.mxu0 %v1436
        %2182 = vmatmul.mubr.bf16.gmra.mrb[0].mxu0 %v1435
        %v2183 = vpop.f32.mrb[0].mxu0
        %v2184 = vadd.f32 %v1611, %v2183
        %v2185 = vpop.f32.mrb[0].mxu0
        %v2186 = vpop.f32.mrb[0].mxu0
        %v2187 = vadd.f32 %v1611, %v2186
        %v2188 = vpop.f32.mrb[0].mxu0
        %2189 = vmatprep.mubr.bf16.mxu0 %v1445
        %2190 = vmatmul.mubr.bf16.gmra.mrb[0].mxu0 %v1444
        %v2191 = vpop.f32.mrb[0].mxu0
        %v2192 = vadd.f32 %v1611, %v2191
        %v2193 = vpop.f32.mrb[0].mxu0
        %v2194 = vpop.f32.mrb[0].mxu0
        %v2195 = vadd.f32 %v1611, %v2194
        %v2196 = vpop.f32.mrb[0].mxu0
        %2197 = vmatprep.mubr.bf16.mxu0 %v1454
        %2198 = vmatmul.mubr.bf16.gmra.mrb[0].mxu0 %v1453
        %v2199 = vpop.f32.mrb[0].mxu0
        %v2200 = vadd.f32 %v1611, %v2199
        %v2201 = vpop.f32.mrb[0].mxu0
        %v2202 = vpop.f32.mrb[0].mxu0
        %v2203 = vadd.f32 %v1611, %v2202
        %v2204 = vpop.f32.mrb[0].mxu0
        %2205 = vdwg.mxu0
        %2206 = vmatprep.subr.bf16.mxu0 0
        %2207 = vmatpush1.bf16.msra.mxu0 %v1917
        %2208 = vmatprep.subr.bf16.mxu0 0
        %2209 = vmatpush1.bf16.msra.mxu0 %v1918
        %2210 = vmatprep.subr.bf16.mxu0 0
        %2211 = vmatpush1.bf16.msra.mxu0 %v1919
        %2212 = vmatprep.subr.bf16.mxu0 0
        %2213 = vmatpush1.bf16.msra.mxu0 %v1920
        %2214 = vmatprep.subr.bf16.mxu0 0
        %2215 = vmatpush1.bf16.msra.mxu0 %v1921
        %2216 = vmatprep.subr.bf16.mxu0 0
        %2217 = vmatpush1.bf16.msra.mxu0 %v1922
        %2218 = vmatprep.subr.bf16.mxu0 0
        %2219 = vmatpush1.bf16.msra.mxu0 %v1923
        %2220 = vmatprep.subr.bf16.mxu0 0
        %2221 = vmatpush1.bf16.msra.mxu0 %v1924
        %2222 = vmatprep.subr.bf16.mxu0 0
        %2223 = vmatpush1.bf16.msra.mxu0 %v1925
        %2224 = vmatprep.subr.bf16.mxu0 0
        %2225 = vmatpush1.bf16.msra.mxu0 %v1926
        %2226 = vmatprep.subr.bf16.mxu0 0
        %2227 = vmatpush1.bf16.msra.mxu0 %v1927
        %2228 = vmatprep.subr.bf16.mxu0 0
        %2229 = vmatpush1.bf16.msra.mxu0 %v1928
        %2230 = vmatprep.subr.bf16.mxu0 0
        %2231 = vmatpush1.bf16.msra.mxu0 %v1929
        %2232 = vmatprep.subr.bf16.mxu0 0
        %2233 = vmatpush1.bf16.msra.mxu0 %v1930
        %2234 = vmatprep.subr.bf16.mxu0 0
        %2235 = vmatpush1.bf16.msra.mxu0 %v1931
        %2236 = vmatprep.subr.bf16.mxu0 0
        %2237 = vmatpush1.bf16.msra.mxu0 %v1932
        %2238 = vmatprep.mubr.bf16.mxu0 %v1321
        %2239 = vmatmul.mubr.bf16.gmra.mrb[0].mxu0 %v1320
        %v2240 = vpop.f32.mrb[0].mxu0
        %v2241 = vadd.f32 %v2080, %v2240
        %v2242 = vpop.f32.mrb[0].mxu0
        %v2243 = vpop.f32.mrb[0].mxu0
        %v2244 = vadd.f32 %v2083, %v2243
        %v2245 = vpop.f32.mrb[0].mxu0
        %2246 = vmatprep.mubr.bf16.mxu0 %v1330
        %2247 = vmatmul.mubr.bf16.gmra.mrb[0].mxu0 %v1329
        %v2248 = vpop.f32.mrb[0].mxu0
        %v2249 = vadd.f32 %v2088, %v2248
        %v2250 = vpop.f32.mrb[0].mxu0
        %v2251 = vpop.f32.mrb[0].mxu0
        %v2252 = vadd.f32 %v2091, %v2251
        %v2253 = vpop.f32.mrb[0].mxu0
        %2254 = vmatprep.mubr.bf16.mxu0 %v1339
        %2255 = vmatmul.mubr.bf16.gmra.mrb[0].mxu0 %v1338
        %v2256 = vpop.f32.mrb[0].mxu0
        %v2257 = vadd.f32 %v2096, %v2256
        %v2258 = vpop.f32.mrb[0].mxu0
        %v2259 = vpop.f32.mrb[0].mxu0
        %v2260 = vadd.f32 %v2099, %v2259
        %v2261 = vpop.f32.mrb[0].mxu0
        %2262 = vmatprep.mubr.bf16.mxu0 %v1348
        %2263 = vmatmul.mubr.bf16.gmra.mrb[0].mxu0 %v1347
        %v2264 = vpop.f32.mrb[0].mxu0
        %v2265 = vadd.f32 %v2104, %v2264
        %v2266 = vpop.f32.mrb[0].mxu0
        %v2267 = vpop.f32.mrb[0].mxu0
        %v2268 = vadd.f32 %v2107, %v2267
        %v2269 = vpop.f32.mrb[0].mxu0
        %2270 = vmatprep.mubr.bf16.mxu0 %v1357
        %2271 = vmatmul.mubr.bf16.gmra.mrb[0].mxu0 %v1356
        %v2272 = vpop.f32.mrb[0].mxu0
        %v2273 = vadd.f32 %v2112, %v2272
        %v2274 = vpop.f32.mrb[0].mxu0
        %v2275 = vpop.f32.mrb[0].mxu0
        %v2276 = vadd.f32 %v2115, %v2275
        %v2277 = vpop.f32.mrb[0].mxu0
        %2278 = vmatprep.mubr.bf16.mxu0 %v1366
        %2279 = vmatmul.mubr.bf16.gmra.mrb[0].mxu0 %v1365
        %v2280 = vpop.f32.mrb[0].mxu0
        %v2281 = vadd.f32 %v2120, %v2280
        %v2282 = vpop.f32.mrb[0].mxu0
        %v2283 = vpop.f32.mrb[0].mxu0
        %v2284 = vadd.f32 %v2123, %v2283
        %v2285 = vpop.f32.mrb[0].mxu0
        %2286 = vmatprep.mubr.bf16.mxu0 %v1375
        %2287 = vmatmul.mubr.bf16.gmra.mrb[0].mxu0 %v1374
        %v2288 = vpop.f32.mrb[0].mxu0
        %v2289 = vadd.f32 %v2128, %v2288
        %v2290 = vpop.f32.mrb[0].mxu0
        %v2291 = vpop.f32.mrb[0].mxu0
        %v2292 = vadd.f32 %v2131, %v2291
        %v2293 = vpop.f32.mrb[0].mxu0
        %2294 = vmatprep.mubr.bf16.mxu0 %v1384
        %2295 = vmatmul.mubr.bf16.gmra.mrb[0].mxu0 %v1383
        %v2296 = vpop.f32.mrb[0].mxu0
        %v2297 = vadd.f32 %v2136, %v2296
        %v2298 = vpop.f32.mrb[0].mxu0
        %v2299 = vpop.f32.mrb[0].mxu0
        %v2300 = vadd.f32 %v2139, %v2299
        %v2301 = vpop.f32.mrb[0].mxu0
        %2302 = vmatprep.mubr.bf16.mxu0 %v1393
        %2303 = vmatmul.mubr.bf16.gmra.mrb[0].mxu0 %v1392
        %v2304 = vpop.f32.mrb[0].mxu0
        %v2305 = vadd.f32 %v2144, %v2304
        %v2306 = vpop.f32.mrb[0].mxu0
        %v2307 = vpop.f32.mrb[0].mxu0
        %v2308 = vadd.f32 %v2147, %v2307
        %v2309 = vpop.f32.mrb[0].mxu0
        %2310 = vmatprep.mubr.bf16.mxu0 %v1402
        %2311 = vmatmul.mubr.bf16.gmra.mrb[0].mxu0 %v1401
        %v2312 = vpop.f32.mrb[0].mxu0
        %v2313 = vadd.f32 %v2152, %v2312
        %v2314 = vpop.f32.mrb[0].mxu0
        %v2315 = vpop.f32.mrb[0].mxu0
        %v2316 = vadd.f32 %v2155, %v2315
        %v2317 = vpop.f32.mrb[0].mxu0
        %2318 = vmatprep.mubr.bf16.mxu0 %v1411
        %2319 = vmatmul.mubr.bf16.gmra.mrb[0].mxu0 %v1410
        %v2320 = vpop.f32.mrb[0].mxu0
        %v2321 = vadd.f32 %v2160, %v2320
        %v2322 = vpop.f32.mrb[0].mxu0
        %v2323 = vpop.f32.mrb[0].mxu0
        %v2324 = vadd.f32 %v2163, %v2323
        %v2325 = vpop.f32.mrb[0].mxu0
        %2326 = vmatprep.mubr.bf16.mxu0 %v1420
        %2327 = vmatmul.mubr.bf16.gmra.mrb[0].mxu0 %v1419
        %v2328 = vpop.f32.mrb[0].mxu0
        %v2329 = vadd.f32 %v2168, %v2328
        %v2330 = vpop.f32.mrb[0].mxu0
        %v2331 = vpop.f32.mrb[0].mxu0
        %v2332 = vadd.f32 %v2171, %v2331
        %v2333 = vpop.f32.mrb[0].mxu0
        %2334 = vmatprep.mubr.bf16.mxu0 %v1429
        %2335 = vmatmul.mubr.bf16.gmra.mrb[0].mxu0 %v1428
        %v2336 = vpop.f32.mrb[0].mxu0
        %v2337 = vadd.f32 %v2176, %v2336
        %v2338 = vpop.f32.mrb[0].mxu0
        %v2339 = vpop.f32.mrb[0].mxu0
        %v2340 = vadd.f32 %v2179, %v2339
        %v2341 = vpop.f32.mrb[0].mxu0
        %2342 = vmatprep.mubr.bf16.mxu0 %v1438
        %2343 = vmatmul.mubr.bf16.gmra.mrb[0].mxu0 %v1437
        %v2344 = vpop.f32.mrb[0].mxu0
        %v2345 = vadd.f32 %v2184, %v2344
        %v2346 = vpop.f32.mrb[0].mxu0
        %v2347 = vpop.f32.mrb[0].mxu0
        %v2348 = vadd.f32 %v2187, %v2347
        %v2349 = vpop.f32.mrb[0].mxu0
        %2350 = vmatprep.mubr.bf16.mxu0 %v1447
        %2351 = vmatmul.mubr.bf16.gmra.mrb[0].mxu0 %v1446
        %v2352 = vpop.f32.mrb[0].mxu0
        %v2353 = vadd.f32 %v2192, %v2352
        %v2354 = vpop.f32.mrb[0].mxu0
        %v2355 = vpop.f32.mrb[0].mxu0
        %v2356 = vadd.f32 %v2195, %v2355
        %v2357 = vpop.f32.mrb[0].mxu0
        %2358 = vmatprep.mubr.bf16.mxu0 %v1456
        %2359 = vmatmul.mubr.bf16.gmra.mrb[0].mxu0 %v1455
        %v2360 = vpop.f32.mrb[0].mxu0
        %v2361 = vadd.f32 %v2200, %v2360
        %v2362 = vpop.f32.mrb[0].mxu0
        %v2363 = vpop.f32.mrb[0].mxu0
        %v2364 = vadd.f32 %v2203, %v2363
        %v2365 = vpop.f32.mrb[0].mxu0
        %2366 = vdwg.mxu0
        %2367 = vmatprep.subr.bf16.mxu0 0
        %2368 = vmatpush1.bf16.msra.mxu0 %v1933
        %2369 = vmatprep.subr.bf16.mxu0 0
        %2370 = vmatpush1.bf16.msra.mxu0 %v1934
        %2371 = vmatprep.subr.bf16.mxu0 0
        %2372 = vmatpush1.bf16.msra.mxu0 %v1935
        %2373 = vmatprep.subr.bf16.mxu0 0
        %2374 = vmatpush1.bf16.msra.mxu0 %v1936
        %2375 = vmatprep.subr.bf16.mxu0 0
        %2376 = vmatpush1.bf16.msra.mxu0 %v1937
        %2377 = vmatprep.subr.bf16.mxu0 0
        %2378 = vmatpush1.bf16.msra.mxu0 %v1938
        %2379 = vmatprep.subr.bf16.mxu0 0
        %2380 = vmatpush1.bf16.msra.mxu0 %v1939
        %2381 = vmatprep.subr.bf16.mxu0 0
        %2382 = vmatpush1.bf16.msra.mxu0 %v1940
        %2383 = vmatprep.subr.bf16.mxu0 0
        %2384 = vmatpush1.bf16.msra.mxu0 %v1941
        %2385 = vmatprep.subr.bf16.mxu0 0
        %2386 = vmatpush1.bf16.msra.mxu0 %v1942
        %2387 = vmatprep.subr.bf16.mxu0 0
        %2388 = vmatpush1.bf16.msra.mxu0 %v1943
        %2389 = vmatprep.subr.bf16.mxu0 0
        %2390 = vmatpush1.bf16.msra.mxu0 %v1944
        %2391 = vmatprep.subr.bf16.mxu0 0
        %2392 = vmatpush1.bf16.msra.mxu0 %v1945
        %2393 = vmatprep.subr.bf16.mxu0 0
        %2394 = vmatpush1.bf16.msra.mxu0 %v1946
        %2395 = vmatprep.subr.bf16.mxu0 0
        %2396 = vmatpush1.bf16.msra.mxu0 %v1947
        %2397 = vmatprep.subr.bf16.mxu0 0
        %2398 = vmatpush1.bf16.msra.mxu0 %v1948
        %2399 = vmatprep.mubr.bf16.mxu0 %v1323
        %2400 = vmatmul.mubr.bf16.gmra.mrb[0].mxu0 %v1322
        %v2401 = vpop.f32.mrb[0].mxu0
        %v2402 = vadd.f32 %v2241, %v2401
        %v2403 = vpop.f32.mrb[0].mxu0
        %v2404 = vpop.f32.mrb[0].mxu0
        %v2405 = vadd.f32 %v2244, %v2404
        %v2406 = vpop.f32.mrb[0].mxu0
        %2407 = vmatprep.mubr.bf16.mxu0 %v1332
        %2408 = vmatmul.mubr.bf16.gmra.mrb[0].mxu0 %v1331
        %v2409 = vpop.f32.mrb[0].mxu0
        %v2410 = vadd.f32 %v2249, %v2409
        %v2411 = vpop.f32.mrb[0].mxu0
        %v2412 = vpop.f32.mrb[0].mxu0
        %v2413 = vadd.f32 %v2252, %v2412
        %v2414 = vpop.f32.mrb[0].mxu0
        %2415 = vmatprep.mubr.bf16.mxu0 %v1341
        %2416 = vmatmul.mubr.bf16.gmra.mrb[0].mxu0 %v1340
        %v2417 = vpop.f32.mrb[0].mxu0
        %v2418 = vadd.f32 %v2257, %v2417
        %v2419 = vpop.f32.mrb[0].mxu0
        %v2420 = vpop.f32.mrb[0].mxu0
        %v2421 = vadd.f32 %v2260, %v2420
        %v2422 = vpop.f32.mrb[0].mxu0
        %2423 = vmatprep.mubr.bf16.mxu0 %v1350
        %2424 = vmatmul.mubr.bf16.gmra.mrb[0].mxu0 %v1349
        %v2425 = vpop.f32.mrb[0].mxu0
        %v2426 = vadd.f32 %v2265, %v2425
        %v2427 = vpop.f32.mrb[0].mxu0
        %v2428 = vpop.f32.mrb[0].mxu0
        %v2429 = vadd.f32 %v2268, %v2428
        %v2430 = vpop.f32.mrb[0].mxu0
        %2431 = vmatprep.mubr.bf16.mxu0 %v1359
        %2432 = vmatmul.mubr.bf16.gmra.mrb[0].mxu0 %v1358
        %v2433 = vpop.f32.mrb[0].mxu0
        %v2434 = vadd.f32 %v2273, %v2433
        %v2435 = vpop.f32.mrb[0].mxu0
        %v2436 = vpop.f32.mrb[0].mxu0
        %v2437 = vadd.f32 %v2276, %v2436
        %v2438 = vpop.f32.mrb[0].mxu0
        %2439 = vmatprep.mubr.bf16.mxu0 %v1368
        %2440 = vmatmul.mubr.bf16.gmra.mrb[0].mxu0 %v1367
        %v2441 = vpop.f32.mrb[0].mxu0
        %v2442 = vadd.f32 %v2281, %v2441
        %v2443 = vpop.f32.mrb[0].mxu0
        %v2444 = vpop.f32.mrb[0].mxu0
        %v2445 = vadd.f32 %v2284, %v2444
        %v2446 = vpop.f32.mrb[0].mxu0
        %2447 = vmatprep.mubr.bf16.mxu0 %v1377
        %2448 = vmatmul.mubr.bf16.gmra.mrb[0].mxu0 %v1376
        %v2449 = vpop.f32.mrb[0].mxu0
        %v2450 = vadd.f32 %v2289, %v2449
        %v2451 = vpop.f32.mrb[0].mxu0
        %v2452 = vpop.f32.mrb[0].mxu0
        %v2453 = vadd.f32 %v2292, %v2452
        %v2454 = vpop.f32.mrb[0].mxu0
        %2455 = vmatprep.mubr.bf16.mxu0 %v1386
        %2456 = vmatmul.mubr.bf16.gmra.mrb[0].mxu0 %v1385
        %v2457 = vpop.f32.mrb[0].mxu0
        %v2458 = vadd.f32 %v2297, %v2457
        %v2459 = vpop.f32.mrb[0].mxu0
        %v2460 = vpop.f32.mrb[0].mxu0
        %v2461 = vadd.f32 %v2300, %v2460
        %v2462 = vpop.f32.mrb[0].mxu0
        %2463 = vmatprep.mubr.bf16.mxu0 %v1395
        %2464 = vmatmul.mubr.bf16.gmra.mrb[0].mxu0 %v1394
        %v2465 = vpop.f32.mrb[0].mxu0
        %v2466 = vadd.f32 %v2305, %v2465
        %v2467 = vpop.f32.mrb[0].mxu0
        %v2468 = vpop.f32.mrb[0].mxu0
        %v2469 = vadd.f32 %v2308, %v2468
        %v2470 = vpop.f32.mrb[0].mxu0
        %2471 = vmatprep.mubr.bf16.mxu0 %v1404
        %2472 = vmatmul.mubr.bf16.gmra.mrb[0].mxu0 %v1403
        %v2473 = vpop.f32.mrb[0].mxu0
        %v2474 = vadd.f32 %v2313, %v2473
        %v2475 = vpop.f32.mrb[0].mxu0
        %v2476 = vpop.f32.mrb[0].mxu0
        %v2477 = vadd.f32 %v2316, %v2476
        %v2478 = vpop.f32.mrb[0].mxu0
        %2479 = vmatprep.mubr.bf16.mxu0 %v1413
        %2480 = vmatmul.mubr.bf16.gmra.mrb[0].mxu0 %v1412
        %v2481 = vpop.f32.mrb[0].mxu0
        %v2482 = vadd.f32 %v2321, %v2481
        %v2483 = vpop.f32.mrb[0].mxu0
        %v2484 = vpop.f32.mrb[0].mxu0
        %v2485 = vadd.f32 %v2324, %v2484
        %v2486 = vpop.f32.mrb[0].mxu0
        %2487 = vmatprep.mubr.bf16.mxu0 %v1422
        %2488 = vmatmul.mubr.bf16.gmra.mrb[0].mxu0 %v1421
        %v2489 = vpop.f32.mrb[0].mxu0
        %v2490 = vadd.f32 %v2329, %v2489
        %v2491 = vpop.f32.mrb[0].mxu0
        %v2492 = vpop.f32.mrb[0].mxu0
        %v2493 = vadd.f32 %v2332, %v2492
        %v2494 = vpop.f32.mrb[0].mxu0
        %2495 = vmatprep.mubr.bf16.mxu0 %v1431
        %2496 = vmatmul.mubr.bf16.gmra.mrb[0].mxu0 %v1430
        %v2497 = vpop.f32.mrb[0].mxu0
        %v2498 = vadd.f32 %v2337, %v2497
        %v2499 = vpop.f32.mrb[0].mxu0
        %v2500 = vpop.f32.mrb[0].mxu0
        %v2501 = vadd.f32 %v2340, %v2500
        %v2502 = vpop.f32.mrb[0].mxu0
        %2503 = vmatprep.mubr.bf16.mxu0 %v1440
        %2504 = vmatmul.mubr.bf16.gmra.mrb[0].mxu0 %v1439
        %v2505 = vpop.f32.mrb[0].mxu0
        %v2506 = vadd.f32 %v2345, %v2505
        %v2507 = vpop.f32.mrb[0].mxu0
        %v2508 = vpop.f32.mrb[0].mxu0
        %v2509 = vadd.f32 %v2348, %v2508
        %v2510 = vpop.f32.mrb[0].mxu0
        %2511 = vmatprep.mubr.bf16.mxu0 %v1449
        %2512 = vmatmul.mubr.bf16.gmra.mrb[0].mxu0 %v1448
        %v2513 = vpop.f32.mrb[0].mxu0
        %v2514 = vadd.f32 %v2353, %v2513
        %v2515 = vpop.f32.mrb[0].mxu0
        %v2516 = vpop.f32.mrb[0].mxu0
        %v2517 = vadd.f32 %v2356, %v2516
        %v2518 = vpop.f32.mrb[0].mxu0
        %2519 = vmatprep.mubr.bf16.mxu0 %v1458
        %2520 = vmatmul.mubr.bf16.gmra.mrb[0].mxu0 %v1457
        %v2521 = vpop.f32.mrb[0].mxu0
        %v2522 = vadd.f32 %v2361, %v2521
        %v2523 = vpop.f32.mrb[0].mxu0
        %v2524 = vpop.f32.mrb[0].mxu0
        %v2525 = vadd.f32 %v2364, %v2524
        %v2526 = vpop.f32.mrb[0].mxu0
        %2527 = vdwg.mxu0
        %2528 = vmatprep.subr.bf16.mxu0 0
        %2529 = vmatpush1.bf16.msra.mxu0 %v1949
        %2530 = vmatprep.subr.bf16.mxu0 0
        %2531 = vmatpush1.bf16.msra.mxu0 %v1950
        %2532 = vmatprep.subr.bf16.mxu0 0
        %2533 = vmatpush1.bf16.msra.mxu0 %v1951
        %2534 = vmatprep.subr.bf16.mxu0 0
        %2535 = vmatpush1.bf16.msra.mxu0 %v1952
        %2536 = vmatprep.subr.bf16.mxu0 0
        %2537 = vmatpush1.bf16.msra.mxu0 %v1953
        %2538 = vmatprep.subr.bf16.mxu0 0
        %2539 = vmatpush1.bf16.msra.mxu0 %v1954
        %2540 = vmatprep.subr.bf16.mxu0 0
        %2541 = vmatpush1.bf16.msra.mxu0 %v1955
        %2542 = vmatprep.subr.bf16.mxu0 0
        %2543 = vmatpush1.bf16.msra.mxu0 %v1956
        %2544 = vmatprep.subr.bf16.mxu0 0
        %2545 = vmatpush1.bf16.msra.mxu0 %v1957
        %2546 = vmatprep.subr.bf16.mxu0 0
        %2547 = vmatpush1.bf16.msra.mxu0 %v1958
        %2548 = vmatprep.subr.bf16.mxu0 0
        %2549 = vmatpush1.bf16.msra.mxu0 %v1959
        %2550 = vmatprep.subr.bf16.mxu0 0
        %2551 = vmatpush1.bf16.msra.mxu0 %v1960
        %2552 = vmatprep.subr.bf16.mxu0 0
        %2553 = vmatpush1.bf16.msra.mxu0 %v1961
        %2554 = vmatprep.subr.bf16.mxu0 0
        %2555 = vmatpush1.bf16.msra.mxu0 %v1962
        %2556 = vmatprep.subr.bf16.mxu0 0
        %2557 = vmatpush1.bf16.msra.mxu0 %v1963
        %2558 = vmatprep.subr.bf16.mxu0 0
        %2559 = vmatpush1.bf16.msra.mxu0 %v1964
        %2560 = vmatprep.mubr.bf16.mxu0 %v1325
        %2561 = vmatmul.mubr.bf16.gmra.mrb[0].mxu0 %v1324
        %v2562 = vpop.f32.mrb[0].mxu0
        %v2563 = vadd.f32 %v2402, %v2562
        %v2564 = vpop.f32.mrb[0].mxu0
        %v2565 = vpop.f32.mrb[0].mxu0
        %v2566 = vadd.f32 %v2405, %v2565
        %v2567 = vpop.f32.mrb[0].mxu0
        %2568 = vmatprep.mubr.bf16.mxu0 %v1334
        %2569 = vmatmul.mubr.bf16.gmra.mrb[0].mxu0 %v1333
        %v2570 = vpop.f32.mrb[0].mxu0
        %v2571 = vadd.f32 %v2410, %v2570
        %v2572 = vpop.f32.mrb[0].mxu0
        %v2573 = vpop.f32.mrb[0].mxu0
        %v2574 = vadd.f32 %v2413, %v2573
        %v2575 = vpop.f32.mrb[0].mxu0
        %2576 = vmatprep.mubr.bf16.mxu0 %v1343
        %2577 = vmatmul.mubr.bf16.gmra.mrb[0].mxu0 %v1342
        %v2578 = vpop.f32.mrb[0].mxu0
        %v2579 = vadd.f32 %v2418, %v2578
        %v2580 = vpop.f32.mrb[0].mxu0
        %v2581 = vpop.f32.mrb[0].mxu0
        %v2582 = vadd.f32 %v2421, %v2581
        %v2583 = vpop.f32.mrb[0].mxu0
        %2584 = vmatprep.mubr.bf16.mxu0 %v1352
        %2585 = vmatmul.mubr.bf16.gmra.mrb[0].mxu0 %v1351
        %v2586 = vpop.f32.mrb[0].mxu0
        %v2587 = vadd.f32 %v2426, %v2586
        %v2588 = vpop.f32.mrb[0].mxu0
        %v2589 = vpop.f32.mrb[0].mxu0
        %v2590 = vadd.f32 %v2429, %v2589
        %v2591 = vpop.f32.mrb[0].mxu0
        %2592 = vmatprep.mubr.bf16.mxu0 %v1361
        %2593 = vmatmul.mubr.bf16.gmra.mrb[0].mxu0 %v1360
        %v2594 = vpop.f32.mrb[0].mxu0
        %v2595 = vadd.f32 %v2434, %v2594
        %v2596 = vpop.f32.mrb[0].mxu0
        %v2597 = vpop.f32.mrb[0].mxu0
        %v2598 = vadd.f32 %v2437, %v2597
        %v2599 = vpop.f32.mrb[0].mxu0
        %2600 = vmatprep.mubr.bf16.mxu0 %v1370
        %2601 = vmatmul.mubr.bf16.gmra.mrb[0].mxu0 %v1369
        %v2602 = vpop.f32.mrb[0].mxu0
        %v2603 = vadd.f32 %v2442, %v2602
        %v2604 = vpop.f32.mrb[0].mxu0
        %v2605 = vpop.f32.mrb[0].mxu0
        %v2606 = vadd.f32 %v2445, %v2605
        %v2607 = vpop.f32.mrb[0].mxu0
        %2608 = vmatprep.mubr.bf16.mxu0 %v1379
        %2609 = vmatmul.mubr.bf16.gmra.mrb[0].mxu0 %v1378
        %v2610 = vpop.f32.mrb[0].mxu0
        %v2611 = vadd.f32 %v2450, %v2610
        %v2612 = vpop.f32.mrb[0].mxu0
        %v2613 = vpop.f32.mrb[0].mxu0
        %v2614 = vadd.f32 %v2453, %v2613
        %v2615 = vpop.f32.mrb[0].mxu0
        %2616 = vmatprep.mubr.bf16.mxu0 %v1388
        %2617 = vmatmul.mubr.bf16.gmra.mrb[0].mxu0 %v1387
        %v2618 = vpop.f32.mrb[0].mxu0
        %v2619 = vadd.f32 %v2458, %v2618
        %v2620 = vpop.f32.mrb[0].mxu0
        %v2621 = vpop.f32.mrb[0].mxu0
        %v2622 = vadd.f32 %v2461, %v2621
        %v2623 = vpop.f32.mrb[0].mxu0
        %2624 = vmatprep.mubr.bf16.mxu0 %v1397
        %2625 = vmatmul.mubr.bf16.gmra.mrb[0].mxu0 %v1396
        %v2626 = vpop.f32.mrb[0].mxu0
        %v2627 = vadd.f32 %v2466, %v2626
        %v2628 = vpop.f32.mrb[0].mxu0
        %v2629 = vpop.f32.mrb[0].mxu0
        %v2630 = vadd.f32 %v2469, %v2629
        %v2631 = vpop.f32.mrb[0].mxu0
        %2632 = vmatprep.mubr.bf16.mxu0 %v1406
        %2633 = vmatmul.mubr.bf16.gmra.mrb[0].mxu0 %v1405
        %v2634 = vpop.f32.mrb[0].mxu0
        %v2635 = vadd.f32 %v2474, %v2634
        %v2636 = vpop.f32.mrb[0].mxu0
        %v2637 = vpop.f32.mrb[0].mxu0
        %v2638 = vadd.f32 %v2477, %v2637
        %v2639 = vpop.f32.mrb[0].mxu0
        %2640 = vmatprep.mubr.bf16.mxu0 %v1415
        %2641 = vmatmul.mubr.bf16.gmra.mrb[0].mxu0 %v1414
        %v2642 = vpop.f32.mrb[0].mxu0
        %v2643 = vadd.f32 %v2482, %v2642
        %v2644 = vpop.f32.mrb[0].mxu0
        %v2645 = vpop.f32.mrb[0].mxu0
        %v2646 = vadd.f32 %v2485, %v2645
        %v2647 = vpop.f32.mrb[0].mxu0
        %2648 = vmatprep.mubr.bf16.mxu0 %v1424
        %2649 = vmatmul.mubr.bf16.gmra.mrb[0].mxu0 %v1423
        %v2650 = vpop.f32.mrb[0].mxu0
        %v2651 = vadd.f32 %v2490, %v2650
        %v2652 = vpop.f32.mrb[0].mxu0
        %v2653 = vpop.f32.mrb[0].mxu0
        %v2654 = vadd.f32 %v2493, %v2653
        %v2655 = vpop.f32.mrb[0].mxu0
        %2656 = vmatprep.mubr.bf16.mxu0 %v1433
        %2657 = vmatmul.mubr.bf16.gmra.mrb[0].mxu0 %v1432
        %v2658 = vpop.f32.mrb[0].mxu0
        %v2659 = vadd.f32 %v2498, %v2658
        %v2660 = vpop.f32.mrb[0].mxu0
        %v2661 = vpop.f32.mrb[0].mxu0
        %v2662 = vadd.f32 %v2501, %v2661
        %v2663 = vpop.f32.mrb[0].mxu0
        %2664 = vmatprep.mubr.bf16.mxu0 %v1442
        %2665 = vmatmul.mubr.bf16.gmra.mrb[0].mxu0 %v1441
        %v2666 = vpop.f32.mrb[0].mxu0
        %v2667 = vadd.f32 %v2506, %v2666
        %v2668 = vpop.f32.mrb[0].mxu0
        %v2669 = vpop.f32.mrb[0].mxu0
        %v2670 = vadd.f32 %v2509, %v2669
        %v2671 = vpop.f32.mrb[0].mxu0
        %2672 = vmatprep.mubr.bf16.mxu0 %v1451
        %2673 = vmatmul.mubr.bf16.gmra.mrb[0].mxu0 %v1450
        %v2674 = vpop.f32.mrb[0].mxu0
        %v2675 = vadd.f32 %v2514, %v2674
        %v2676 = vpop.f32.mrb[0].mxu0
        %v2677 = vpop.f32.mrb[0].mxu0
        %v2678 = vadd.f32 %v2517, %v2677
        %v2679 = vpop.f32.mrb[0].mxu0
        %2680 = vmatprep.mubr.bf16.mxu0 %v1460
        %2681 = vmatmul.mubr.bf16.gmra.mrb[0].mxu0 %v1459
        %v2682 = vpop.f32.mrb[0].mxu0
        %v2683 = vadd.f32 %v2522, %v2682
        %v2684 = vpop.f32.mrb[0].mxu0
        %v2685 = vpop.f32.mrb[0].mxu0
        %v2686 = vadd.f32 %v2525, %v2685
        %v2687 = vpop.f32.mrb[0].mxu0
        %2688 = vdwg.mxu0
        %2689 = vmatprep.subr.bf16.mxu0 0
        %2690 = vmatpush1.bf16.msra.mxu0 %v1965
        %2691 = vmatprep.subr.bf16.mxu0 0
        %2692 = vmatpush1.bf16.msra.mxu0 %v1966
        %2693 = vmatprep.subr.bf16.mxu0 0
        %2694 = vmatpush1.bf16.msra.mxu0 %v1967
        %2695 = vmatprep.subr.bf16.mxu0 0
        %2696 = vmatpush1.bf16.msra.mxu0 %v1968
        %2697 = vmatprep.subr.bf16.mxu0 0
        %2698 = vmatpush1.bf16.msra.mxu0 %v1969
        %2699 = vmatprep.subr.bf16.mxu0 0
        %2700 = vmatpush1.bf16.msra.mxu0 %v1970
        %2701 = vmatprep.subr.bf16.mxu0 0
        %2702 = vmatpush1.bf16.msra.mxu0 %v1971
        %2703 = vmatprep.subr.bf16.mxu0 0
        %2704 = vmatpush1.bf16.msra.mxu0 %v1972
        %2705 = vmatprep.subr.bf16.mxu0 0
        %2706 = vmatpush1.bf16.msra.mxu0 0
        %2707 = vmatprep.subr.bf16.mxu0 0
        %2708 = vmatpush1.bf16.msra.mxu0 0
        %2709 = vmatprep.subr.bf16.mxu0 0
        %2710 = vmatpush1.bf16.msra.mxu0 0
        %2711 = vmatprep.subr.bf16.mxu0 0
        %2712 = vmatpush1.bf16.msra.mxu0 0
        %2713 = vmatprep.subr.bf16.mxu0 0
        %2714 = vmatpush1.bf16.msra.mxu0 0
        %2715 = vmatprep.subr.bf16.mxu0 0
        %2716 = vmatpush1.bf16.msra.mxu0 0
        %2717 = vmatprep.subr.bf16.mxu0 0
        %2718 = vmatpush1.bf16.msra.mxu0 0
        %2719 = vmatprep.subr.bf16.mxu0 0
        %2720 = vmatpush1.bf16.msra.mxu0 0
        %2721 = vmatprep.mubr.bf16.mxu0 0
        %2722 = vmatmul.mubr.bf16.gmra.mrb[0].mxu0 %v1326
        %v2723 = vpop.f32.mrb[0].mxu0
        %v2724 = vadd.f32 %v2563, %v2723
        %v2725 = vpop.f32.mrb[0].mxu0
        %v2726 = vpop.f32.mrb[0].mxu0
        %v2727 = vadd.f32 %v2566, %v2726
        %v2728 = vpop.f32.mrb[0].mxu0
        %2729 = vmatprep.mubr.bf16.mxu0 0
        %2730 = vmatmul.mubr.bf16.gmra.mrb[0].mxu0 %v1335
        %v2731 = vpop.f32.mrb[0].mxu0
        %v2732 = vadd.f32 %v2571, %v2731
        %v2733 = vpop.f32.mrb[0].mxu0
        %v2734 = vpop.f32.mrb[0].mxu0
        %v2735 = vadd.f32 %v2574, %v2734
        %v2736 = vpop.f32.mrb[0].mxu0
        %2737 = vmatprep.mubr.bf16.mxu0 0
        %2738 = vmatmul.mubr.bf16.gmra.mrb[0].mxu0 %v1344
        %v2739 = vpop.f32.mrb[0].mxu0
        %v2740 = vadd.f32 %v2579, %v2739
        %v2741 = vpop.f32.mrb[0].mxu0
        %v2742 = vpop.f32.mrb[0].mxu0
        %v2743 = vadd.f32 %v2582, %v2742
        %v2744 = vpop.f32.mrb[0].mxu0
        %2745 = vmatprep.mubr.bf16.mxu0 0
        %2746 = vmatmul.mubr.bf16.gmra.mrb[0].mxu0 %v1353
        %v2747 = vpop.f32.mrb[0].mxu0
        %v2748 = vadd.f32 %v2587, %v2747
        %v2749 = vpop.f32.mrb[0].mxu0
        %v2750 = vpop.f32.mrb[0].mxu0
        %v2751 = vadd.f32 %v2590, %v2750
        %v2752 = vpop.f32.mrb[0].mxu0
        %2753 = vmatprep.mubr.bf16.mxu0 0
        %2754 = vmatmul.mubr.bf16.gmra.mrb[0].mxu0 %v1362
        %v2755 = vpop.f32.mrb[0].mxu0
        %v2756 = vadd.f32 %v2595, %v2755
        %v2757 = vpop.f32.mrb[0].mxu0
        %v2758 = vpop.f32.mrb[0].mxu0
        %v2759 = vadd.f32 %v2598, %v2758
        %v2760 = vpop.f32.mrb[0].mxu0
        %2761 = vmatprep.mubr.bf16.mxu0 0
        %2762 = vmatmul.mubr.bf16.gmra.mrb[0].mxu0 %v1371
        %v2763 = vpop.f32.mrb[0].mxu0
        %v2764 = vadd.f32 %v2603, %v2763
        %v2765 = vpop.f32.mrb[0].mxu0
        %v2766 = vpop.f32.mrb[0].mxu0
        %v2767 = vadd.f32 %v2606, %v2766
        %v2768 = vpop.f32.mrb[0].mxu0
        %2769 = vmatprep.mubr.bf16.mxu0 0
        %2770 = vmatmul.mubr.bf16.gmra.mrb[0].mxu0 %v1380
        %v2771 = vpop.f32.mrb[0].mxu0
        %v2772 = vadd.f32 %v2611, %v2771
        %v2773 = vpop.f32.mrb[0].mxu0
        %v2774 = vpop.f32.mrb[0].mxu0
        %v2775 = vadd.f32 %v2614, %v2774
        %v2776 = vpop.f32.mrb[0].mxu0
        %2777 = vmatprep.mubr.bf16.mxu0 0
        %2778 = vmatmul.mubr.bf16.gmra.mrb[0].mxu0 %v1389
        %v2779 = vpop.f32.mrb[0].mxu0
        %v2780 = vadd.f32 %v2619, %v2779
        %v2781 = vpop.f32.mrb[0].mxu0
        %v2782 = vpop.f32.mrb[0].mxu0
        %v2783 = vadd.f32 %v2622, %v2782
        %v2784 = vpop.f32.mrb[0].mxu0
        %2785 = vmatprep.mubr.bf16.mxu0 0
        %2786 = vmatmul.mubr.bf16.gmra.mrb[0].mxu0 %v1398
        %v2787 = vpop.f32.mrb[0].mxu0
        %v2788 = vadd.f32 %v2627, %v2787
        %v2789 = vpop.f32.mrb[0].mxu0
        %v2790 = vpop.f32.mrb[0].mxu0
        %v2791 = vadd.f32 %v2630, %v2790
        %v2792 = vpop.f32.mrb[0].mxu0
        %2793 = vmatprep.mubr.bf16.mxu0 0
        %2794 = vmatmul.mubr.bf16.gmra.mrb[0].mxu0 %v1407
        %v2795 = vpop.f32.mrb[0].mxu0
        %v2796 = vadd.f32 %v2635, %v2795
        %v2797 = vpop.f32.mrb[0].mxu0
        %v2798 = vpop.f32.mrb[0].mxu0
        %v2799 = vadd.f32 %v2638, %v2798
        %v2800 = vpop.f32.mrb[0].mxu0
        %2801 = vmatprep.mubr.bf16.mxu0 0
        %2802 = vmatmul.mubr.bf16.gmra.mrb[0].mxu0 %v1416
        %v2803 = vpop.f32.mrb[0].mxu0
        %v2804 = vadd.f32 %v2643, %v2803
        %v2805 = vpop.f32.mrb[0].mxu0
        %v2806 = vpop.f32.mrb[0].mxu0
        %v2807 = vadd.f32 %v2646, %v2806
        %v2808 = vpop.f32.mrb[0].mxu0
        %2809 = vmatprep.mubr.bf16.mxu0 0
        %2810 = vmatmul.mubr.bf16.gmra.mrb[0].mxu0 %v1425
        %v2811 = vpop.f32.mrb[0].mxu0
        %v2812 = vadd.f32 %v2651, %v2811
        %v2813 = vpop.f32.mrb[0].mxu0
        %v2814 = vpop.f32.mrb[0].mxu0
        %v2815 = vadd.f32 %v2654, %v2814
        %v2816 = vpop.f32.mrb[0].mxu0
        %2817 = vmatprep.mubr.bf16.mxu0 0
        %2818 = vmatmul.mubr.bf16.gmra.mrb[0].mxu0 %v1434
        %v2819 = vpop.f32.mrb[0].mxu0
        %v2820 = vadd.f32 %v2659, %v2819
        %v2821 = vpop.f32.mrb[0].mxu0
        %v2822 = vpop.f32.mrb[0].mxu0
        %v2823 = vadd.f32 %v2662, %v2822
        %v2824 = vpop.f32.mrb[0].mxu0
        %2825 = vmatprep.mubr.bf16.mxu0 0
        %2826 = vmatmul.mubr.bf16.gmra.mrb[0].mxu0 %v1443
        %v2827 = vpop.f32.mrb[0].mxu0
        %v2828 = vadd.f32 %v2667, %v2827
        %v2829 = vpop.f32.mrb[0].mxu0
        %v2830 = vpop.f32.mrb[0].mxu0
        %v2831 = vadd.f32 %v2670, %v2830
        %v2832 = vpop.f32.mrb[0].mxu0
        %2833 = vmatprep.mubr.bf16.mxu0 0
        %2834 = vmatmul.mubr.bf16.gmra.mrb[0].mxu0 %v1452
        %v2835 = vpop.f32.mrb[0].mxu0
        %v2836 = vadd.f32 %v2675, %v2835
        %v2837 = vpop.f32.mrb[0].mxu0
        %v2838 = vpop.f32.mrb[0].mxu0
        %v2839 = vadd.f32 %v2678, %v2838
        %v2840 = vpop.f32.mrb[0].mxu0
        %2841 = vmatprep.mubr.bf16.mxu0 0
        %2842 = vmatmul.mubr.bf16.gmra.mrb[0].mxu0 %v1461
        %v2843 = vpop.f32.mrb[0].mxu0
        %v2844 = vadd.f32 %v2683, %v2843
        %v2845 = vpop.f32.mrb[0].mxu0
        %v2846 = vpop.f32.mrb[0].mxu0
        %v2847 = vadd.f32 %v2686, %v2846
        %v2848 = vpop.f32.mrb[0].mxu0
        %2849 = vdwg.mxu0
        %v2850 = vmax.f32 %v2724, 0.0
        %v2851 = vmax.f32 %v2727, 0.0
        %v2852 = vmax.f32 %v2732, 0.0
        %v2853 = vmax.f32 %v2735, 0.0
        %v2854 = vmax.f32 %v2740, 0.0
        %v2855 = vmax.f32 %v2743, 0.0
        %v2856 = vmax.f32 %v2748, 0.0
        %v2857 = vmax.f32 %v2751, 0.0
        %v2858 = vmax.f32 %v2756, 0.0
        %v2859 = vmax.f32 %v2759, 0.0
        %v2860 = vmax.f32 %v2764, 0.0
        %v2861 = vmax.f32 %v2767, 0.0
        %v2862 = vmax.f32 %v2772, 0.0
        %v2863 = vmax.f32 %v2775, 0.0
        %v2864 = vmax.f32 %v2780, 0.0
        %v2865 = vmax.f32 %v2783, 0.0
        %v2866 = vmax.f32 %v2788, 0.0
        %v2867 = vmax.f32 %v2791, 0.0
        %v2868 = vmax.f32 %v2796, 0.0
        %v2869 = vmax.f32 %v2799, 0.0
        %v2870 = vmax.f32 %v2804, 0.0
        %v2871 = vmax.f32 %v2807, 0.0
        %v2872 = vmax.f32 %v2812, 0.0
        %v2873 = vmax.f32 %v2815, 0.0
        %v2874 = vmax.f32 %v2820, 0.0
        %v2875 = vmax.f32 %v2823, 0.0
        %v2876 = vmax.f32 %v2828, 0.0
        %v2877 = vmax.f32 %v2831, 0.0
        %v2878 = vmax.f32 %v2836, 0.0
        %v2879 = vmax.f32 %v2839, 0.0
        %v2880 = vmax.f32 %v2844, 0.0
        %v2881 = vmax.f32 %v2847, 0.0
        %v2882 = vpack.c.bf16 %v2851, %v2850
        %v2883 = vpack.c.bf16 %v2853, %v2852
        %v2884 = vpack.c.bf16 %v2855, %v2854
        %v2885 = vpack.c.bf16 %v2857, %v2856
        %v2886 = vpack.c.bf16 %v2859, %v2858
        %v2887 = vpack.c.bf16 %v2861, %v2860
        %v2888 = vpack.c.bf16 %v2863, %v2862
        %v2889 = vpack.c.bf16 %v2865, %v2864
        %v2890 = vpack.c.bf16 %v2867, %v2866
        %v2891 = vpack.c.bf16 %v2869, %v2868
        %v2892 = vpack.c.bf16 %v2871, %v2870
        %v2893 = vpack.c.bf16 %v2873, %v2872
        %v2894 = vpack.c.bf16 %v2875, %v2874
        %v2895 = vpack.c.bf16 %v2877, %v2876
        %v2896 = vpack.c.bf16 %v2879, %v2878
        %v2897 = vpack.c.bf16 %v2881, %v2880
        %v2898 = vld [vmem:[#allocation10] sm:$0xf]
        %v2899 = vld [vmem:[#allocation10 + $0x4] sm:$0xf]
        %v2900 = vld [vmem:[#allocation10 + $0x8] sm:$0xf]
        %v2901 = vld [vmem:[#allocation10 + $0xc] sm:$0xf]
        %v2902 = vld [vmem:[#allocation10 + $0x10] sm:$0xf]
        %v2903 = vld [vmem:[#allocation10 + $0x14] sm:$0xf]
        %v2904 = vld [vmem:[#allocation10 + $0x18] sm:$0xf]
        %v2905 = vld [vmem:[#allocation10 + $0x1c] sm:$0xf]
        %v2906 = vld [vmem:[#allocation10 + $0x20] sm:$0xf]
        %v2907 = vld [vmem:[#allocation10 + $0x24] sm:$0xf]
        %v2908 = vld [vmem:[#allocation10 + $0x28] sm:$0xf]
        %v2909 = vld [vmem:[#allocation10 + $0x2c] sm:$0xf]
        %v2910 = vld [vmem:[#allocation10 + $0x30] sm:$0xf]
        %v2911 = vld [vmem:[#allocation10 + $0x34] sm:$0xf]
        %v2912 = vld [vmem:[#allocation10 + $0x38] sm:$0xf]
        %v2913 = vld [vmem:[#allocation10 + $0x3c] sm:$0xf]
        %v2914 = vld [vmem:[%s6] sm:$0x1]
        %v2916 = vlaneseq
        %v2917 = vshrl.u32 %v2916, 7
        %v2918 = vsub.s32 0, %v2917
        %v2919 = vrot.slane %v2914, %v2918
        %v2937 = vunpack.c.l.b16 %v2898
        %v2938 = vunpack.c.l.b16 %v2899
        %v2939 = vunpack.c.l.b16 %v2900
        %v2940 = vunpack.c.l.b16 %v2901
        %v2941 = vunpack.c.l.b16 %v2902
        %v2942 = vunpack.c.l.b16 %v2903
        %v2943 = vunpack.c.l.b16 %v2904
        %v2944 = vunpack.c.l.b16 %v2905
        %v2945 = vunpack.c.l.b16 %v2906
        %v2946 = vunpack.c.l.b16 %v2907
        %v2947 = vunpack.c.l.b16 %v2908
        %v2948 = vunpack.c.l.b16 %v2909
        %v2949 = vunpack.c.l.b16 %v2910
        %v2950 = vunpack.c.l.b16 %v2911
        %v2951 = vunpack.c.l.b16 %v2912
        %v2952 = vunpack.c.l.b16 %v2913
        %v2953 = vpack.c.b16 %v2938, %v2937
        %v2954 = vpack.c.b16 %v2940, %v2939
        %v2955 = vpack.c.b16 %v2942, %v2941
        %v2956 = vpack.c.b16 %v2944, %v2943
        %v2957 = vpack.c.b16 %v2946, %v2945
        %v2958 = vpack.c.b16 %v2948, %v2947
        %v2959 = vpack.c.b16 %v2950, %v2949
        %v2960 = vpack.c.b16 %v2952, %v2951
        %2969 = vmatprep.subr.bf16.mxu0 0
        %2970 = vmatpush1.bf16.msra.mxu0 %v2953
        %2971 = vmatprep.subr.bf16.mxu0 0
        %2972 = vmatpush1.bf16.msra.mxu0 %v2954
        %2973 = vmatprep.subr.bf16.mxu0 0
        %2974 = vmatpush1.bf16.msra.mxu0 %v2955
        %2975 = vmatprep.subr.bf16.mxu0 0
        %2976 = vmatpush1.bf16.msra.mxu0 %v2956
        %2977 = vmatprep.subr.bf16.mxu0 0
        %2978 = vmatpush1.bf16.msra.mxu0 %v2957
        %2979 = vmatprep.subr.bf16.mxu0 0
        %2980 = vmatpush1.bf16.msra.mxu0 %v2958
        %2981 = vmatprep.subr.bf16.mxu0 0
        %2982 = vmatpush1.bf16.msra.mxu0 %v2959
        %2983 = vmatprep.subr.bf16.mxu0 0
        %2984 = vmatpush1.bf16.msra.mxu0 %v2960
        %2985 = vmatprep.subr.bf16.mxu0 0
        %2986 = vmatpush1.bf16.msra.mxu0 0
        %2987 = vmatprep.subr.bf16.mxu0 0
        %2988 = vmatpush1.bf16.msra.mxu0 0
        %2989 = vmatprep.subr.bf16.mxu0 0
        %2990 = vmatpush1.bf16.msra.mxu0 0
        %2991 = vmatprep.subr.bf16.mxu0 0
        %2992 = vmatpush1.bf16.msra.mxu0 0
        %2993 = vmatprep.subr.bf16.mxu0 0
        %2994 = vmatpush1.bf16.msra.mxu0 0
        %2995 = vmatprep.subr.bf16.mxu0 0
        %2996 = vmatpush1.bf16.msra.mxu0 0
        %2997 = vmatprep.subr.bf16.mxu0 0
        %2998 = vmatpush1.bf16.msra.mxu0 0
        %2999 = vmatprep.subr.bf16.mxu0 0
        %3000 = vmatpush1.bf16.msra.mxu0 0
        %3001 = vmatprep.mubr.bf16.mxu0 0
        %3002 = vmatmul.mubr.bf16.gmra.mrb[0].mxu0 %v2882
        %v3003 = vpop.f32.mrb[0].mxu0
        %v3004 = vadd.f32 %v2919, %v3003
        %v3005 = vpop.f32.mrb[0].mxu0
        %v3006 = vpop.f32.mrb[0].mxu0
        %v3007 = vadd.f32 %v2919, %v3006
        %v3008 = vpop.f32.mrb[0].mxu0
        %3009 = vmatprep.mubr.bf16.mxu0 0
        %3010 = vmatmul.mubr.bf16.gmra.mrb[0].mxu0 %v2883
        %v3011 = vpop.f32.mrb[0].mxu0
        %v3012 = vadd.f32 %v2919, %v3011
        %v3013 = vpop.f32.mrb[0].mxu0
        %v3014 = vpop.f32.mrb[0].mxu0
        %v3015 = vadd.f32 %v2919, %v3014
        %v3016 = vpop.f32.mrb[0].mxu0
        %3017 = vmatprep.mubr.bf16.mxu0 0
        %3018 = vmatmul.mubr.bf16.gmra.mrb[0].mxu0 %v2884
        %v3019 = vpop.f32.mrb[0].mxu0
        %v3020 = vadd.f32 %v2919, %v3019
        %v3021 = vpop.f32.mrb[0].mxu0
        %v3022 = vpop.f32.mrb[0].mxu0
        %v3023 = vadd.f32 %v2919, %v3022
        %v3024 = vpop.f32.mrb[0].mxu0
        %3025 = vmatprep.mubr.bf16.mxu0 0
        %3026 = vmatmul.mubr.bf16.gmra.mrb[0].mxu0 %v2885
        %v3027 = vpop.f32.mrb[0].mxu0
        %v3028 = vadd.f32 %v2919, %v3027
        %v3029 = vpop.f32.mrb[0].mxu0
        %v3030 = vpop.f32.mrb[0].mxu0
        %v3031 = vadd.f32 %v2919, %v3030
        %v3032 = vpop.f32.mrb[0].mxu0
        %3033 = vmatprep.mubr.bf16.mxu0 0
        %3034 = vmatmul.mubr.bf16.gmra.mrb[0].mxu0 %v2886
        %v3035 = vpop.f32.mrb[0].mxu0
        %v3036 = vadd.f32 %v2919, %v3035
        %v3037 = vpop.f32.mrb[0].mxu0
        %v3038 = vpop.f32.mrb[0].mxu0
        %v3039 = vadd.f32 %v2919, %v3038
        %v3040 = vpop.f32.mrb[0].mxu0
        %3041 = vmatprep.mubr.bf16.mxu0 0
        %3042 = vmatmul.mubr.bf16.gmra.mrb[0].mxu0 %v2887
        %v3043 = vpop.f32.mrb[0].mxu0
        %v3044 = vadd.f32 %v2919, %v3043
        %v3045 = vpop.f32.mrb[0].mxu0
        %v3046 = vpop.f32.mrb[0].mxu0
        %v3047 = vadd.f32 %v2919, %v3046
        %v3048 = vpop.f32.mrb[0].mxu0
        %3049 = vmatprep.mubr.bf16.mxu0 0
        %3050 = vmatmul.mubr.bf16.gmra.mrb[0].mxu0 %v2888
        %v3051 = vpop.f32.mrb[0].mxu0
        %v3052 = vadd.f32 %v2919, %v3051
        %v3053 = vpop.f32.mrb[0].mxu0
        %v3054 = vpop.f32.mrb[0].mxu0
        %v3055 = vadd.f32 %v2919, %v3054
        %v3056 = vpop.f32.mrb[0].mxu0
        %3057 = vmatprep.mubr.bf16.mxu0 0
        %3058 = vmatmul.mubr.bf16.gmra.mrb[0].mxu0 %v2889
        %v3059 = vpop.f32.mrb[0].mxu0
        %v3060 = vadd.f32 %v2919, %v3059
        %v3061 = vpop.f32.mrb[0].mxu0
        %v3062 = vpop.f32.mrb[0].mxu0
        %v3063 = vadd.f32 %v2919, %v3062
        %v3064 = vpop.f32.mrb[0].mxu0
        %3065 = vmatprep.mubr.bf16.mxu0 0
        %3066 = vmatmul.mubr.bf16.gmra.mrb[0].mxu0 %v2890
        %v3067 = vpop.f32.mrb[0].mxu0
        %v3068 = vadd.f32 %v2919, %v3067
        %v3069 = vpop.f32.mrb[0].mxu0
        %v3070 = vpop.f32.mrb[0].mxu0
        %v3071 = vadd.f32 %v2919, %v3070
        %v3072 = vpop.f32.mrb[0].mxu0
        %3073 = vmatprep.mubr.bf16.mxu0 0
        %3074 = vmatmul.mubr.bf16.gmra.mrb[0].mxu0 %v2891
        %v3075 = vpop.f32.mrb[0].mxu0
        %v3076 = vadd.f32 %v2919, %v3075
        %v3077 = vpop.f32.mrb[0].mxu0
        %v3078 = vpop.f32.mrb[0].mxu0
        %v3079 = vadd.f32 %v2919, %v3078
        %v3080 = vpop.f32.mrb[0].mxu0
        %3081 = vmatprep.mubr.bf16.mxu0 0
        %3082 = vmatmul.mubr.bf16.gmra.mrb[0].mxu0 %v2892
        %v3083 = vpop.f32.mrb[0].mxu0
        %v3084 = vadd.f32 %v2919, %v3083
        %v3085 = vpop.f32.mrb[0].mxu0
        %v3086 = vpop.f32.mrb[0].mxu0
        %v3087 = vadd.f32 %v2919, %v3086
        %v3088 = vpop.f32.mrb[0].mxu0
        %3089 = vmatprep.mubr.bf16.mxu0 0
        %3090 = vmatmul.mubr.bf16.gmra.mrb[0].mxu0 %v2893
        %v3091 = vpop.f32.mrb[0].mxu0
        %v3092 = vadd.f32 %v2919, %v3091
        %v3093 = vpop.f32.mrb[0].mxu0
        %v3094 = vpop.f32.mrb[0].mxu0
        %v3095 = vadd.f32 %v2919, %v3094
        %v3096 = vpop.f32.mrb[0].mxu0
        %3097 = vmatprep.mubr.bf16.mxu0 0
        %3098 = vmatmul.mubr.bf16.gmra.mrb[0].mxu0 %v2894
        %v3099 = vpop.f32.mrb[0].mxu0
        %v3100 = vadd.f32 %v2919, %v3099
        %v3101 = vpop.f32.mrb[0].mxu0
        %v3102 = vpop.f32.mrb[0].mxu0
        %v3103 = vadd.f32 %v2919, %v3102
        %v3104 = vpop.f32.mrb[0].mxu0
        %3105 = vmatprep.mubr.bf16.mxu0 0
        %3106 = vmatmul.mubr.bf16.gmra.mrb[0].mxu0 %v2895
        %v3107 = vpop.f32.mrb[0].mxu0
        %v3108 = vadd.f32 %v2919, %v3107
        %v3109 = vpop.f32.mrb[0].mxu0
        %v3110 = vpop.f32.mrb[0].mxu0
        %v3111 = vadd.f32 %v2919, %v3110
        %v3112 = vpop.f32.mrb[0].mxu0
        %3113 = vmatprep.mubr.bf16.mxu0 0
        %3114 = vmatmul.mubr.bf16.gmra.mrb[0].mxu0 %v2896
        %v3115 = vpop.f32.mrb[0].mxu0
        %v3116 = vadd.f32 %v2919, %v3115
        %v3117 = vpop.f32.mrb[0].mxu0
        %v3118 = vpop.f32.mrb[0].mxu0
        %v3119 = vadd.f32 %v2919, %v3118
        %v3120 = vpop.f32.mrb[0].mxu0
        %3121 = vmatprep.mubr.bf16.mxu0 0
        %3122 = vmatmul.mubr.bf16.gmra.mrb[0].mxu0 %v2897
        %v3123 = vpop.f32.mrb[0].mxu0
        %v3124 = vadd.f32 %v2919, %v3123
        %v3125 = vpop.f32.mrb[0].mxu0
        %v3126 = vpop.f32.mrb[0].mxu0
        %v3127 = vadd.f32 %v2919, %v3126
        %v3128 = vpop.f32.mrb[0].mxu0
        %3129 = vdwg.mxu0
        %v3130 = vadd.f32 %v3004, %v342
        %v3131 = vadd.f32 %v3007, %v343
        %v3132 = vadd.f32 %v3012, %v344
        %v3133 = vadd.f32 %v3015, %v345
        %v3134 = vadd.f32 %v3020, %v346
        %v3135 = vadd.f32 %v3023, %v347
        %v3136 = vadd.f32 %v3028, %v348
        %v3137 = vadd.f32 %v3031, %v349
        %v3138 = vadd.f32 %v3036, %v350
        %v3139 = vadd.f32 %v3039, %v351
        %v3140 = vadd.f32 %v3044, %v352
        %v3141 = vadd.f32 %v3047, %v353
        %v3142 = vadd.f32 %v3052, %v354
        %v3143 = vadd.f32 %v3055, %v355
        %v3144 = vadd.f32 %v3060, %v356
        %v3145 = vadd.f32 %v3063, %v357
        %v3146 = vadd.f32 %v3068, %v358
        %v3147 = vadd.f32 %v3071, %v359
        %v3148 = vadd.f32 %v3076, %v360
        %v3149 = vadd.f32 %v3079, %v361
        %v3150 = vadd.f32 %v3084, %v362
        %v3151 = vadd.f32 %v3087, %v363
        %v3152 = vadd.f32 %v3092, %v364
        %v3153 = vadd.f32 %v3095, %v365
        %v3154 = vadd.f32 %v3100, %v366
        %v3155 = vadd.f32 %v3103, %v367
        %v3156 = vadd.f32 %v3108, %v368
        %v3157 = vadd.f32 %v3111, %v369
        %v3158 = vadd.f32 %v3116, %v370
        %v3159 = vadd.f32 %v3119, %v371
        %v3160 = vadd.f32 %v3124, %v372
        %v3161 = vadd.f32 %v3127, %v373
        %v3162 = vmax.f32 %v3130, 0.0
        %v3163 = vmax.f32 %v3131, 0.0
        %v3164 = vmax.f32 %v3132, 0.0
        %v3165 = vmax.f32 %v3133, 0.0
        %v3166 = vmax.f32 %v3134, 0.0
        %v3167 = vmax.f32 %v3135, 0.0
        %v3168 = vmax.f32 %v3136, 0.0
        %v3169 = vmax.f32 %v3137, 0.0
        %v3170 = vmax.f32 %v3138, 0.0
        %v3171 = vmax.f32 %v3139, 0.0
        %v3172 = vmax.f32 %v3140, 0.0
        %v3173 = vmax.f32 %v3141, 0.0
        %v3174 = vmax.f32 %v3142, 0.0
        %v3175 = vmax.f32 %v3143, 0.0
        %v3176 = vmax.f32 %v3144, 0.0
        %v3177 = vmax.f32 %v3145, 0.0
        %v3178 = vmax.f32 %v3146, 0.0
        %v3179 = vmax.f32 %v3147, 0.0
        %v3180 = vmax.f32 %v3148, 0.0
        %v3181 = vmax.f32 %v3149, 0.0
        %v3182 = vmax.f32 %v3150, 0.0
        %v3183 = vmax.f32 %v3151, 0.0
        %v3184 = vmax.f32 %v3152, 0.0
        %v3185 = vmax.f32 %v3153, 0.0
        %v3186 = vmax.f32 %v3154, 0.0
        %v3187 = vmax.f32 %v3155, 0.0
        %v3188 = vmax.f32 %v3156, 0.0
        %v3189 = vmax.f32 %v3157, 0.0
        %v3190 = vmax.f32 %v3158, 0.0
        %v3191 = vmax.f32 %v3159, 0.0
        %v3192 = vmax.f32 %v3160, 0.0
        %v3193 = vmax.f32 %v3161, 0.0
        %3194 = vst [vmem:[%s340] sm:$0xff] %v3162
        %3195 = vst [vmem:[%s340 + $0x8] sm:$0xff] %v3163
        %3196 = vst [vmem:[%s340 + $0x10] sm:$0xff] %v3164
        %3197 = vst [vmem:[%s340 + $0x18] sm:$0xff] %v3165
        %3198 = vst [vmem:[%s340 + $0x20] sm:$0xff] %v3166
        %3199 = vst [vmem:[%s340 + $0x28] sm:$0xff] %v3167
        %3200 = vst [vmem:[%s340 + $0x30] sm:$0xff] %v3168
        %3201 = vst [vmem:[%s340 + $0x38] sm:$0xff] %v3169
        %3202 = vst [vmem:[%s340 + $0x40] sm:$0xff] %v3170
        %3203 = vst [vmem:[%s340 + $0x48] sm:$0xff] %v3171
        %3204 = vst [vmem:[%s340 + $0x50] sm:$0xff] %v3172
        %3205 = vst [vmem:[%s340 + $0x58] sm:$0xff] %v3173
        %3206 = vst [vmem:[%s340 + $0x60] sm:$0xff] %v3174
        %3207 = vst [vmem:[%s340 + $0x68] sm:$0xff] %v3175
        %3208 = vst [vmem:[%s340 + $0x70] sm:$0xff] %v3176
        %3209 = vst [vmem:[%s340 + $0x78] sm:$0xff] %v3177
        %3210 = vst [vmem:[%s340 + $0x80] sm:$0xff] %v3178
        %3211 = vst [vmem:[%s340 + $0x88] sm:$0xff] %v3179
        %3212 = vst [vmem:[%s340 + $0x90] sm:$0xff] %v3180
        %3213 = vst [vmem:[%s340 + $0x98] sm:$0xff] %v3181
        %3214 = vst [vmem:[%s340 + $0xa0] sm:$0xff] %v3182
        %3215 = vst [vmem:[%s340 + $0xa8] sm:$0xff] %v3183
        %3216 = vst [vmem:[%s340 + $0xb0] sm:$0xff] %v3184
        %3217 = vst [vmem:[%s340 + $0xb8] sm:$0xff] %v3185
        %3218 = vst [vmem:[%s340 + $0xc0] sm:$0xff] %v3186
        %3219 = vst [vmem:[%s340 + $0xc8] sm:$0xff] %v3187
        %3220 = vst [vmem:[%s340 + $0xd0] sm:$0xff] %v3188
        %3221 = vst [vmem:[%s340 + $0xd8] sm:$0xff] %v3189
        %3222 = vst [vmem:[%s340 + $0xe0] sm:$0xff] %v3190
        %3223 = vst [vmem:[%s340 + $0xe8] sm:$0xff] %v3191
        %3224 = vst [vmem:[%s340 + $0xf0] sm:$0xff] %v3192
        %3225 = vst [vmem:[%s340 + $0xf8] sm:$0xff] %v3193
        %s3226 = sand.u32 %s186, 1
        %s3227 = scalar_lea.sflag [#allocation6], %s3226
        %s3228 = sand.u32 %s186, 1
        %s3229 = smul.addr %s3228, 256
        %s3230 = scalar_lea.vmem [#allocation12], %s3229
        // Predicated region
        $region65: #{tpu_custom_call.1} parent=47 // pred_check
          %p3231 = pneg %p196
        $region66: #{tpu_custom_call.1} parent=47 // pred_check_branch
          %3233 = sbr.rel (%p3231) target = $region68
        $region67: #{tpu_custom_call.1} parent=47 // pred_region
          %s3235 = ssub.s32 4096, 4096
          %3236 = vsyncadd %s3227, %s3235
          %s3237 = smul.addr %s26, 32
          %s3238 = smul.addr %s3237, 128
          %s3239 = scalar_lea.hbm %s7, %s3238
          %s3240 = sshll.u32 %s3230, 4
          %s3241 = int_to_ptr.vmem [resolvable:$true] %s3240
          %3246 = dma.vmem_to_hbm [thread:$0]  %s3241, 4096, %s3239, %s3227, 128, 128, 8
        $region68: #{tpu_custom_call.1} parent=47 // pred_fallthru
          _
      $region48: #{tpu_custom_call.1} parent=5 // pred_fallthru
        _
      %p3247 = scmp.le.s32.totalorder 2, %s21
      // Predicated region
      $region69: #{tpu_custom_call.1} parent=5 // pred_check
        %p3248 = pneg %p3247
      $region70: #{tpu_custom_call.1} parent=5 // pred_check_branch
        %3250 = sbr.rel (%p3248) target = $region72
      $region71: #{tpu_custom_call.1} parent=5 // pred_region
        %s3251 = ssub.s32 %s21, 2
        // Predicated region
        $region73: #{tpu_custom_call.1} parent=71 // pred_check
          %p3252 = pneg %p202
        $region74: #{tpu_custom_call.1} parent=71 // pred_check_branch
          %3254 = sbr.rel (%p3252) target = $region76
        $region75: #{tpu_custom_call.1} parent=71 // pred_region
          %s3255 = sand.u32 %s187, 1
          %s3256 = scalar_lea.sflag [#allocation6], %s3255
          %s3257 = sand.u32 %s187, 1
          %s3258 = smul.addr %s3257, 256
          %s3259 = scalar_lea.vmem [#allocation12], %s3258
          %3260 = dma.done %s3256, 4096
        $region76: #{tpu_custom_call.1} parent=71 // pred_fallthru
          _
      $region72: #{tpu_custom_call.1} parent=5 // pred_fallthru
        _
    $region6: #{tpu_custom_call.1} parent=1 // loop_footer
      %s25 = sadd.s32 1, %s21
    $region7: #{tpu_custom_call.1} parent=1 // loop_footer_branch
      %20 = sbr.rel target = $region3
    $region8: #{tpu_custom_call.1} parent=1 // loop_exit
      _
    %3261 = vsyncpa [#allocation5], 1
    %s3262 = scalar_lea.sflag [#allocation5], 1
    %3263 = vsyncpa %s3262, 1
    %3264 = vsyncpa [#allocation8], 1
    %3265 = vsyncpa [#allocation11], 1
    %3266 = vsyncpa [#allocation6], 1
    %s3267 = scalar_lea.sflag [#allocation6], 1
    %3268 = vsyncpa %s3267, 1

</llo_original>
